<compile_context>
chip_gen: v7x
topology: tpu7x:2x2x1
jax: 0.10.0
libtpu: 0.0.40
codegen_flags: <defaults>
</compile_context>

<pallas_src>
import functools
import numpy as np
import jax
import jax.numpy as jnp
from jax.experimental import pallas as pl
from jax.experimental.pallas import tpu as pltpu

# ---------------- configuration (small, consistent with module __init__) -------------
N_CATEGORIES = [3, 5, 7, 4]          # 4 categorical features
N_NUMERICAL  = 4                     # 4 numerical features
N_HEAD       = 4
N_HID        = 64
N_LAYERS     = 2
N_OUTPUT     = 3
EMBED_DIM    = 32
BATCH        = 2
N_CAT        = len(N_CATEGORIES)
SEQ          = N_CAT + N_NUMERICAL   # 8 tokens
HEAD_DIM     = EMBED_DIM // N_HEAD
LN_EPS       = 1e-5
TOTAL_EMB_ROWS = int(sum(n + 1 for n in N_CATEGORIES))      # 23 embedding rows
K_ENC          = TOTAL_EMB_ROWS + 2 * N_NUMERICAL           # 31-deep encoder contraction
# aggregator=None -> ConcatenateAggregator (flatten tokens), decoder = Linear,
# need_weights=False, numerical_passthrough=False, dropout=0.0 (no-op).


# ---------------- shared math ---------------------------------------------------------
def _layer_norm(x, g, b):
    # torch.nn.LayerNorm semantics: biased variance, eps inside rsqrt.
    mu = jnp.mean(x, axis=-1, keepdims=True)
    var = jnp.mean(jnp.square(x - mu), axis=-1, keepdims=True)
    return (x - mu) * jax.lax.rsqrt(var + LN_EPS) * g + b


# ---------------- fused Pallas kernel --------------------------------------------------
def _fused_forward_kernel(design_ref, table_ref, wbig_ref, w2_ref, vec_ref,
                          decw_ref, decb_ref, out_ref,
                          *, n_head, n_layers, n_cat, n_num):
    B, n_out = out_ref.shape
    D = table_ref.shape[1]
    n_hid = w2_ref.shape[1]
    S = n_cat + n_num
    BS = B * S
    hd = D // n_head

    # --- token assembly: categorical gather + numerical encoder as ONE MXU matmul ------
    # design = [one-hot(cat idx) | x_num diag | identity], table = [emb ; W_num ; b_num]
    x = jnp.dot(design_ref[...], table_ref[...],
                preferred_element_type=jnp.float32)                      # (B*S, D)

    def split_heads(m):                      # (BS, D) -> (H*B, S, hd), minor dim unchanged
        parts = [m[:, i * hd:(i + 1) * hd] for i in range(n_head)]
        return jnp.stack(parts, axis=0).reshape(n_head * B, S, hd)

    # --- pre-norm transformer encoder layers (unrolled; per-layer distinct weights) ----
    for l in range(n_layers):
        WB = wbig_ref[l]                                   # (D, 4D + n_hid)  packed
        V  = vec_ref[l]                                    # (3, vec_w)       packed
        Wqkv = WB[:, 0:3 * D]                              # scale folded into Wq slice
        Wo3  = WB[:, 3 * D:4 * D].reshape(n_head, hd, D)   # per-head output projection
        W1   = WB[:, 4 * D:4 * D + n_hid]
        W2   = w2_ref[l]                                   # (n_hid, D)
        G1, Be1 = V[0:1, 0:D],         V[0:1, D:2 * D]
        G2, Be2 = V[0:1, 2 * D:3 * D], V[0:1, 3 * D:4 * D]
        Bqkv = V[1:2, 0:3 * D]                             # scale folded into bq slice
        Bo   = V[1:2, 3 * D:4 * D]
        B1   = V[2:3, 0:n_hid]
        B2   = V[2:3, n_hid:n_hid + D]

        # ---- pre-norm multi-head self-attention: fused QKV + batched-head einsums -----
        h = _layer_norm(x, G1, Be1)
        qkv = jnp.dot(h, Wqkv, preferred_element_type=jnp.float32) + Bqkv  # (BS, 3D)
        qs = split_heads(qkv[:, 0:D])
        ks = split_heads(qkv[:, D:2 * D])
        vs = split_heads(qkv[:, 2 * D:3 * D])

        sc = jnp.einsum('nqd,nkd->nqk', qs, ks,
                        preferred_element_type=jnp.float32)               # (H*B, S, S)
        sc = sc - jnp.max(sc, axis=-1, keepdims=True)
        p = jnp.exp(sc)
        p = p * pl.reciprocal(jnp.sum(p, axis=-1, keepdims=True), approx=False)
        ctx = jnp.einsum('nqk,nkd->nqd', p, vs,
                         preferred_element_type=jnp.float32)              # (H*B, S, hd)
        ctx = ctx.reshape(n_head, BS, hd)                                 # (H, B*S, hd)
        proj = jnp.einsum('hnd,hde->hne', ctx, Wo3,
                          preferred_element_type=jnp.float32)             # (H, B*S, D)
        x = x + jnp.sum(proj, axis=0) + Bo                                # residual 1

        # ---- pre-norm feed-forward -----------------------------------------------------
        h2 = _layer_norm(x, G2, Be2)
        ff = jnp.maximum(jnp.dot(h2, W1, preferred_element_type=jnp.float32) + B1, 0.0)
        x = x + jnp.dot(ff, W2, preferred_element_type=jnp.float32) + B2  # residual 2

    # --- ConcatenateAggregator + decoder Linear: one batched contraction over tokens ---
    x3 = x.reshape(B, S, D)
    xs = jnp.stack([x3[:, t, :] for t in range(S)], axis=0)               # (S, B, D)
    contrib = jnp.einsum('sbd,sdo->sbo', xs, decw_ref[...],
                         preferred_element_type=jnp.float32)              # (S, B, n_out)
    out_ref[...] = jnp.sum(contrib, axis=0) + decb_ref[...]


# ---------------- parameter packing (done once, outside the hot path) ------------------
def pack_params(params):
    D = EMBED_DIM
    scale = float(HEAD_DIM) ** -0.5        # torchtext ScaledDotProduct query scaling
    vec_w = max(4 * D, N_HID + D)

    def pad_row(r):
        return jnp.pad(r, ((0, 0), (0, vec_w - r.shape[1])))

    wbig, w2s, vecs = [], [], []
    for (ln1_g, ln1_b, wq, bq, wk, bk, wv, bv, wo, bo,
         ln2_g, ln2_b, w1, b1, w2, b2) in params["layers"]:
        wbig.append(jnp.concatenate([wq * scale, wk, wv, wo, w1], axis=1))  # (D, 4D+n_hid)
        w2s.append(w2)                                                      # (n_hid, D)
        row0 = pad_row(jnp.concatenate([ln1_g, ln1_b, ln2_g, ln2_b], axis=1))
        row1 = pad_row(jnp.concatenate([bq * scale, bk, bv, bo], axis=1))
        row2 = pad_row(jnp.concatenate([b1, b2], axis=1))
        vecs.append(jnp.concatenate([row0, row1, row2], axis=0))            # (3, vec_w)

    table = jnp.concatenate([params["emb_table"], params["num_w"], params["num_b"]],
                            axis=0)                                          # (K_ENC, D)
    table = jnp.pad(table, ((0, (-K_ENC) % 8), (0, 0)))                      # MXU-friendly K

    return dict(
        cat_offset=params["cat_offset"],
        table=table,
        wbig=jnp.stack(wbig),                   # (L, D, 4D + n_hid)
        w2=jnp.stack(w2s),                      # (L, n_hid, D)
        vec=jnp.stack(vecs),                    # (L, 3, vec_w)
        decw=params["dec_w"].reshape(SEQ, EMBED_DIM, N_OUTPUT),
        decb=params["dec_b"],                   # (1, n_out)
    )


# ---------------- wrapper ---------------------------------------------------------------
def tabular_transformer_forward(packed, x_cat, x_num):
    B = x_cat.shape[0]
    idx = x_cat.astype(jnp.int32) + packed["cat_offset"][None, :]           # (B, n_cat)

    # Design matrix (layout plumbing only; the encoder arithmetic runs on the MXU in-kernel):
    #   row (b, cat j): one-hot(idx[b, j]) over the embedding rows
    #   row (b, num j): x_num[b, j] at column R+j and 1.0 at column R+n_num+j
    oh = jax.nn.one_hot(idx, TOTAL_EMB_ROWS, dtype=jnp.float32)             # (B, n_cat, R)
    cat_rows = jnp.concatenate(
        [oh, jnp.zeros((B, N_CAT, 2 * N_NUMERICAL), jnp.float32)], axis=-1)
    eye = jnp.eye(N_NUMERICAL, dtype=jnp.float32)
    num_rows = jnp.concatenate(
        [jnp.zeros((B, N_NUMERICAL, TOTAL_EMB_ROWS), jnp.float32),
         x_num.astype(jnp.float32)[:, :, None] * eye[None],
         jnp.broadcast_to(eye[None], (B, N_NUMERICAL, N_NUMERICAL))], axis=-1)
    design = jnp.concatenate([cat_rows, num_rows], axis=1).reshape(B * SEQ, K_ENC)
    design = jnp.pad(design, ((0, 0), (0, packed["table"].shape[0] - K_ENC)))

    kernel = functools.partial(_fused_forward_kernel, n_head=N_HEAD,
                               n_layers=N_LAYERS, n_cat=N_CAT, n_num=N_NUMERICAL)
    args = (design, packed["table"], packed["wbig"], packed["w2"],
            packed["vec"], packed["decw"], packed["decb"])

    out = pl.pallas_call(
        kernel,
        out_shape=jax.ShapeDtypeStruct((B, N_OUTPUT), jnp.float32),
        in_specs=[pl.BlockSpec(memory_space=pltpu.MemorySpace.VMEM)] * len(args),
        out_specs=pl.BlockSpec(memory_space=pltpu.MemorySpace.VMEM),
    )(*args)
    # TODO(synk): once callers supply B*S >= 256 rows, add a leading "parallel" batch
    # grid axis (v7x megacore) and cast matmul operands to bf16 on v6e/v7x; at B=2 the
    # grid-less all-f32 form is faster.

    # torch .squeeze(dim=-1): only squeezes when the last dim is 1
    if out.shape[-1] == 1:
        out = jnp.squeeze(out, axis=-1)
    return out


# ---------------- deterministic parameter construction ---------------------------------
def init_params(key):
    ks = jax.random.split(key, 4 + N_LAYERS)

    def lin(k, fan_in, fan_out):
        kw, kb = jax.random.split(k)
        w = jax.random.normal(kw, (fan_in, fan_out), jnp.float32) * 0.05
        b = jax.random.normal(kb, (1, fan_out), jnp.float32) * 0.05
        return w, b

    # categories_offset buffer: ([-1] + n_categories) + 1, cumsum[:-1]
    n_cats = np.array([-1] + N_CATEGORIES, dtype=np.int64) + 1
    cat_offset = jnp.array(np.cumsum(n_cats)[:-1], dtype=jnp.int32)

    emb_table = jax.random.normal(ks[0], (TOTAL_EMB_ROWS, EMBED_DIM), jnp.float32) * 0.05
    num_w = jax.random.normal(ks[1], (N_NUMERICAL, EMBED_DIM), jnp.float32) * 0.05
    num_b = jax.random.normal(ks[2], (N_NUMERICAL, EMBED_DIM), jnp.float32) * 0.05

    # NOTE: the torch module deep-copies the layer, so at init all layers are identical;
    # a trained model has distinct per-layer weights, so we generate (and the kernel
    # accepts) distinct weights per layer.
    layers = []
    for l in range(N_LAYERS):
        lk = jax.random.split(ks[3 + l], 8)
        wq, bq = lin(lk[0], EMBED_DIM, EMBED_DIM)
        wk, bk = lin(lk[1], EMBED_DIM, EMBED_DIM)
        wv, bv = lin(lk[2], EMBED_DIM, EMBED_DIM)
        wo, bo = lin(lk[3], EMBED_DIM, EMBED_DIM)
        w1, b1 = lin(lk[4], EMBED_DIM, N_HID)
        w2, b2 = lin(lk[5], N_HID, EMBED_DIM)
        ln1_g = 1.0 + jax.random.normal(lk[6], (1, EMBED_DIM), jnp.float32) * 0.02
        ln1_b = jax.random.normal(lk[6], (1, EMBED_DIM), jnp.float32) * 0.02
        ln2_g = 1.0 + jax.random.normal(lk[7], (1, EMBED_DIM), jnp.float32) * 0.02
        ln2_b = jax.random.normal(lk[7], (1, EMBED_DIM), jnp.float32) * 0.02
        layers.append((ln1_g, ln1_b, wq, bq, wk, bk, wv, bv, wo, bo,
                       ln2_g, ln2_b, w1, b1, w2, b2))

    dec_w, dec_b = lin(ks[3 + N_LAYERS], EMBED_DIM * SEQ, N_OUTPUT)
    return dict(cat_offset=cat_offset, emb_table=emb_table,
                num_w=num_w, num_b=num_b, layers=layers,
                dec_w=dec_w, dec_b=dec_b)


# ---------------- pure-JAX reference (correctness check) --------------------------------
def reference_forward(params, x_cat, x_num):
    idx = x_cat + params["cat_offset"][None, :]
    emb = params["emb_table"][idx]                                           # (B, n_cat, D)
    enc = x_num[:, :, None] * params["num_w"][None] + params["num_b"][None]  # (B, n_num, D)
    h = jnp.concatenate([emb, enc], axis=1)                                  # (B, S, D)
    scale = float(HEAD_DIM) ** -0.5
    for (ln1_g, ln1_b, wq, bq, wk, bk, wv, bv, wo, bo,
         ln2_g, ln2_b, w1, b1, w2, b2) in params["layers"]:
        x = h
        z = _layer_norm(x, ln1_g, ln1_b)
        q = (z @ wq + bq) * scale
        k = z @ wk + bk
        v = z @ wv + bv
        qh = q.reshape(BATCH, SEQ, N_HEAD, HEAD_DIM)
        kh = k.reshape(BATCH, SEQ, N_HEAD, HEAD_DIM)
        vh = v.reshape(BATCH, SEQ, N_HEAD, HEAD_DIM)
        s = jnp.einsum("bqhd,bkhd->bhqk", qh, kh)
        p = jax.nn.softmax(s, axis=-1)
        ctx = jnp.einsum("bhqk,bkhd->bqhd", p, vh).reshape(BATCH, SEQ, EMBED_DIM)
        x = x + (ctx @ wo + bo)
        z2 = _layer_norm(x, ln2_g, ln2_b)
        ff = jnp.maximum(z2 @ w1 + b1, 0.0) @ w2 + b2
        h = x + ff
    agg = h.reshape(BATCH, -1)
    out = agg @ params["dec_w"] + params["dec_b"]
    if out.shape[-1] == 1:
        out = jnp.squeeze(out, axis=-1)
    return out


# ---------------- main -------------------------------------------------------------------
if __name__ == "__main__":
    key = jax.random.PRNGKey(0)
    kp, kc, kn = jax.random.split(key, 3)
    params = init_params(kp)
    packed = pack_params(params)

    cat_keys = jax.random.split(kc, len(N_CATEGORIES))
    cols = [jax.random.randint(k, (BATCH,), 0, n + 1)
            for k, n in zip(cat_keys, N_CATEGORIES)]
    x_cat = jnp.stack(cols, axis=1).astype(jnp.int32)            # (B, n_cat)
    x_num = jax.random.normal(kn, (BATCH, N_NUMERICAL), jnp.float32)

    fwd = jax.jit(tabular_transformer_forward)
    out = jax.block_until_ready(fwd(packed, x_cat, x_num))

    ref = reference_forward(params, x_cat, x_num)
    # tolerance absorbs MXU vs. XLA f32-matmul precision differences
    np.testing.assert_allclose(np.asarray(out), np.asarray(ref),
                               rtol=5e-3, atol=5e-3)
    # TODO(synk): need_weights=True (stacked per-layer attention weights), the
    # cls/max/mean/sum/rnn aggregators, decoder_hidden_units MLP and
    # numerical_passthrough paths are not implemented (module defaults are used).
    print("KERNEL_OK")
</pallas_src>

<mosaic_0001>
module attributes {stable_mosaic.version = 11 : i64} {
  func.func @_fused_forward_kernel(%arg0: memref<16x32xf32, #tpu.memory_space<vmem>>, %arg1: memref<32x32xf32, #tpu.memory_space<vmem>>, %arg2: memref<2x32x192xf32, #tpu.memory_space<vmem>>, %arg3: memref<2x64x32xf32, #tpu.memory_space<vmem>>, %arg4: memref<2x3x128xf32, #tpu.memory_space<vmem>>, %arg5: memref<8x32x3xf32, #tpu.memory_space<vmem>>, %arg6: memref<1x3xf32, #tpu.memory_space<vmem>>, %arg7: memref<2x3xf32, #tpu.memory_space<vmem>>) attributes {dimension_semantics = [], scalar_prefetch = 0 : i64, scratch_operands = 0 : i64, tpu.core_type = #tpu.core_type<tc>} {
    %c0 = arith.constant 0 : index
    %c0_0 = arith.constant 0 : index
    %0 = vector.load %arg0[%c0, %c0_0] : memref<16x32xf32, #tpu.memory_space<vmem>>, vector<16x32xf32>
    %c0_1 = arith.constant 0 : index
    %c0_2 = arith.constant 0 : index
    %1 = vector.load %arg1[%c0_1, %c0_2] : memref<32x32xf32, #tpu.memory_space<vmem>>, vector<32x32xf32>
    %cst = arith.constant dense<0.000000e+00> : vector<16x32xf32>
    %2 = tpu.matmul %0, %1, %cst {dimension_numbers = #tpu.dot_dimension_numbers<[1], [0], [0], [1], [0, 0, 1, 1], [], []>} : vector<16x32xf32>, vector<32x32xf32>, vector<16x32xf32> -> vector<16x32xf32>
    %c0_3 = arith.constant 0 : index
    %c0_4 = arith.constant 0 : index
    %c0_5 = arith.constant 0 : index
    %3 = vector.load %arg2[%c0_3, %c0_4, %c0_5] : memref<2x32x192xf32, #tpu.memory_space<vmem>>, vector<1x32x192xf32>
    %4 = vector.shape_cast %3 : vector<1x32x192xf32> to vector<32x192xf32>
    %c0_6 = arith.constant 0 : index
    %c0_7 = arith.constant 0 : index
    %c0_8 = arith.constant 0 : index
    %5 = vector.load %arg4[%c0_6, %c0_7, %c0_8] : memref<2x3x128xf32, #tpu.memory_space<vmem>>, vector<1x3x128xf32>
    %6 = vector.shape_cast %5 : vector<1x3x128xf32> to vector<3x128xf32>
    %7 = vector.extract_strided_slice %4 {offsets = [0, 0], sizes = [32, 96], strides = [1, 1]} : vector<32x192xf32> to vector<32x96xf32>
    %8 = vector.extract_strided_slice %4 {offsets = [0, 96], sizes = [32, 32], strides = [1, 1]} : vector<32x192xf32> to vector<32x32xf32>
    %9 = vector.shape_cast %8 : vector<32x32xf32> to vector<4x8x32xf32>
    %10 = vector.extract_strided_slice %4 {offsets = [0, 128], sizes = [32, 64], strides = [1, 1]} : vector<32x192xf32> to vector<32x64xf32>
    %c0_9 = arith.constant 0 : index
    %c0_10 = arith.constant 0 : index
    %c0_11 = arith.constant 0 : index
    %11 = vector.load %arg3[%c0_9, %c0_10, %c0_11] : memref<2x64x32xf32, #tpu.memory_space<vmem>>, vector<1x64x32xf32>
    %12 = vector.shape_cast %11 : vector<1x64x32xf32> to vector<64x32xf32>
    %13 = vector.extract_strided_slice %6 {offsets = [0, 0], sizes = [1, 32], strides = [1, 1]} : vector<3x128xf32> to vector<1x32xf32>
    %14 = vector.extract_strided_slice %6 {offsets = [0, 32], sizes = [1, 32], strides = [1, 1]} : vector<3x128xf32> to vector<1x32xf32>
    %15 = vector.extract_strided_slice %6 {offsets = [0, 64], sizes = [1, 32], strides = [1, 1]} : vector<3x128xf32> to vector<1x32xf32>
    %16 = vector.extract_strided_slice %6 {offsets = [0, 96], sizes = [1, 32], strides = [1, 1]} : vector<3x128xf32> to vector<1x32xf32>
    %17 = vector.extract_strided_slice %6 {offsets = [1, 0], sizes = [1, 96], strides = [1, 1]} : vector<3x128xf32> to vector<1x96xf32>
    %18 = vector.extract_strided_slice %6 {offsets = [1, 96], sizes = [1, 32], strides = [1, 1]} : vector<3x128xf32> to vector<1x32xf32>
    %19 = vector.extract_strided_slice %6 {offsets = [2, 0], sizes = [1, 64], strides = [1, 1]} : vector<3x128xf32> to vector<1x64xf32>
    %20 = vector.extract_strided_slice %6 {offsets = [2, 64], sizes = [1, 32], strides = [1, 1]} : vector<3x128xf32> to vector<1x32xf32>
    %cst_12 = arith.constant dense<0.000000e+00> : vector<16xf32>
    %21 = vector.multi_reduction <add>, %2, %cst_12 [1] : vector<16x32xf32> to vector<16xf32>
    %22 = vector.shape_cast %21 : vector<16xf32> to vector<16x1xf32>
    %cst_13 = arith.constant 3.200000e+01 : f32
    %23 = vector.broadcast %cst_13 : f32 to vector<16x1xf32>
    %24 = arith.divf %22, %23 : vector<16x1xf32>
    %25 = vector.broadcast %24 : vector<16x1xf32> to vector<16x32xf32>
    %26 = arith.subf %2, %25 : vector<16x32xf32>
    %27 = arith.mulf %26, %26 : vector<16x32xf32>
    %cst_14 = arith.constant dense<0.000000e+00> : vector<16xf32>
    %28 = vector.multi_reduction <add>, %27, %cst_14 [1] : vector<16x32xf32> to vector<16xf32>
    %29 = vector.shape_cast %28 : vector<16xf32> to vector<16x1xf32>
    %cst_15 = arith.constant 3.200000e+01 : f32
    %30 = vector.broadcast %cst_15 : f32 to vector<16x1xf32>
    %31 = arith.divf %29, %30 : vector<16x1xf32>
    %32 = vector.broadcast %24 : vector<16x1xf32> to vector<16x32xf32>
    %33 = arith.subf %2, %32 : vector<16x32xf32>
    %cst_16 = arith.constant 9.99999974E-6 : f32
    %34 = vector.broadcast %cst_16 : f32 to vector<16x1xf32>
    %35 = arith.addf %31, %34 : vector<16x1xf32>
    %36 = math.rsqrt %35 : vector<16x1xf32>
    %37 = vector.broadcast %36 : vector<16x1xf32> to vector<16x32xf32>
    %38 = arith.mulf %33, %37 : vector<16x32xf32>
    %39 = vector.broadcast %13 : vector<1x32xf32> to vector<16x32xf32>
    %40 = arith.mulf %38, %39 : vector<16x32xf32>
    %41 = vector.broadcast %14 : vector<1x32xf32> to vector<16x32xf32>
    %42 = arith.addf %40, %41 : vector<16x32xf32>
    %cst_17 = arith.constant dense<0.000000e+00> : vector<16x96xf32>
    %43 = tpu.matmul %42, %7, %cst_17 {dimension_numbers = #tpu.dot_dimension_numbers<[1], [0], [0], [1], [0, 0, 1, 1], [], []>} : vector<16x32xf32>, vector<32x96xf32>, vector<16x96xf32> -> vector<16x96xf32>
    %44 = vector.broadcast %17 : vector<1x96xf32> to vector<16x96xf32>
    %45 = arith.addf %43, %44 : vector<16x96xf32>
    %46 = vector.extract_strided_slice %45 {offsets = [0, 0], sizes = [16, 32], strides = [1, 1]} : vector<16x96xf32> to vector<16x32xf32>
    %47 = vector.extract_strided_slice %46 {offsets = [0, 0], sizes = [16, 8], strides = [1, 1]} : vector<16x32xf32> to vector<16x8xf32>
    %48 = vector.extract_strided_slice %46 {offsets = [0, 8], sizes = [16, 8], strides = [1, 1]} : vector<16x32xf32> to vector<16x8xf32>
    %49 = vector.extract_strided_slice %46 {offsets = [0, 16], sizes = [16, 8], strides = [1, 1]} : vector<16x32xf32> to vector<16x8xf32>
    %50 = vector.extract_strided_slice %46 {offsets = [0, 24], sizes = [16, 8], strides = [1, 1]} : vector<16x32xf32> to vector<16x8xf32>
    %51 = vector.shape_cast %47 : vector<16x8xf32> to vector<1x16x8xf32>
    %52 = vector.shape_cast %48 : vector<16x8xf32> to vector<1x16x8xf32>
    %53 = vector.shape_cast %49 : vector<16x8xf32> to vector<1x16x8xf32>
    %54 = vector.shape_cast %50 : vector<16x8xf32> to vector<1x16x8xf32>
    %55 = tpu.concatenate %51, %52, %53, %54 in 0 : vector<1x16x8xf32>, vector<1x16x8xf32>, vector<1x16x8xf32>, vector<1x16x8xf32> -> vector<4x16x8xf32>
    %56 = vector.shape_cast %55 : vector<4x16x8xf32> to vector<8x8x8xf32>
    %57 = vector.extract_strided_slice %45 {offsets = [0, 32], sizes = [16, 32], strides = [1, 1]} : vector<16x96xf32> to vector<16x32xf32>
    %58 = vector.extract_strided_slice %57 {offsets = [0, 0], sizes = [16, 8], strides = [1, 1]} : vector<16x32xf32> to vector<16x8xf32>
    %59 = vector.extract_strided_slice %57 {offsets = [0, 8], sizes = [16, 8], strides = [1, 1]} : vector<16x32xf32> to vector<16x8xf32>
    %60 = vector.extract_strided_slice %57 {offsets = [0, 16], sizes = [16, 8], strides = [1, 1]} : vector<16x32xf32> to vector<16x8xf32>
    %61 = vector.extract_strided_slice %57 {offsets = [0, 24], sizes = [16, 8], strides = [1, 1]} : vector<16x32xf32> to vector<16x8xf32>
    %62 = vector.shape_cast %58 : vector<16x8xf32> to vector<1x16x8xf32>
    %63 = vector.shape_cast %59 : vector<16x8xf32> to vector<1x16x8xf32>
    %64 = vector.shape_cast %60 : vector<16x8xf32> to vector<1x16x8xf32>
    %65 = vector.shape_cast %61 : vector<16x8xf32> to vector<1x16x8xf32>
    %66 = tpu.concatenate %62, %63, %64, %65 in 0 : vector<1x16x8xf32>, vector<1x16x8xf32>, vector<1x16x8xf32>, vector<1x16x8xf32> -> vector<4x16x8xf32>
    %67 = vector.shape_cast %66 : vector<4x16x8xf32> to vector<8x8x8xf32>
    %68 = vector.extract_strided_slice %45 {offsets = [0, 64], sizes = [16, 32], strides = [1, 1]} : vector<16x96xf32> to vector<16x32xf32>
    %69 = vector.extract_strided_slice %68 {offsets = [0, 0], sizes = [16, 8], strides = [1, 1]} : vector<16x32xf32> to vector<16x8xf32>
    %70 = vector.extract_strided_slice %68 {offsets = [0, 8], sizes = [16, 8], strides = [1, 1]} : vector<16x32xf32> to vector<16x8xf32>
    %71 = vector.extract_strided_slice %68 {offsets = [0, 16], sizes = [16, 8], strides = [1, 1]} : vector<16x32xf32> to vector<16x8xf32>
    %72 = vector.extract_strided_slice %68 {offsets = [0, 24], sizes = [16, 8], strides = [1, 1]} : vector<16x32xf32> to vector<16x8xf32>
    %73 = vector.shape_cast %69 : vector<16x8xf32> to vector<1x16x8xf32>
    %74 = vector.shape_cast %70 : vector<16x8xf32> to vector<1x16x8xf32>
    %75 = vector.shape_cast %71 : vector<16x8xf32> to vector<1x16x8xf32>
    %76 = vector.shape_cast %72 : vector<16x8xf32> to vector<1x16x8xf32>
    %77 = tpu.concatenate %73, %74, %75, %76 in 0 : vector<1x16x8xf32>, vector<1x16x8xf32>, vector<1x16x8xf32>, vector<1x16x8xf32> -> vector<4x16x8xf32>
    %78 = vector.shape_cast %77 : vector<4x16x8xf32> to vector<8x8x8xf32>
    "tpu.trace_start"() <{level = 10 : i32, message = "nqd,nkd->nqk"}> : () -> ()
    %cst_18 = arith.constant dense<0.000000e+00> : vector<8x8x8xf32>
    %79 = tpu.matmul %56, %67, %cst_18 {dimension_numbers = #tpu.dot_dimension_numbers<[2], [2], [1], [1], [0, 0, 0, 1, 1, 1], [0], [0]>} : vector<8x8x8xf32>, vector<8x8x8xf32>, vector<8x8x8xf32> -> vector<8x8x8xf32>
    "tpu.trace_stop"() : () -> ()
    %cst_19 = arith.constant dense<0xFF800000> : vector<8x8xf32>
    %80 = vector.multi_reduction <maximumf>, %79, %cst_19 [2] : vector<8x8x8xf32> to vector<8x8xf32>
    %81 = vector.shape_cast %80 : vector<8x8xf32> to vector<8x8x1xf32>
    %82 = vector.broadcast %81 : vector<8x8x1xf32> to vector<8x8x8xf32>
    %83 = arith.subf %79, %82 : vector<8x8x8xf32>
    %84 = math.exp %83 : vector<8x8x8xf32>
    %cst_20 = arith.constant dense<0.000000e+00> : vector<8x8xf32>
    %85 = vector.multi_reduction <add>, %84, %cst_20 [2] : vector<8x8x8xf32> to vector<8x8xf32>
    %86 = vector.shape_cast %85 : vector<8x8xf32> to vector<8x8x1xf32>
    %87 = tpu.reciprocal %86 : vector<8x8x1xf32> -> vector<8x8x1xf32>
    %88 = vector.broadcast %87 : vector<8x8x1xf32> to vector<8x8x8xf32>
    %89 = arith.mulf %84, %88 : vector<8x8x8xf32>
    "tpu.trace_start"() <{level = 10 : i32, message = "nqk,nkd->nqd"}> : () -> ()
    %cst_21 = arith.constant dense<0.000000e+00> : vector<8x8x8xf32>
    %90 = tpu.matmul %89, %78, %cst_21 {dimension_numbers = #tpu.dot_dimension_numbers<[2], [1], [1], [2], [0, 0, 0, 1, 1, 2], [0], [0]>} : vector<8x8x8xf32>, vector<8x8x8xf32>, vector<8x8x8xf32> -> vector<8x8x8xf32>
    "tpu.trace_stop"() : () -> ()
    %91 = vector.shape_cast %90 : vector<8x8x8xf32> to vector<4x16x8xf32>
    "tpu.trace_start"() <{level = 10 : i32, message = "hnd,hde->hne"}> : () -> ()
    %cst_22 = arith.constant dense<0.000000e+00> : vector<4x16x32xf32>
    %92 = tpu.matmul %91, %9, %cst_22 {dimension_numbers = #tpu.dot_dimension_numbers<[2], [1], [1], [2], [0, 0, 0, 1, 1, 2], [0], [0]>} : vector<4x16x8xf32>, vector<4x8x32xf32>, vector<4x16x32xf32> -> vector<4x16x32xf32>
    "tpu.trace_stop"() : () -> ()
    %cst_23 = arith.constant dense<0.000000e+00> : vector<16x32xf32>
    %93 = vector.multi_reduction <add>, %92, %cst_23 [0] : vector<4x16x32xf32> to vector<16x32xf32>
    %94 = arith.addf %2, %93 : vector<16x32xf32>
    %95 = vector.broadcast %18 : vector<1x32xf32> to vector<16x32xf32>
    %96 = arith.addf %94, %95 : vector<16x32xf32>
    %cst_24 = arith.constant dense<0.000000e+00> : vector<16xf32>
    %97 = vector.multi_reduction <add>, %96, %cst_24 [1] : vector<16x32xf32> to vector<16xf32>
    %98 = vector.shape_cast %97 : vector<16xf32> to vector<16x1xf32>
    %cst_25 = arith.constant 3.200000e+01 : f32
    %99 = vector.broadcast %cst_25 : f32 to vector<16x1xf32>
    %100 = arith.divf %98, %99 : vector<16x1xf32>
    %101 = vector.broadcast %100 : vector<16x1xf32> to vector<16x32xf32>
    %102 = arith.subf %96, %101 : vector<16x32xf32>
    %103 = arith.mulf %102, %102 : vector<16x32xf32>
    %cst_26 = arith.constant dense<0.000000e+00> : vector<16xf32>
    %104 = vector.multi_reduction <add>, %103, %cst_26 [1] : vector<16x32xf32> to vector<16xf32>
    %105 = vector.shape_cast %104 : vector<16xf32> to vector<16x1xf32>
    %cst_27 = arith.constant 3.200000e+01 : f32
    %106 = vector.broadcast %cst_27 : f32 to vector<16x1xf32>
    %107 = arith.divf %105, %106 : vector<16x1xf32>
    %108 = vector.broadcast %100 : vector<16x1xf32> to vector<16x32xf32>
    %109 = arith.subf %96, %108 : vector<16x32xf32>
    %cst_28 = arith.constant 9.99999974E-6 : f32
    %110 = vector.broadcast %cst_28 : f32 to vector<16x1xf32>
    %111 = arith.addf %107, %110 : vector<16x1xf32>
    %112 = math.rsqrt %111 : vector<16x1xf32>
    %113 = vector.broadcast %112 : vector<16x1xf32> to vector<16x32xf32>
    %114 = arith.mulf %109, %113 : vector<16x32xf32>
    %115 = vector.broadcast %15 : vector<1x32xf32> to vector<16x32xf32>
    %116 = arith.mulf %114, %115 : vector<16x32xf32>
    %117 = vector.broadcast %16 : vector<1x32xf32> to vector<16x32xf32>
    %118 = arith.addf %116, %117 : vector<16x32xf32>
    %cst_29 = arith.constant dense<0.000000e+00> : vector<16x64xf32>
    %119 = tpu.matmul %118, %10, %cst_29 {dimension_numbers = #tpu.dot_dimension_numbers<[1], [0], [0], [1], [0, 0, 1, 1], [], []>} : vector<16x32xf32>, vector<32x64xf32>, vector<16x64xf32> -> vector<16x64xf32>
    %120 = vector.broadcast %19 : vector<1x64xf32> to vector<16x64xf32>
    %121 = arith.addf %119, %120 : vector<16x64xf32>
    %cst_30 = arith.constant 0.000000e+00 : f32
    %122 = vector.broadcast %cst_30 : f32 to vector<16x64xf32>
    %123 = arith.maximumf %121, %122 : vector<16x64xf32>
    %cst_31 = arith.constant dense<0.000000e+00> : vector<16x32xf32>
    %124 = tpu.matmul %123, %12, %cst_31 {dimension_numbers = #tpu.dot_dimension_numbers<[1], [0], [0], [1], [0, 0, 1, 1], [], []>} : vector<16x64xf32>, vector<64x32xf32>, vector<16x32xf32> -> vector<16x32xf32>
    %125 = arith.addf %96, %124 : vector<16x32xf32>
    %126 = vector.broadcast %20 : vector<1x32xf32> to vector<16x32xf32>
    %127 = arith.addf %125, %126 : vector<16x32xf32>
    %c1 = arith.constant 1 : index
    %c0_32 = arith.constant 0 : index
    %c0_33 = arith.constant 0 : index
    %128 = vector.load %arg2[%c1, %c0_32, %c0_33] : memref<2x32x192xf32, #tpu.memory_space<vmem>>, vector<1x32x192xf32>
    %129 = vector.shape_cast %128 : vector<1x32x192xf32> to vector<32x192xf32>
    %c1_34 = arith.constant 1 : index
    %c0_35 = arith.constant 0 : index
    %c0_36 = arith.constant 0 : index
    %130 = vector.load %arg4[%c1_34, %c0_35, %c0_36] : memref<2x3x128xf32, #tpu.memory_space<vmem>>, vector<1x3x128xf32>
    %131 = vector.shape_cast %130 : vector<1x3x128xf32> to vector<3x128xf32>
    %132 = vector.extract_strided_slice %129 {offsets = [0, 0], sizes = [32, 96], strides = [1, 1]} : vector<32x192xf32> to vector<32x96xf32>
    %133 = vector.extract_strided_slice %129 {offsets = [0, 96], sizes = [32, 32], strides = [1, 1]} : vector<32x192xf32> to vector<32x32xf32>
    %134 = vector.shape_cast %133 : vector<32x32xf32> to vector<4x8x32xf32>
    %135 = vector.extract_strided_slice %129 {offsets = [0, 128], sizes = [32, 64], strides = [1, 1]} : vector<32x192xf32> to vector<32x64xf32>
    %c1_37 = arith.constant 1 : index
    %c0_38 = arith.constant 0 : index
    %c0_39 = arith.constant 0 : index
    %136 = vector.load %arg3[%c1_37, %c0_38, %c0_39] : memref<2x64x32xf32, #tpu.memory_space<vmem>>, vector<1x64x32xf32>
    %137 = vector.shape_cast %136 : vector<1x64x32xf32> to vector<64x32xf32>
    %138 = vector.extract_strided_slice %131 {offsets = [0, 0], sizes = [1, 32], strides = [1, 1]} : vector<3x128xf32> to vector<1x32xf32>
    %139 = vector.extract_strided_slice %131 {offsets = [0, 32], sizes = [1, 32], strides = [1, 1]} : vector<3x128xf32> to vector<1x32xf32>
    %140 = vector.extract_strided_slice %131 {offsets = [0, 64], sizes = [1, 32], strides = [1, 1]} : vector<3x128xf32> to vector<1x32xf32>
    %141 = vector.extract_strided_slice %131 {offsets = [0, 96], sizes = [1, 32], strides = [1, 1]} : vector<3x128xf32> to vector<1x32xf32>
    %142 = vector.extract_strided_slice %131 {offsets = [1, 0], sizes = [1, 96], strides = [1, 1]} : vector<3x128xf32> to vector<1x96xf32>
    %143 = vector.extract_strided_slice %131 {offsets = [1, 96], sizes = [1, 32], strides = [1, 1]} : vector<3x128xf32> to vector<1x32xf32>
    %144 = vector.extract_strided_slice %131 {offsets = [2, 0], sizes = [1, 64], strides = [1, 1]} : vector<3x128xf32> to vector<1x64xf32>
    %145 = vector.extract_strided_slice %131 {offsets = [2, 64], sizes = [1, 32], strides = [1, 1]} : vector<3x128xf32> to vector<1x32xf32>
    %cst_40 = arith.constant dense<0.000000e+00> : vector<16xf32>
    %146 = vector.multi_reduction <add>, %127, %cst_40 [1] : vector<16x32xf32> to vector<16xf32>
    %147 = vector.shape_cast %146 : vector<16xf32> to vector<16x1xf32>
    %cst_41 = arith.constant 3.200000e+01 : f32
    %148 = vector.broadcast %cst_41 : f32 to vector<16x1xf32>
    %149 = arith.divf %147, %148 : vector<16x1xf32>
    %150 = vector.broadcast %149 : vector<16x1xf32> to vector<16x32xf32>
    %151 = arith.subf %127, %150 : vector<16x32xf32>
    %152 = arith.mulf %151, %151 : vector<16x32xf32>
    %cst_42 = arith.constant dense<0.000000e+00> : vector<16xf32>
    %153 = vector.multi_reduction <add>, %152, %cst_42 [1] : vector<16x32xf32> to vector<16xf32>
    %154 = vector.shape_cast %153 : vector<16xf32> to vector<16x1xf32>
    %cst_43 = arith.constant 3.200000e+01 : f32
    %155 = vector.broadcast %cst_43 : f32 to vector<16x1xf32>
    %156 = arith.divf %154, %155 : vector<16x1xf32>
    %157 = vector.broadcast %149 : vector<16x1xf32> to vector<16x32xf32>
    %158 = arith.subf %127, %157 : vector<16x32xf32>
    %cst_44 = arith.constant 9.99999974E-6 : f32
    %159 = vector.broadcast %cst_44 : f32 to vector<16x1xf32>
    %160 = arith.addf %156, %159 : vector<16x1xf32>
    %161 = math.rsqrt %160 : vector<16x1xf32>
    %162 = vector.broadcast %161 : vector<16x1xf32> to vector<16x32xf32>
    %163 = arith.mulf %158, %162 : vector<16x32xf32>
    %164 = vector.broadcast %138 : vector<1x32xf32> to vector<16x32xf32>
    %165 = arith.mulf %163, %164 : vector<16x32xf32>
    %166 = vector.broadcast %139 : vector<1x32xf32> to vector<16x32xf32>
    %167 = arith.addf %165, %166 : vector<16x32xf32>
    %cst_45 = arith.constant dense<0.000000e+00> : vector<16x96xf32>
    %168 = tpu.matmul %167, %132, %cst_45 {dimension_numbers = #tpu.dot_dimension_numbers<[1], [0], [0], [1], [0, 0, 1, 1], [], []>} : vector<16x32xf32>, vector<32x96xf32>, vector<16x96xf32> -> vector<16x96xf32>
    %169 = vector.broadcast %142 : vector<1x96xf32> to vector<16x96xf32>
    %170 = arith.addf %168, %169 : vector<16x96xf32>
    %171 = vector.extract_strided_slice %170 {offsets = [0, 0], sizes = [16, 32], strides = [1, 1]} : vector<16x96xf32> to vector<16x32xf32>
    %172 = vector.extract_strided_slice %171 {offsets = [0, 0], sizes = [16, 8], strides = [1, 1]} : vector<16x32xf32> to vector<16x8xf32>
    %173 = vector.extract_strided_slice %171 {offsets = [0, 8], sizes = [16, 8], strides = [1, 1]} : vector<16x32xf32> to vector<16x8xf32>
    %174 = vector.extract_strided_slice %171 {offsets = [0, 16], sizes = [16, 8], strides = [1, 1]} : vector<16x32xf32> to vector<16x8xf32>
    %175 = vector.extract_strided_slice %171 {offsets = [0, 24], sizes = [16, 8], strides = [1, 1]} : vector<16x32xf32> to vector<16x8xf32>
    %176 = vector.shape_cast %172 : vector<16x8xf32> to vector<1x16x8xf32>
    %177 = vector.shape_cast %173 : vector<16x8xf32> to vector<1x16x8xf32>
    %178 = vector.shape_cast %174 : vector<16x8xf32> to vector<1x16x8xf32>
    %179 = vector.shape_cast %175 : vector<16x8xf32> to vector<1x16x8xf32>
    %180 = tpu.concatenate %176, %177, %178, %179 in 0 : vector<1x16x8xf32>, vector<1x16x8xf32>, vector<1x16x8xf32>, vector<1x16x8xf32> -> vector<4x16x8xf32>
    %181 = vector.shape_cast %180 : vector<4x16x8xf32> to vector<8x8x8xf32>
    %182 = vector.extract_strided_slice %170 {offsets = [0, 32], sizes = [16, 32], strides = [1, 1]} : vector<16x96xf32> to vector<16x32xf32>
    %183 = vector.extract_strided_slice %182 {offsets = [0, 0], sizes = [16, 8], strides = [1, 1]} : vector<16x32xf32> to vector<16x8xf32>
    %184 = vector.extract_strided_slice %182 {offsets = [0, 8], sizes = [16, 8], strides = [1, 1]} : vector<16x32xf32> to vector<16x8xf32>
    %185 = vector.extract_strided_slice %182 {offsets = [0, 16], sizes = [16, 8], strides = [1, 1]} : vector<16x32xf32> to vector<16x8xf32>
    %186 = vector.extract_strided_slice %182 {offsets = [0, 24], sizes = [16, 8], strides = [1, 1]} : vector<16x32xf32> to vector<16x8xf32>
    %187 = vector.shape_cast %183 : vector<16x8xf32> to vector<1x16x8xf32>
    %188 = vector.shape_cast %184 : vector<16x8xf32> to vector<1x16x8xf32>
    %189 = vector.shape_cast %185 : vector<16x8xf32> to vector<1x16x8xf32>
    %190 = vector.shape_cast %186 : vector<16x8xf32> to vector<1x16x8xf32>
    %191 = tpu.concatenate %187, %188, %189, %190 in 0 : vector<1x16x8xf32>, vector<1x16x8xf32>, vector<1x16x8xf32>, vector<1x16x8xf32> -> vector<4x16x8xf32>
    %192 = vector.shape_cast %191 : vector<4x16x8xf32> to vector<8x8x8xf32>
    %193 = vector.extract_strided_slice %170 {offsets = [0, 64], sizes = [16, 32], strides = [1, 1]} : vector<16x96xf32> to vector<16x32xf32>
    %194 = vector.extract_strided_slice %193 {offsets = [0, 0], sizes = [16, 8], strides = [1, 1]} : vector<16x32xf32> to vector<16x8xf32>
    %195 = vector.extract_strided_slice %193 {offsets = [0, 8], sizes = [16, 8], strides = [1, 1]} : vector<16x32xf32> to vector<16x8xf32>
    %196 = vector.extract_strided_slice %193 {offsets = [0, 16], sizes = [16, 8], strides = [1, 1]} : vector<16x32xf32> to vector<16x8xf32>
    %197 = vector.extract_strided_slice %193 {offsets = [0, 24], sizes = [16, 8], strides = [1, 1]} : vector<16x32xf32> to vector<16x8xf32>
    %198 = vector.shape_cast %194 : vector<16x8xf32> to vector<1x16x8xf32>
    %199 = vector.shape_cast %195 : vector<16x8xf32> to vector<1x16x8xf32>
    %200 = vector.shape_cast %196 : vector<16x8xf32> to vector<1x16x8xf32>
    %201 = vector.shape_cast %197 : vector<16x8xf32> to vector<1x16x8xf32>
    %202 = tpu.concatenate %198, %199, %200, %201 in 0 : vector<1x16x8xf32>, vector<1x16x8xf32>, vector<1x16x8xf32>, vector<1x16x8xf32> -> vector<4x16x8xf32>
    %203 = vector.shape_cast %202 : vector<4x16x8xf32> to vector<8x8x8xf32>
    "tpu.trace_start"() <{level = 10 : i32, message = "nqd,nkd->nqk"}> : () -> ()
    %cst_46 = arith.constant dense<0.000000e+00> : vector<8x8x8xf32>
    %204 = tpu.matmul %181, %192, %cst_46 {dimension_numbers = #tpu.dot_dimension_numbers<[2], [2], [1], [1], [0, 0, 0, 1, 1, 1], [0], [0]>} : vector<8x8x8xf32>, vector<8x8x8xf32>, vector<8x8x8xf32> -> vector<8x8x8xf32>
    "tpu.trace_stop"() : () -> ()
    %cst_47 = arith.constant dense<0xFF800000> : vector<8x8xf32>
    %205 = vector.multi_reduction <maximumf>, %204, %cst_47 [2] : vector<8x8x8xf32> to vector<8x8xf32>
    %206 = vector.shape_cast %205 : vector<8x8xf32> to vector<8x8x1xf32>
    %207 = vector.broadcast %206 : vector<8x8x1xf32> to vector<8x8x8xf32>
    %208 = arith.subf %204, %207 : vector<8x8x8xf32>
    %209 = math.exp %208 : vector<8x8x8xf32>
    %cst_48 = arith.constant dense<0.000000e+00> : vector<8x8xf32>
    %210 = vector.multi_reduction <add>, %209, %cst_48 [2] : vector<8x8x8xf32> to vector<8x8xf32>
    %211 = vector.shape_cast %210 : vector<8x8xf32> to vector<8x8x1xf32>
    %212 = tpu.reciprocal %211 : vector<8x8x1xf32> -> vector<8x8x1xf32>
    %213 = vector.broadcast %212 : vector<8x8x1xf32> to vector<8x8x8xf32>
    %214 = arith.mulf %209, %213 : vector<8x8x8xf32>
    "tpu.trace_start"() <{level = 10 : i32, message = "nqk,nkd->nqd"}> : () -> ()
    %cst_49 = arith.constant dense<0.000000e+00> : vector<8x8x8xf32>
    %215 = tpu.matmul %214, %203, %cst_49 {dimension_numbers = #tpu.dot_dimension_numbers<[2], [1], [1], [2], [0, 0, 0, 1, 1, 2], [0], [0]>} : vector<8x8x8xf32>, vector<8x8x8xf32>, vector<8x8x8xf32> -> vector<8x8x8xf32>
    "tpu.trace_stop"() : () -> ()
    %216 = vector.shape_cast %215 : vector<8x8x8xf32> to vector<4x16x8xf32>
    "tpu.trace_start"() <{level = 10 : i32, message = "hnd,hde->hne"}> : () -> ()
    %cst_50 = arith.constant dense<0.000000e+00> : vector<4x16x32xf32>
    %217 = tpu.matmul %216, %134, %cst_50 {dimension_numbers = #tpu.dot_dimension_numbers<[2], [1], [1], [2], [0, 0, 0, 1, 1, 2], [0], [0]>} : vector<4x16x8xf32>, vector<4x8x32xf32>, vector<4x16x32xf32> -> vector<4x16x32xf32>
    "tpu.trace_stop"() : () -> ()
    %cst_51 = arith.constant dense<0.000000e+00> : vector<16x32xf32>
    %218 = vector.multi_reduction <add>, %217, %cst_51 [0] : vector<4x16x32xf32> to vector<16x32xf32>
    %219 = arith.addf %127, %218 : vector<16x32xf32>
    %220 = vector.broadcast %143 : vector<1x32xf32> to vector<16x32xf32>
    %221 = arith.addf %219, %220 : vector<16x32xf32>
    %cst_52 = arith.constant dense<0.000000e+00> : vector<16xf32>
    %222 = vector.multi_reduction <add>, %221, %cst_52 [1] : vector<16x32xf32> to vector<16xf32>
    %223 = vector.shape_cast %222 : vector<16xf32> to vector<16x1xf32>
    %cst_53 = arith.constant 3.200000e+01 : f32
    %224 = vector.broadcast %cst_53 : f32 to vector<16x1xf32>
    %225 = arith.divf %223, %224 : vector<16x1xf32>
    %226 = vector.broadcast %225 : vector<16x1xf32> to vector<16x32xf32>
    %227 = arith.subf %221, %226 : vector<16x32xf32>
    %228 = arith.mulf %227, %227 : vector<16x32xf32>
    %cst_54 = arith.constant dense<0.000000e+00> : vector<16xf32>
    %229 = vector.multi_reduction <add>, %228, %cst_54 [1] : vector<16x32xf32> to vector<16xf32>
    %230 = vector.shape_cast %229 : vector<16xf32> to vector<16x1xf32>
    %cst_55 = arith.constant 3.200000e+01 : f32
    %231 = vector.broadcast %cst_55 : f32 to vector<16x1xf32>
    %232 = arith.divf %230, %231 : vector<16x1xf32>
    %233 = vector.broadcast %225 : vector<16x1xf32> to vector<16x32xf32>
    %234 = arith.subf %221, %233 : vector<16x32xf32>
    %cst_56 = arith.constant 9.99999974E-6 : f32
    %235 = vector.broadcast %cst_56 : f32 to vector<16x1xf32>
    %236 = arith.addf %232, %235 : vector<16x1xf32>
    %237 = math.rsqrt %236 : vector<16x1xf32>
    %238 = vector.broadcast %237 : vector<16x1xf32> to vector<16x32xf32>
    %239 = arith.mulf %234, %238 : vector<16x32xf32>
    %240 = vector.broadcast %140 : vector<1x32xf32> to vector<16x32xf32>
    %241 = arith.mulf %239, %240 : vector<16x32xf32>
    %242 = vector.broadcast %141 : vector<1x32xf32> to vector<16x32xf32>
    %243 = arith.addf %241, %242 : vector<16x32xf32>
    %cst_57 = arith.constant dense<0.000000e+00> : vector<16x64xf32>
    %244 = tpu.matmul %243, %135, %cst_57 {dimension_numbers = #tpu.dot_dimension_numbers<[1], [0], [0], [1], [0, 0, 1, 1], [], []>} : vector<16x32xf32>, vector<32x64xf32>, vector<16x64xf32> -> vector<16x64xf32>
    %245 = vector.broadcast %144 : vector<1x64xf32> to vector<16x64xf32>
    %246 = arith.addf %244, %245 : vector<16x64xf32>
    %cst_58 = arith.constant 0.000000e+00 : f32
    %247 = vector.broadcast %cst_58 : f32 to vector<16x64xf32>
    %248 = arith.maximumf %246, %247 : vector<16x64xf32>
    %cst_59 = arith.constant dense<0.000000e+00> : vector<16x32xf32>
    %249 = tpu.matmul %248, %137, %cst_59 {dimension_numbers = #tpu.dot_dimension_numbers<[1], [0], [0], [1], [0, 0, 1, 1], [], []>} : vector<16x64xf32>, vector<64x32xf32>, vector<16x32xf32> -> vector<16x32xf32>
    %250 = arith.addf %221, %249 : vector<16x32xf32>
    %251 = vector.broadcast %145 : vector<1x32xf32> to vector<16x32xf32>
    %252 = arith.addf %250, %251 : vector<16x32xf32>
    %253 = vector.shape_cast %252 : vector<16x32xf32> to vector<2x8x32xf32>
    %254 = vector.extract_strided_slice %253 {offsets = [0, 0, 0], sizes = [2, 1, 32], strides = [1, 1, 1]} : vector<2x8x32xf32> to vector<2x1x32xf32>
    %255 = vector.shape_cast %254 : vector<2x1x32xf32> to vector<2x32xf32>
    %256 = vector.extract_strided_slice %253 {offsets = [0, 1, 0], sizes = [2, 1, 32], strides = [1, 1, 1]} : vector<2x8x32xf32> to vector<2x1x32xf32>
    %257 = vector.shape_cast %256 : vector<2x1x32xf32> to vector<2x32xf32>
    %258 = vector.extract_strided_slice %253 {offsets = [0, 2, 0], sizes = [2, 1, 32], strides = [1, 1, 1]} : vector<2x8x32xf32> to vector<2x1x32xf32>
    %259 = vector.shape_cast %258 : vector<2x1x32xf32> to vector<2x32xf32>
    %260 = vector.extract_strided_slice %253 {offsets = [0, 3, 0], sizes = [2, 1, 32], strides = [1, 1, 1]} : vector<2x8x32xf32> to vector<2x1x32xf32>
    %261 = vector.shape_cast %260 : vector<2x1x32xf32> to vector<2x32xf32>
    %262 = vector.extract_strided_slice %253 {offsets = [0, 4, 0], sizes = [2, 1, 32], strides = [1, 1, 1]} : vector<2x8x32xf32> to vector<2x1x32xf32>
    %263 = vector.shape_cast %262 : vector<2x1x32xf32> to vector<2x32xf32>
    %264 = vector.extract_strided_slice %253 {offsets = [0, 5, 0], sizes = [2, 1, 32], strides = [1, 1, 1]} : vector<2x8x32xf32> to vector<2x1x32xf32>
    %265 = vector.shape_cast %264 : vector<2x1x32xf32> to vector<2x32xf32>
    %266 = vector.extract_strided_slice %253 {offsets = [0, 6, 0], sizes = [2, 1, 32], strides = [1, 1, 1]} : vector<2x8x32xf32> to vector<2x1x32xf32>
    %267 = vector.shape_cast %266 : vector<2x1x32xf32> to vector<2x32xf32>
    %268 = vector.extract_strided_slice %253 {offsets = [0, 7, 0], sizes = [2, 1, 32], strides = [1, 1, 1]} : vector<2x8x32xf32> to vector<2x1x32xf32>
    %269 = vector.shape_cast %268 : vector<2x1x32xf32> to vector<2x32xf32>
    %270 = vector.shape_cast %255 : vector<2x32xf32> to vector<1x2x32xf32>
    %271 = vector.shape_cast %257 : vector<2x32xf32> to vector<1x2x32xf32>
    %272 = vector.shape_cast %259 : vector<2x32xf32> to vector<1x2x32xf32>
    %273 = vector.shape_cast %261 : vector<2x32xf32> to vector<1x2x32xf32>
    %274 = vector.shape_cast %263 : vector<2x32xf32> to vector<1x2x32xf32>
    %275 = vector.shape_cast %265 : vector<2x32xf32> to vector<1x2x32xf32>
    %276 = vector.shape_cast %267 : vector<2x32xf32> to vector<1x2x32xf32>
    %277 = vector.shape_cast %269 : vector<2x32xf32> to vector<1x2x32xf32>
    %278 = tpu.concatenate %270, %271, %272, %273, %274, %275, %276, %277 in 0 : vector<1x2x32xf32>, vector<1x2x32xf32>, vector<1x2x32xf32>, vector<1x2x32xf32>, vector<1x2x32xf32>, vector<1x2x32xf32>, vector<1x2x32xf32>, vector<1x2x32xf32> -> vector<8x2x32xf32>
    %c0_60 = arith.constant 0 : index
    %c0_61 = arith.constant 0 : index
    %c0_62 = arith.constant 0 : index
    %279 = vector.load %arg5[%c0_60, %c0_61, %c0_62] : memref<8x32x3xf32, #tpu.memory_space<vmem>>, vector<8x32x3xf32>
    "tpu.trace_start"() <{level = 10 : i32, message = "sbd,sdo->sbo"}> : () -> ()
    %cst_63 = arith.constant dense<0.000000e+00> : vector<8x2x3xf32>
    %280 = tpu.matmul %278, %279, %cst_63 {dimension_numbers = #tpu.dot_dimension_numbers<[2], [1], [1], [2], [0, 0, 0, 1, 1, 2], [0], [0]>} : vector<8x2x32xf32>, vector<8x32x3xf32>, vector<8x2x3xf32> -> vector<8x2x3xf32>
    "tpu.trace_stop"() : () -> ()
    %cst_64 = arith.constant dense<0.000000e+00> : vector<2x3xf32>
    %281 = vector.multi_reduction <add>, %280, %cst_64 [0] : vector<8x2x3xf32> to vector<2x3xf32>
    %c0_65 = arith.constant 0 : index
    %c0_66 = arith.constant 0 : index
    %282 = vector.load %arg6[%c0_65, %c0_66] : memref<1x3xf32, #tpu.memory_space<vmem>>, vector<1x3xf32>
    %283 = vector.broadcast %282 : vector<1x3xf32> to vector<2x3xf32>
    %284 = arith.addf %281, %283 : vector<2x3xf32>
    %c0_67 = arith.constant 0 : index
    %c0_68 = arith.constant 0 : index
    %285 = vector.load %arg7[%c0_67, %c0_68] : memref<2x3xf32, #tpu.memory_space<vmem>>, vector<2x3xf32>
    tpu.vector_store %arg7[%c0_67, %c0_68], %284 {strides = array<i32>} : memref<2x3xf32, #tpu.memory_space<vmem>>, vector<2x3xf32>,
    return
  }
}

</mosaic_0001>

<llo_original>
// kernel: mul.12
$region0: #{mul.12}
  #allocation0 [shape = 's32[1]{0}', space=sflag, size = 0x4, scoped, tag = 'scoped memory for mul.12']
  %s0 = inlined_call_operand.vmem [shape: f32[4,4], index: 0, kind: input, shape index: {}]
  %s1 = inlined_call_operand.vmem [shape: f32[2,4,4], index: 1, kind: output, shape index: {}]
  // Predicated region
  $region2: #{mul.12} parent=0 // pred_check
    _
  $region3: #{mul.12} parent=0 // pred_check_branch
    %3 = sbr.rel (0) target = $region5
  $region4: #{mul.12} parent=0 // pred_region
    _
  $region5: #{mul.12} parent=0 // pred_fallthru
    _
  %v4 = vld [vmem:[%s0] sm:$0xf]
  %5 = vst [vmem:[%s1] sm:$0xf] %v4
  %s6 = scalar_lea.vmem %s1, 4
  %7 = vst [vmem:[%s6] sm:$0xf] %v4

// kernel: tabular_transformer_forward.1
$region0: #{tabular_transformer_forward.1}
  #allocation0 [shape = 'u32[]', space=smem, size = 0x4, offset = 0x4, fixed_abs, tag = 'smem constant byte address 0x4 - core index']
  #allocation1 [shape = 'u32[144,128]{1,0:T(1,128)}', space=vmem, size = 0x12000, scoped, tag = 'internal scratch']
  %s0 = inlined_call_operand.vmem [shape: f32[16,32], index: 0, kind: input, shape index: {}]
  %s1 = inlined_call_operand.vmem [shape: f32[32,32], index: 1, kind: input, shape index: {}]
  %s2 = inlined_call_operand.vmem [shape: f32[2,32,192], index: 2, kind: input, shape index: {}]
  %s3 = inlined_call_operand.vmem [shape: f32[2,64,32], index: 3, kind: input, shape index: {}]
  %s4 = inlined_call_operand.vmem [shape: f32[2,3,128], index: 4, kind: input, shape index: {}]
  %s5 = inlined_call_operand.vmem [shape: f32[8,32,3], index: 5, kind: input, shape index: {}]
  %s6 = inlined_call_operand.vmem [shape: f32[1,3], index: 6, kind: input, shape index: {}]
  %s7 = inlined_call_operand.hbm [shape: f32[2,3], index: 7, kind: output, shape index: {}]
  %s8 = sld [smem:[#allocation0]]
  $region38: #{tabular_transformer_forward.1} parent=0
    _
  %s10 = ssub.s32 1, %s8
  %s11 = scalar_select 0, %s10, %s8
  $region1: #{tabular_transformer_forward.1} parent=0
    #allocation2 [shape = 'u8[1024]{0}', space=vmem, size = 0x400, scoped, tag = 'output window, operand 0, single buffered']
    #allocation3 [shape = 's32[1]{0}', space=sflag, size = 0x4, scoped, tag = 'scoped memory for tabular_transformer_forward.1']
    %12 = vsyncpa [#allocation3], 0
    // Predicated region
    $region2: #{tabular_transformer_forward.1} parent=1 // pred_check
      _
    $region3: #{tabular_transformer_forward.1} parent=1 // pred_check_branch
      %14 = sbr.rel (0) target = $region5
    $region4: #{tabular_transformer_forward.1} parent=1 // pred_region
      _
    $region5: #{tabular_transformer_forward.1} parent=1 // pred_fallthru
      _
    // Predicated region
    $region6: #{tabular_transformer_forward.1} parent=1 // pred_check
      _
    $region7: #{tabular_transformer_forward.1} parent=1 // pred_check_branch
      %16 = sbr.rel (0) target = $region9
    $region8: #{tabular_transformer_forward.1} parent=1 // pred_region
      _
    $region9: #{tabular_transformer_forward.1} parent=1 // pred_fallthru
      _
    // Predicated region
    $region10: #{tabular_transformer_forward.1} parent=1 // pred_check
      _
    $region11: #{tabular_transformer_forward.1} parent=1 // pred_check_branch
      %18 = sbr.rel (0) target = $region13
    $region12: #{tabular_transformer_forward.1} parent=1 // pred_region
      _
    $region13: #{tabular_transformer_forward.1} parent=1 // pred_fallthru
      _
    // Predicated region
    $region14: #{tabular_transformer_forward.1} parent=1 // pred_check
      _
    $region15: #{tabular_transformer_forward.1} parent=1 // pred_check_branch
      %20 = sbr.rel (0) target = $region17
    $region16: #{tabular_transformer_forward.1} parent=1 // pred_region
      _
    $region17: #{tabular_transformer_forward.1} parent=1 // pred_fallthru
      _
    // Predicated region
    $region18: #{tabular_transformer_forward.1} parent=1 // pred_check
      _
    $region19: #{tabular_transformer_forward.1} parent=1 // pred_check_branch
      %22 = sbr.rel (0) target = $region21
    $region20: #{tabular_transformer_forward.1} parent=1 // pred_region
      _
    $region21: #{tabular_transformer_forward.1} parent=1 // pred_fallthru
      _
    // Predicated region
    $region22: #{tabular_transformer_forward.1} parent=1 // pred_check
      _
    $region23: #{tabular_transformer_forward.1} parent=1 // pred_check_branch
      %24 = sbr.rel (0) target = $region25
    $region24: #{tabular_transformer_forward.1} parent=1 // pred_region
      _
    $region25: #{tabular_transformer_forward.1} parent=1 // pred_fallthru
      _
    // Predicated region
    $region26: #{tabular_transformer_forward.1} parent=1 // pred_check
      _
    $region27: #{tabular_transformer_forward.1} parent=1 // pred_check_branch
      %26 = sbr.rel (0) target = $region29
    $region28: #{tabular_transformer_forward.1} parent=1 // pred_region
      _
    $region29: #{tabular_transformer_forward.1} parent=1 // pred_fallthru
      _
    %v27 = vld [vmem:[%s0] sm:$0xff]
    %v28 = vld [vmem:[%s0 + $0x8] sm:$0xff]
    %v29 = vld [vmem:[%s1] sm:$0xff]
    %v30 = vld [vmem:[%s1 + $0x8] sm:$0xff]
    %v31 = vld [vmem:[%s1 + $0x10] sm:$0xff]
    %v32 = vld [vmem:[%s1 + $0x18] sm:$0xff]
    %vm33 = vcmask 261120
    %v35 = vsel %vm33, %v27, 0
    %v38 = vsel %vm33, %v28, 0
    %40 = vmatprep.subr.mxu0 0.0
    %41 = vmatpush1.msra.mxu0 %v29
    %42 = vmatprep.subr.mxu0 0.0
    %43 = vmatpush1.msra.mxu0 %v30
    %44 = vmatprep.subr.mxu0 0.0
    %45 = vmatpush1.msra.mxu0 %v31
    %46 = vmatprep.subr.mxu0 0.0
    %47 = vmatpush1.msra.mxu0 %v32
    %48 = vmatprep.subr.mxu0 0.0
    %49 = vmatpush1.msra.mxu0 0.0
    %50 = vmatprep.subr.mxu0 0.0
    %51 = vmatpush1.msra.mxu0 0.0
    %52 = vmatprep.subr.mxu0 0.0
    %53 = vmatpush1.msra.mxu0 0.0
    %54 = vmatprep.subr.mxu0 0.0
    %55 = vmatpush1.msra.mxu0 0.0
    %56 = vmatprep.subr.mxu0 0.0
    %57 = vmatpush1.msra.mxu0 0.0
    %58 = vmatprep.subr.mxu0 0.0
    %59 = vmatpush1.msra.mxu0 0.0
    %60 = vmatprep.subr.mxu0 0.0
    %61 = vmatpush1.msra.mxu0 0.0
    %62 = vmatprep.subr.mxu0 0.0
    %63 = vmatpush1.msra.mxu0 0.0
    %64 = vmatprep.subr.mxu0 0.0
    %65 = vmatpush1.msra.mxu0 0.0
    %66 = vmatprep.subr.mxu0 0.0
    %67 = vmatpush1.msra.mxu0 0.0
    %68 = vmatprep.subr.mxu0 0.0
    %69 = vmatpush1.msra.mxu0 0.0
    %70 = vmatprep.subr.mxu0 0.0
    %71 = vmatpush1.msra.mxu0 0.0
    %72 = vmatprep.subr.mxu0 0.0
    %73 = vmatpush1.msra.mxu0 0.0
    %74 = vmatprep.subr.mxu0 0.0
    %75 = vmatpush1.msra.mxu0 0.0
    %76 = vmatprep.subr.mxu0 0.0
    %77 = vmatpush1.msra.mxu0 0.0
    %78 = vmatprep.subr.mxu0 0.0
    %79 = vmatpush1.msra.mxu0 0.0
    %80 = vmatprep.subr.mxu0 0.0
    %81 = vmatpush1.msra.mxu0 0.0
    %82 = vmatprep.subr.mxu0 0.0
    %83 = vmatpush1.msra.mxu0 0.0
    %84 = vmatprep.subr.mxu0 0.0
    %85 = vmatpush1.msra.mxu0 0.0
    %86 = vmatprep.subr.mxu0 0.0
    %87 = vmatpush1.msra.mxu0 0.0
    %88 = vmatprep.subr.mxu0 0.0
    %89 = vmatpush1.msra.mxu0 0.0
    %90 = vmatprep.subr.mxu0 0.0
    %91 = vmatpush1.msra.mxu0 0.0
    %92 = vmatprep.subr.mxu0 0.0
    %93 = vmatpush1.msra.mxu0 0.0
    %94 = vmatprep.subr.mxu0 0.0
    %95 = vmatpush1.msra.mxu0 0.0
    %96 = vmatprep.subr.mxu0 0.0
    %97 = vmatpush1.msra.mxu0 0.0
    %98 = vmatprep.subr.mxu0 0.0
    %99 = vmatpush1.msra.mxu0 0.0
    %100 = vmatprep.subr.mxu0 0.0
    %101 = vmatpush1.msra.mxu0 0.0
    %102 = vmatprep.subr.mxu0 0.0
    %103 = vmatpush1.msra.mxu0 0.0
    %104 = vmatprep.mubr.f32.mxu0 0.0
    %105 = vmatmul.mubr.f32.gmra.mrb[0].mxu0 %v35
    %v106 = vpop.f32.mrb[0].mxu0
    %v107 = vadd.f32 0.0, %v106
    %v108 = vpop.f32.mrb[0].mxu0
    %109 = vmatprep.mubr.f32.mxu0 0.0
    %110 = vmatmul.mubr.f32.gmra.mrb[0].mxu0 %v38
    %v111 = vpop.f32.mrb[0].mxu0
    %v112 = vadd.f32 0.0, %v111
    %v113 = vpop.f32.mrb[0].mxu0
    %114 = vdwg.mxu0
    %v115 = vld [vmem:[%s2] sm:$0xff]
    %v116 = vld [vmem:[%s2 + $0x8] sm:$0xff]
    %v117 = vld [vmem:[%s2 + $0x10] sm:$0xff]
    %v118 = vld [vmem:[%s2 + $0x18] sm:$0xff]
    %v119 = vld [vmem:[%s2 + $0x20] sm:$0xff]
    %v120 = vld [vmem:[%s2 + $0x28] sm:$0xff]
    %v121 = vld [vmem:[%s2 + $0x30] sm:$0xff]
    %v122 = vld [vmem:[%s2 + $0x38] sm:$0xff]
    %v123 = vld [vmem:[%s4] sm:$0x7]
    %v124 = vld [vmem:[%s3] sm:$0xff]
    %v125 = vld [vmem:[%s3 + $0x8] sm:$0xff]
    %v126 = vld [vmem:[%s3 + $0x10] sm:$0xff]
    %v127 = vld [vmem:[%s3 + $0x18] sm:$0xff]
    %v128 = vld [vmem:[%s3 + $0x20] sm:$0xff]
    %v129 = vld [vmem:[%s3 + $0x28] sm:$0xff]
    %v130 = vld [vmem:[%s3 + $0x30] sm:$0xff]
    %v131 = vld [vmem:[%s3 + $0x38] sm:$0xff]
    %v132 = vsel %vm33, %v107, 0.0
    %133 = vadd.xlane.f32.xlu0 %v132
    %v134 = vpop.xlane.xlu0 %133
    %v135 = vsel %vm33, %v112, 0.0
    %136 = vadd.xlane.f32.xlu0 %v135
    %v137 = vpop.xlane.xlu0 %136
    %v138 = vrcp.pop 32.0
    %v139 = vmul.f32 %v134, %v138
    %v140 = vmul.f32 %v137, %v138
    %v141 = vsub.f32 %v107, %v139
    %v142 = vsub.f32 %v112, %v140
    %v143 = vmul.f32 %v141, %v141
    %v144 = vmul.f32 %v142, %v142
    %v145 = vsel %vm33, %v143, 0.0
    %146 = vadd.xlane.f32.xlu0 %v145
    %v147 = vpop.xlane.xlu0 %146
    %v148 = vsel %vm33, %v144, 0.0
    %149 = vadd.xlane.f32.xlu0 %v148
    %v150 = vpop.xlane.xlu0 %149
    %v151 = vmul.f32 %v147, %v138
    %v152 = vmul.f32 %v150, %v138
    %v153 = vadd.f32 %v151, 1e-05
    %v154 = vadd.f32 %v152, 1e-05
    %v155 = vrsqrt.pop %v153
    %v156 = vrsqrt.pop %v154
    %v157 = vmul.f32 %v141, %v155
    %v158 = vmul.f32 %v142, %v156
    %v159 = vlaneseq
    %v160 = vshrl.u32 %v159, 7
    %v161 = vsub.s32 0, %v160
    %v162 = vrot.slane %v123, %v161
    %v163 = vmul.f32 %v157, %v162
    %v164 = vmul.f32 %v158, %v162
    %166 = vrot.lane.b32.xlu0 %v162, 96
    %v167 = vpop.permute.xlu0 %166
    %v169 = vadd.f32 %v163, %v167
    %v170 = vadd.f32 %v164, %v167
    %v171 = vlaneseq
    %v172 = vshrl.u32 %v171, 7
    %v173 = vsub.s32 1, %v172
    %v174 = vrot.slane %v123, %v173
    %v176 = vsel %vm33, %v169, 0
    %v179 = vsel %vm33, %v170, 0
    %181 = vmatprep.subr.mxu0 0.0
    %182 = vmatpush1.msra.mxu0 %v115
    %183 = vmatprep.subr.mxu0 0.0
    %184 = vmatpush1.msra.mxu0 %v117
    %185 = vmatprep.subr.mxu0 0.0
    %186 = vmatpush1.msra.mxu0 %v119
    %187 = vmatprep.subr.mxu0 0.0
    %188 = vmatpush1.msra.mxu0 %v121
    %189 = vmatprep.subr.mxu0 0.0
    %190 = vmatpush1.msra.mxu0 0.0
    %191 = vmatprep.subr.mxu0 0.0
    %192 = vmatpush1.msra.mxu0 0.0
    %193 = vmatprep.subr.mxu0 0.0
    %194 = vmatpush1.msra.mxu0 0.0
    %195 = vmatprep.subr.mxu0 0.0
    %196 = vmatpush1.msra.mxu0 0.0
    %197 = vmatprep.subr.mxu0 0.0
    %198 = vmatpush1.msra.mxu0 0.0
    %199 = vmatprep.subr.mxu0 0.0
    %200 = vmatpush1.msra.mxu0 0.0
    %201 = vmatprep.subr.mxu0 0.0
    %202 = vmatpush1.msra.mxu0 0.0
    %203 = vmatprep.subr.mxu0 0.0
    %204 = vmatpush1.msra.mxu0 0.0
    %205 = vmatprep.subr.mxu0 0.0
    %206 = vmatpush1.msra.mxu0 0.0
    %207 = vmatprep.subr.mxu0 0.0
    %208 = vmatpush1.msra.mxu0 0.0
    %209 = vmatprep.subr.mxu0 0.0
    %210 = vmatpush1.msra.mxu0 0.0
    %211 = vmatprep.subr.mxu0 0.0
    %212 = vmatpush1.msra.mxu0 0.0
    %213 = vmatprep.subr.mxu0 0.0
    %214 = vmatpush1.msra.mxu0 0.0
    %215 = vmatprep.subr.mxu0 0.0
    %216 = vmatpush1.msra.mxu0 0.0
    %217 = vmatprep.subr.mxu0 0.0
    %218 = vmatpush1.msra.mxu0 0.0
    %219 = vmatprep.subr.mxu0 0.0
    %220 = vmatpush1.msra.mxu0 0.0
    %221 = vmatprep.subr.mxu0 0.0
    %222 = vmatpush1.msra.mxu0 0.0
    %223 = vmatprep.subr.mxu0 0.0
    %224 = vmatpush1.msra.mxu0 0.0
    %225 = vmatprep.subr.mxu0 0.0
    %226 = vmatpush1.msra.mxu0 0.0
    %227 = vmatprep.subr.mxu0 0.0
    %228 = vmatpush1.msra.mxu0 0.0
    %229 = vmatprep.subr.mxu0 0.0
    %230 = vmatpush1.msra.mxu0 0.0
    %231 = vmatprep.subr.mxu0 0.0
    %232 = vmatpush1.msra.mxu0 0.0
    %233 = vmatprep.subr.mxu0 0.0
    %234 = vmatpush1.msra.mxu0 0.0
    %235 = vmatprep.subr.mxu0 0.0
    %236 = vmatpush1.msra.mxu0 0.0
    %237 = vmatprep.subr.mxu0 0.0
    %238 = vmatpush1.msra.mxu0 0.0
    %239 = vmatprep.subr.mxu0 0.0
    %240 = vmatpush1.msra.mxu0 0.0
    %241 = vmatprep.subr.mxu0 0.0
    %242 = vmatpush1.msra.mxu0 0.0
    %243 = vmatprep.subr.mxu0 0.0
    %244 = vmatpush1.msra.mxu0 0.0
    %245 = vmatprep.mubr.f32.mxu0 0.0
    %246 = vmatmul.mubr.f32.gmra.mrb[0].mxu0 %v176
    %v247 = vpop.f32.mrb[0].mxu0
    %v248 = vadd.f32 %v174, %v247
    %v249 = vpop.f32.mrb[0].mxu0
    %250 = vmatprep.mubr.f32.mxu0 0.0
    %251 = vmatmul.mubr.f32.gmra.mrb[0].mxu0 %v179
    %v252 = vpop.f32.mrb[0].mxu0
    %v253 = vadd.f32 %v174, %v252
    %v254 = vpop.f32.mrb[0].mxu0
    %255 = vdwg.mxu0
    %258 = vrot.lane.b32.xlu0 %v248, 120
    %v259 = vpop.permute.xlu0 %258
    %260 = vrot.lane.b32.xlu0 %v253, 120
    %v261 = vpop.permute.xlu0 %260
    %262 = vrot.lane.b32.xlu0 %v248, 112
    %v263 = vpop.permute.xlu0 %262
    %264 = vrot.lane.b32.xlu0 %v253, 112
    %v265 = vpop.permute.xlu0 %264
    %266 = vrot.lane.b32.xlu0 %v248, 104
    %v267 = vpop.permute.xlu0 %266
    %268 = vrot.lane.b32.xlu0 %v253, 104
    %v269 = vpop.permute.xlu0 %268
    %270 = vrot.lane.b32.xlu0 %v248, 96
    %v271 = vpop.permute.xlu0 %270
    %vm272 = vcmask 64512
    %v273 = vsel %vm272, %v248, 0
    %v275 = vsel %vm272, %v271, 0
    %277 = vmatprep.subr.mxu0 0.0
    %278 = vmatpush1.xpose.msra.mxu0 %v275
    %279 = vmatprep.subr.mxu0 0.0
    %280 = vmatpush1.xpose.msra.mxu0 0.0
    %281 = vmatprep.subr.mxu0 0.0
    %282 = vmatpush1.xpose.msra.mxu0 0.0
    %283 = vmatprep.subr.mxu0 0.0
    %284 = vmatpush1.xpose.msra.mxu0 0.0
    %285 = vmatprep.subr.mxu0 0.0
    %286 = vmatpush1.xpose.msra.mxu0 0.0
    %287 = vmatprep.subr.mxu0 0.0
    %288 = vmatpush1.xpose.msra.mxu0 0.0
    %289 = vmatprep.subr.mxu0 0.0
    %290 = vmatpush1.xpose.msra.mxu0 0.0
    %291 = vmatprep.subr.mxu0 0.0
    %292 = vmatpush1.xpose.msra.mxu0 0.0
    %293 = vmatprep.subr.mxu0 0.0
    %294 = vmatpush1.xpose.msra.mxu0 0.0
    %295 = vmatprep.subr.mxu0 0.0
    %296 = vmatpush1.xpose.msra.mxu0 0.0
    %297 = vmatprep.subr.mxu0 0.0
    %298 = vmatpush1.xpose.msra.mxu0 0.0
    %299 = vmatprep.subr.mxu0 0.0
    %300 = vmatpush1.xpose.msra.mxu0 0.0
    %301 = vmatprep.subr.mxu0 0.0
    %302 = vmatpush1.xpose.msra.mxu0 0.0
    %303 = vmatprep.subr.mxu0 0.0
    %304 = vmatpush1.xpose.msra.mxu0 0.0
    %305 = vmatprep.subr.mxu0 0.0
    %306 = vmatpush1.xpose.msra.mxu0 0.0
    %307 = vmatprep.subr.mxu0 0.0
    %308 = vmatpush1.xpose.msra.mxu0 0.0
    %309 = vmatprep.subr.mxu0 0.0
    %310 = vmatpush1.xpose.msra.mxu0 0.0
    %311 = vmatprep.subr.mxu0 0.0
    %312 = vmatpush1.xpose.msra.mxu0 0.0
    %313 = vmatprep.subr.mxu0 0.0
    %314 = vmatpush1.xpose.msra.mxu0 0.0
    %315 = vmatprep.subr.mxu0 0.0
    %316 = vmatpush1.xpose.msra.mxu0 0.0
    %317 = vmatprep.subr.mxu0 0.0
    %318 = vmatpush1.xpose.msra.mxu0 0.0
    %319 = vmatprep.subr.mxu0 0.0
    %320 = vmatpush1.xpose.msra.mxu0 0.0
    %321 = vmatprep.subr.mxu0 0.0
    %322 = vmatpush1.xpose.msra.mxu0 0.0
    %323 = vmatprep.subr.mxu0 0.0
    %324 = vmatpush1.xpose.msra.mxu0 0.0
    %325 = vmatprep.subr.mxu0 0.0
    %326 = vmatpush1.xpose.msra.mxu0 0.0
    %327 = vmatprep.subr.mxu0 0.0
    %328 = vmatpush1.xpose.msra.mxu0 0.0
    %329 = vmatprep.subr.mxu0 0.0
    %330 = vmatpush1.xpose.msra.mxu0 0.0
    %331 = vmatprep.subr.mxu0 0.0
    %332 = vmatpush1.xpose.msra.mxu0 0.0
    %333 = vmatprep.subr.mxu0 0.0
    %334 = vmatpush1.xpose.msra.mxu0 0.0
    %335 = vmatprep.subr.mxu0 0.0
    %336 = vmatpush1.xpose.msra.mxu0 0.0
    %337 = vmatprep.subr.mxu0 0.0
    %338 = vmatpush1.xpose.msra.mxu0 0.0
    %339 = vmatprep.subr.mxu0 0.0
    %340 = vmatpush1.xpose.msra.mxu0 0.0
    %341 = vmatprep.mubr.f32.mxu0 0.0
    %342 = vmatmul.mubr.f32.gmra.mrb[0].mxu0 %v273
    %v343 = vpop.f32.mrb[0].mxu0
    %v344 = vadd.f32 0.0, %v343
    %v345 = vpop.f32.mrb[0].mxu0
    %346 = vdwg.mxu0
    %347 = vrot.lane.b32.xlu0 %v253, 96
    %v348 = vpop.permute.xlu0 %347
    %v349 = vsel %vm272, %v253, 0
    %v351 = vsel %vm272, %v348, 0
    %353 = vmatprep.subr.mxu0 0.0
    %354 = vmatpush1.xpose.msra.mxu0 %v351
    %355 = vmatprep.subr.mxu0 0.0
    %356 = vmatpush1.xpose.msra.mxu0 0.0
    %357 = vmatprep.subr.mxu0 0.0
    %358 = vmatpush1.xpose.msra.mxu0 0.0
    %359 = vmatprep.subr.mxu0 0.0
    %360 = vmatpush1.xpose.msra.mxu0 0.0
    %361 = vmatprep.subr.mxu0 0.0
    %362 = vmatpush1.xpose.msra.mxu0 0.0
    %363 = vmatprep.subr.mxu0 0.0
    %364 = vmatpush1.xpose.msra.mxu0 0.0
    %365 = vmatprep.subr.mxu0 0.0
    %366 = vmatpush1.xpose.msra.mxu0 0.0
    %367 = vmatprep.subr.mxu0 0.0
    %368 = vmatpush1.xpose.msra.mxu0 0.0
    %369 = vmatprep.subr.mxu0 0.0
    %370 = vmatpush1.xpose.msra.mxu0 0.0
    %371 = vmatprep.subr.mxu0 0.0
    %372 = vmatpush1.xpose.msra.mxu0 0.0
    %373 = vmatprep.subr.mxu0 0.0
    %374 = vmatpush1.xpose.msra.mxu0 0.0
    %375 = vmatprep.subr.mxu0 0.0
    %376 = vmatpush1.xpose.msra.mxu0 0.0
    %377 = vmatprep.subr.mxu0 0.0
    %378 = vmatpush1.xpose.msra.mxu0 0.0
    %379 = vmatprep.subr.mxu0 0.0
    %380 = vmatpush1.xpose.msra.mxu0 0.0
    %381 = vmatprep.subr.mxu0 0.0
    %382 = vmatpush1.xpose.msra.mxu0 0.0
    %383 = vmatprep.subr.mxu0 0.0
    %384 = vmatpush1.xpose.msra.mxu0 0.0
    %385 = vmatprep.subr.mxu0 0.0
    %386 = vmatpush1.xpose.msra.mxu0 0.0
    %387 = vmatprep.subr.mxu0 0.0
    %388 = vmatpush1.xpose.msra.mxu0 0.0
    %389 = vmatprep.subr.mxu0 0.0
    %390 = vmatpush1.xpose.msra.mxu0 0.0
    %391 = vmatprep.subr.mxu0 0.0
    %392 = vmatpush1.xpose.msra.mxu0 0.0
    %393 = vmatprep.subr.mxu0 0.0
    %394 = vmatpush1.xpose.msra.mxu0 0.0
    %395 = vmatprep.subr.mxu0 0.0
    %396 = vmatpush1.xpose.msra.mxu0 0.0
    %397 = vmatprep.subr.mxu0 0.0
    %398 = vmatpush1.xpose.msra.mxu0 0.0
    %399 = vmatprep.subr.mxu0 0.0
    %400 = vmatpush1.xpose.msra.mxu0 0.0
    %401 = vmatprep.subr.mxu0 0.0
    %402 = vmatpush1.xpose.msra.mxu0 0.0
    %403 = vmatprep.subr.mxu0 0.0
    %404 = vmatpush1.xpose.msra.mxu0 0.0
    %405 = vmatprep.subr.mxu0 0.0
    %406 = vmatpush1.xpose.msra.mxu0 0.0
    %407 = vmatprep.subr.mxu0 0.0
    %408 = vmatpush1.xpose.msra.mxu0 0.0
    %409 = vmatprep.subr.mxu0 0.0
    %410 = vmatpush1.xpose.msra.mxu0 0.0
    %411 = vmatprep.subr.mxu0 0.0
    %412 = vmatpush1.xpose.msra.mxu0 0.0
    %413 = vmatprep.subr.mxu0 0.0
    %414 = vmatpush1.xpose.msra.mxu0 0.0
    %415 = vmatprep.subr.mxu0 0.0
    %416 = vmatpush1.xpose.msra.mxu0 0.0
    %417 = vmatprep.mubr.f32.mxu0 0.0
    %418 = vmatmul.mubr.f32.gmra.mrb[0].mxu0 %v349
    %v419 = vpop.f32.mrb[0].mxu0
    %v420 = vadd.f32 0.0, %v419
    %v421 = vpop.f32.mrb[0].mxu0
    %422 = vdwg.mxu0
    %423 = vrot.lane.b32.xlu0 %v259, 96
    %v424 = vpop.permute.xlu0 %423
    %v425 = vsel %vm272, %v259, 0
    %v427 = vsel %vm272, %v424, 0
    %429 = vmatprep.subr.mxu0 0.0
    %430 = vmatpush1.xpose.msra.mxu0 %v427
    %431 = vmatprep.subr.mxu0 0.0
    %432 = vmatpush1.xpose.msra.mxu0 0.0
    %433 = vmatprep.subr.mxu0 0.0
    %434 = vmatpush1.xpose.msra.mxu0 0.0
    %435 = vmatprep.subr.mxu0 0.0
    %436 = vmatpush1.xpose.msra.mxu0 0.0
    %437 = vmatprep.subr.mxu0 0.0
    %438 = vmatpush1.xpose.msra.mxu0 0.0
    %439 = vmatprep.subr.mxu0 0.0
    %440 = vmatpush1.xpose.msra.mxu0 0.0
    %441 = vmatprep.subr.mxu0 0.0
    %442 = vmatpush1.xpose.msra.mxu0 0.0
    %443 = vmatprep.subr.mxu0 0.0
    %444 = vmatpush1.xpose.msra.mxu0 0.0
    %445 = vmatprep.subr.mxu0 0.0
    %446 = vmatpush1.xpose.msra.mxu0 0.0
    %447 = vmatprep.subr.mxu0 0.0
    %448 = vmatpush1.xpose.msra.mxu0 0.0
    %449 = vmatprep.subr.mxu0 0.0
    %450 = vmatpush1.xpose.msra.mxu0 0.0
    %451 = vmatprep.subr.mxu0 0.0
    %452 = vmatpush1.xpose.msra.mxu0 0.0
    %453 = vmatprep.subr.mxu0 0.0
    %454 = vmatpush1.xpose.msra.mxu0 0.0
    %455 = vmatprep.subr.mxu0 0.0
    %456 = vmatpush1.xpose.msra.mxu0 0.0
    %457 = vmatprep.subr.mxu0 0.0
    %458 = vmatpush1.xpose.msra.mxu0 0.0
    %459 = vmatprep.subr.mxu0 0.0
    %460 = vmatpush1.xpose.msra.mxu0 0.0
    %461 = vmatprep.subr.mxu0 0.0
    %462 = vmatpush1.xpose.msra.mxu0 0.0
    %463 = vmatprep.subr.mxu0 0.0
    %464 = vmatpush1.xpose.msra.mxu0 0.0
    %465 = vmatprep.subr.mxu0 0.0
    %466 = vmatpush1.xpose.msra.mxu0 0.0
    %467 = vmatprep.subr.mxu0 0.0
    %468 = vmatpush1.xpose.msra.mxu0 0.0
    %469 = vmatprep.subr.mxu0 0.0
    %470 = vmatpush1.xpose.msra.mxu0 0.0
    %471 = vmatprep.subr.mxu0 0.0
    %472 = vmatpush1.xpose.msra.mxu0 0.0
    %473 = vmatprep.subr.mxu0 0.0
    %474 = vmatpush1.xpose.msra.mxu0 0.0
    %475 = vmatprep.subr.mxu0 0.0
    %476 = vmatpush1.xpose.msra.mxu0 0.0
    %477 = vmatprep.subr.mxu0 0.0
    %478 = vmatpush1.xpose.msra.mxu0 0.0
    %479 = vmatprep.subr.mxu0 0.0
    %480 = vmatpush1.xpose.msra.mxu0 0.0
    %481 = vmatprep.subr.mxu0 0.0
    %482 = vmatpush1.xpose.msra.mxu0 0.0
    %483 = vmatprep.subr.mxu0 0.0
    %484 = vmatpush1.xpose.msra.mxu0 0.0
    %485 = vmatprep.subr.mxu0 0.0
    %486 = vmatpush1.xpose.msra.mxu0 0.0
    %487 = vmatprep.subr.mxu0 0.0
    %488 = vmatpush1.xpose.msra.mxu0 0.0
    %489 = vmatprep.subr.mxu0 0.0
    %490 = vmatpush1.xpose.msra.mxu0 0.0
    %491 = vmatprep.subr.mxu0 0.0
    %492 = vmatpush1.xpose.msra.mxu0 0.0
    %493 = vmatprep.mubr.f32.mxu0 0.0
    %494 = vmatmul.mubr.f32.gmra.mrb[0].mxu0 %v425
    %v495 = vpop.f32.mrb[0].mxu0
    %v496 = vadd.f32 0.0, %v495
    %v497 = vpop.f32.mrb[0].mxu0
    %498 = vdwg.mxu0
    %499 = vrot.lane.b32.xlu0 %v261, 96
    %v500 = vpop.permute.xlu0 %499
    %v501 = vsel %vm272, %v261, 0
    %v503 = vsel %vm272, %v500, 0
    %505 = vmatprep.subr.mxu0 0.0
    %506 = vmatpush1.xpose.msra.mxu0 %v503
    %507 = vmatprep.subr.mxu0 0.0
    %508 = vmatpush1.xpose.msra.mxu0 0.0
    %509 = vmatprep.subr.mxu0 0.0
    %510 = vmatpush1.xpose.msra.mxu0 0.0
    %511 = vmatprep.subr.mxu0 0.0
    %512 = vmatpush1.xpose.msra.mxu0 0.0
    %513 = vmatprep.subr.mxu0 0.0
    %514 = vmatpush1.xpose.msra.mxu0 0.0
    %515 = vmatprep.subr.mxu0 0.0
    %516 = vmatpush1.xpose.msra.mxu0 0.0
    %517 = vmatprep.subr.mxu0 0.0
    %518 = vmatpush1.xpose.msra.mxu0 0.0
    %519 = vmatprep.subr.mxu0 0.0
    %520 = vmatpush1.xpose.msra.mxu0 0.0
    %521 = vmatprep.subr.mxu0 0.0
    %522 = vmatpush1.xpose.msra.mxu0 0.0
    %523 = vmatprep.subr.mxu0 0.0
    %524 = vmatpush1.xpose.msra.mxu0 0.0
    %525 = vmatprep.subr.mxu0 0.0
    %526 = vmatpush1.xpose.msra.mxu0 0.0
    %527 = vmatprep.subr.mxu0 0.0
    %528 = vmatpush1.xpose.msra.mxu0 0.0
    %529 = vmatprep.subr.mxu0 0.0
    %530 = vmatpush1.xpose.msra.mxu0 0.0
    %531 = vmatprep.subr.mxu0 0.0
    %532 = vmatpush1.xpose.msra.mxu0 0.0
    %533 = vmatprep.subr.mxu0 0.0
    %534 = vmatpush1.xpose.msra.mxu0 0.0
    %535 = vmatprep.subr.mxu0 0.0
    %536 = vmatpush1.xpose.msra.mxu0 0.0
    %537 = vmatprep.subr.mxu0 0.0
    %538 = vmatpush1.xpose.msra.mxu0 0.0
    %539 = vmatprep.subr.mxu0 0.0
    %540 = vmatpush1.xpose.msra.mxu0 0.0
    %541 = vmatprep.subr.mxu0 0.0
    %542 = vmatpush1.xpose.msra.mxu0 0.0
    %543 = vmatprep.subr.mxu0 0.0
    %544 = vmatpush1.xpose.msra.mxu0 0.0
    %545 = vmatprep.subr.mxu0 0.0
    %546 = vmatpush1.xpose.msra.mxu0 0.0
    %547 = vmatprep.subr.mxu0 0.0
    %548 = vmatpush1.xpose.msra.mxu0 0.0
    %549 = vmatprep.subr.mxu0 0.0
    %550 = vmatpush1.xpose.msra.mxu0 0.0
    %551 = vmatprep.subr.mxu0 0.0
    %552 = vmatpush1.xpose.msra.mxu0 0.0
    %553 = vmatprep.subr.mxu0 0.0
    %554 = vmatpush1.xpose.msra.mxu0 0.0
    %555 = vmatprep.subr.mxu0 0.0
    %556 = vmatpush1.xpose.msra.mxu0 0.0
    %557 = vmatprep.subr.mxu0 0.0
    %558 = vmatpush1.xpose.msra.mxu0 0.0
    %559 = vmatprep.subr.mxu0 0.0
    %560 = vmatpush1.xpose.msra.mxu0 0.0
    %561 = vmatprep.subr.mxu0 0.0
    %562 = vmatpush1.xpose.msra.mxu0 0.0
    %563 = vmatprep.subr.mxu0 0.0
    %564 = vmatpush1.xpose.msra.mxu0 0.0
    %565 = vmatprep.subr.mxu0 0.0
    %566 = vmatpush1.xpose.msra.mxu0 0.0
    %567 = vmatprep.subr.mxu0 0.0
    %568 = vmatpush1.xpose.msra.mxu0 0.0
    %569 = vmatprep.mubr.f32.mxu0 0.0
    %570 = vmatmul.mubr.f32.gmra.mrb[0].mxu0 %v501
    %v571 = vpop.f32.mrb[0].mxu0
    %v572 = vadd.f32 0.0, %v571
    %v573 = vpop.f32.mrb[0].mxu0
    %574 = vdwg.mxu0
    %575 = vrot.lane.b32.xlu0 %v263, 96
    %v576 = vpop.permute.xlu0 %575
    %v577 = vsel %vm272, %v263, 0
    %v579 = vsel %vm272, %v576, 0
    %581 = vmatprep.subr.mxu0 0.0
    %582 = vmatpush1.xpose.msra.mxu0 %v579
    %583 = vmatprep.subr.mxu0 0.0
    %584 = vmatpush1.xpose.msra.mxu0 0.0
    %585 = vmatprep.subr.mxu0 0.0
    %586 = vmatpush1.xpose.msra.mxu0 0.0
    %587 = vmatprep.subr.mxu0 0.0
    %588 = vmatpush1.xpose.msra.mxu0 0.0
    %589 = vmatprep.subr.mxu0 0.0
    %590 = vmatpush1.xpose.msra.mxu0 0.0
    %591 = vmatprep.subr.mxu0 0.0
    %592 = vmatpush1.xpose.msra.mxu0 0.0
    %593 = vmatprep.subr.mxu0 0.0
    %594 = vmatpush1.xpose.msra.mxu0 0.0
    %595 = vmatprep.subr.mxu0 0.0
    %596 = vmatpush1.xpose.msra.mxu0 0.0
    %597 = vmatprep.subr.mxu0 0.0
    %598 = vmatpush1.xpose.msra.mxu0 0.0
    %599 = vmatprep.subr.mxu0 0.0
    %600 = vmatpush1.xpose.msra.mxu0 0.0
    %601 = vmatprep.subr.mxu0 0.0
    %602 = vmatpush1.xpose.msra.mxu0 0.0
    %603 = vmatprep.subr.mxu0 0.0
    %604 = vmatpush1.xpose.msra.mxu0 0.0
    %605 = vmatprep.subr.mxu0 0.0
    %606 = vmatpush1.xpose.msra.mxu0 0.0
    %607 = vmatprep.subr.mxu0 0.0
    %608 = vmatpush1.xpose.msra.mxu0 0.0
    %609 = vmatprep.subr.mxu0 0.0
    %610 = vmatpush1.xpose.msra.mxu0 0.0
    %611 = vmatprep.subr.mxu0 0.0
    %612 = vmatpush1.xpose.msra.mxu0 0.0
    %613 = vmatprep.subr.mxu0 0.0
    %614 = vmatpush1.xpose.msra.mxu0 0.0
    %615 = vmatprep.subr.mxu0 0.0
    %616 = vmatpush1.xpose.msra.mxu0 0.0
    %617 = vmatprep.subr.mxu0 0.0
    %618 = vmatpush1.xpose.msra.mxu0 0.0
    %619 = vmatprep.subr.mxu0 0.0
    %620 = vmatpush1.xpose.msra.mxu0 0.0
    %621 = vmatprep.subr.mxu0 0.0
    %622 = vmatpush1.xpose.msra.mxu0 0.0
    %623 = vmatprep.subr.mxu0 0.0
    %624 = vmatpush1.xpose.msra.mxu0 0.0
    %625 = vmatprep.subr.mxu0 0.0
    %626 = vmatpush1.xpose.msra.mxu0 0.0
    %627 = vmatprep.subr.mxu0 0.0
    %628 = vmatpush1.xpose.msra.mxu0 0.0
    %629 = vmatprep.subr.mxu0 0.0
    %630 = vmatpush1.xpose.msra.mxu0 0.0
    %631 = vmatprep.subr.mxu0 0.0
    %632 = vmatpush1.xpose.msra.mxu0 0.0
    %633 = vmatprep.subr.mxu0 0.0
    %634 = vmatpush1.xpose.msra.mxu0 0.0
    %635 = vmatprep.subr.mxu0 0.0
    %636 = vmatpush1.xpose.msra.mxu0 0.0
    %637 = vmatprep.subr.mxu0 0.0
    %638 = vmatpush1.xpose.msra.mxu0 0.0
    %639 = vmatprep.subr.mxu0 0.0
    %640 = vmatpush1.xpose.msra.mxu0 0.0
    %641 = vmatprep.subr.mxu0 0.0
    %642 = vmatpush1.xpose.msra.mxu0 0.0
    %643 = vmatprep.subr.mxu0 0.0
    %644 = vmatpush1.xpose.msra.mxu0 0.0
    %645 = vmatprep.mubr.f32.mxu0 0.0
    %646 = vmatmul.mubr.f32.gmra.mrb[0].mxu0 %v577
    %v647 = vpop.f32.mrb[0].mxu0
    %v648 = vadd.f32 0.0, %v647
    %v649 = vpop.f32.mrb[0].mxu0
    %650 = vdwg.mxu0
    %651 = vrot.lane.b32.xlu0 %v265, 96
    %v652 = vpop.permute.xlu0 %651
    %v653 = vsel %vm272, %v265, 0
    %v655 = vsel %vm272, %v652, 0
    %657 = vmatprep.subr.mxu0 0.0
    %658 = vmatpush1.xpose.msra.mxu0 %v655
    %659 = vmatprep.subr.mxu0 0.0
    %660 = vmatpush1.xpose.msra.mxu0 0.0
    %661 = vmatprep.subr.mxu0 0.0
    %662 = vmatpush1.xpose.msra.mxu0 0.0
    %663 = vmatprep.subr.mxu0 0.0
    %664 = vmatpush1.xpose.msra.mxu0 0.0
    %665 = vmatprep.subr.mxu0 0.0
    %666 = vmatpush1.xpose.msra.mxu0 0.0
    %667 = vmatprep.subr.mxu0 0.0
    %668 = vmatpush1.xpose.msra.mxu0 0.0
    %669 = vmatprep.subr.mxu0 0.0
    %670 = vmatpush1.xpose.msra.mxu0 0.0
    %671 = vmatprep.subr.mxu0 0.0
    %672 = vmatpush1.xpose.msra.mxu0 0.0
    %673 = vmatprep.subr.mxu0 0.0
    %674 = vmatpush1.xpose.msra.mxu0 0.0
    %675 = vmatprep.subr.mxu0 0.0
    %676 = vmatpush1.xpose.msra.mxu0 0.0
    %677 = vmatprep.subr.mxu0 0.0
    %678 = vmatpush1.xpose.msra.mxu0 0.0
    %679 = vmatprep.subr.mxu0 0.0
    %680 = vmatpush1.xpose.msra.mxu0 0.0
    %681 = vmatprep.subr.mxu0 0.0
    %682 = vmatpush1.xpose.msra.mxu0 0.0
    %683 = vmatprep.subr.mxu0 0.0
    %684 = vmatpush1.xpose.msra.mxu0 0.0
    %685 = vmatprep.subr.mxu0 0.0
    %686 = vmatpush1.xpose.msra.mxu0 0.0
    %687 = vmatprep.subr.mxu0 0.0
    %688 = vmatpush1.xpose.msra.mxu0 0.0
    %689 = vmatprep.subr.mxu0 0.0
    %690 = vmatpush1.xpose.msra.mxu0 0.0
    %691 = vmatprep.subr.mxu0 0.0
    %692 = vmatpush1.xpose.msra.mxu0 0.0
    %693 = vmatprep.subr.mxu0 0.0
    %694 = vmatpush1.xpose.msra.mxu0 0.0
    %695 = vmatprep.subr.mxu0 0.0
    %696 = vmatpush1.xpose.msra.mxu0 0.0
    %697 = vmatprep.subr.mxu0 0.0
    %698 = vmatpush1.xpose.msra.mxu0 0.0
    %699 = vmatprep.subr.mxu0 0.0
    %700 = vmatpush1.xpose.msra.mxu0 0.0
    %701 = vmatprep.subr.mxu0 0.0
    %702 = vmatpush1.xpose.msra.mxu0 0.0
    %703 = vmatprep.subr.mxu0 0.0
    %704 = vmatpush1.xpose.msra.mxu0 0.0
    %705 = vmatprep.subr.mxu0 0.0
    %706 = vmatpush1.xpose.msra.mxu0 0.0
    %707 = vmatprep.subr.mxu0 0.0
    %708 = vmatpush1.xpose.msra.mxu0 0.0
    %709 = vmatprep.subr.mxu0 0.0
    %710 = vmatpush1.xpose.msra.mxu0 0.0
    %711 = vmatprep.subr.mxu0 0.0
    %712 = vmatpush1.xpose.msra.mxu0 0.0
    %713 = vmatprep.subr.mxu0 0.0
    %714 = vmatpush1.xpose.msra.mxu0 0.0
    %715 = vmatprep.subr.mxu0 0.0
    %716 = vmatpush1.xpose.msra.mxu0 0.0
    %717 = vmatprep.subr.mxu0 0.0
    %718 = vmatpush1.xpose.msra.mxu0 0.0
    %719 = vmatprep.subr.mxu0 0.0
    %720 = vmatpush1.xpose.msra.mxu0 0.0
    %721 = vmatprep.mubr.f32.mxu0 0.0
    %722 = vmatmul.mubr.f32.gmra.mrb[0].mxu0 %v653
    %v723 = vpop.f32.mrb[0].mxu0
    %v724 = vadd.f32 0.0, %v723
    %v725 = vpop.f32.mrb[0].mxu0
    %726 = vdwg.mxu0
    %727 = vrot.lane.b32.xlu0 %v267, 96
    %v728 = vpop.permute.xlu0 %727
    %v729 = vsel %vm272, %v267, 0
    %v731 = vsel %vm272, %v728, 0
    %733 = vmatprep.subr.mxu0 0.0
    %734 = vmatpush1.xpose.msra.mxu0 %v731
    %735 = vmatprep.subr.mxu0 0.0
    %736 = vmatpush1.xpose.msra.mxu0 0.0
    %737 = vmatprep.subr.mxu0 0.0
    %738 = vmatpush1.xpose.msra.mxu0 0.0
    %739 = vmatprep.subr.mxu0 0.0
    %740 = vmatpush1.xpose.msra.mxu0 0.0
    %741 = vmatprep.subr.mxu0 0.0
    %742 = vmatpush1.xpose.msra.mxu0 0.0
    %743 = vmatprep.subr.mxu0 0.0
    %744 = vmatpush1.xpose.msra.mxu0 0.0
    %745 = vmatprep.subr.mxu0 0.0
    %746 = vmatpush1.xpose.msra.mxu0 0.0
    %747 = vmatprep.subr.mxu0 0.0
    %748 = vmatpush1.xpose.msra.mxu0 0.0
    %749 = vmatprep.subr.mxu0 0.0
    %750 = vmatpush1.xpose.msra.mxu0 0.0
    %751 = vmatprep.subr.mxu0 0.0
    %752 = vmatpush1.xpose.msra.mxu0 0.0
    %753 = vmatprep.subr.mxu0 0.0
    %754 = vmatpush1.xpose.msra.mxu0 0.0
    %755 = vmatprep.subr.mxu0 0.0
    %756 = vmatpush1.xpose.msra.mxu0 0.0
    %757 = vmatprep.subr.mxu0 0.0
    %758 = vmatpush1.xpose.msra.mxu0 0.0
    %759 = vmatprep.subr.mxu0 0.0
    %760 = vmatpush1.xpose.msra.mxu0 0.0
    %761 = vmatprep.subr.mxu0 0.0
    %762 = vmatpush1.xpose.msra.mxu0 0.0
    %763 = vmatprep.subr.mxu0 0.0
    %764 = vmatpush1.xpose.msra.mxu0 0.0
    %765 = vmatprep.subr.mxu0 0.0
    %766 = vmatpush1.xpose.msra.mxu0 0.0
    %767 = vmatprep.subr.mxu0 0.0
    %768 = vmatpush1.xpose.msra.mxu0 0.0
    %769 = vmatprep.subr.mxu0 0.0
    %770 = vmatpush1.xpose.msra.mxu0 0.0
    %771 = vmatprep.subr.mxu0 0.0
    %772 = vmatpush1.xpose.msra.mxu0 0.0
    %773 = vmatprep.subr.mxu0 0.0
    %774 = vmatpush1.xpose.msra.mxu0 0.0
    %775 = vmatprep.subr.mxu0 0.0
    %776 = vmatpush1.xpose.msra.mxu0 0.0
    %777 = vmatprep.subr.mxu0 0.0
    %778 = vmatpush1.xpose.msra.mxu0 0.0
    %779 = vmatprep.subr.mxu0 0.0
    %780 = vmatpush1.xpose.msra.mxu0 0.0
    %781 = vmatprep.subr.mxu0 0.0
    %782 = vmatpush1.xpose.msra.mxu0 0.0
    %783 = vmatprep.subr.mxu0 0.0
    %784 = vmatpush1.xpose.msra.mxu0 0.0
    %785 = vmatprep.subr.mxu0 0.0
    %786 = vmatpush1.xpose.msra.mxu0 0.0
    %787 = vmatprep.subr.mxu0 0.0
    %788 = vmatpush1.xpose.msra.mxu0 0.0
    %789 = vmatprep.subr.mxu0 0.0
    %790 = vmatpush1.xpose.msra.mxu0 0.0
    %791 = vmatprep.subr.mxu0 0.0
    %792 = vmatpush1.xpose.msra.mxu0 0.0
    %793 = vmatprep.subr.mxu0 0.0
    %794 = vmatpush1.xpose.msra.mxu0 0.0
    %795 = vmatprep.subr.mxu0 0.0
    %796 = vmatpush1.xpose.msra.mxu0 0.0
    %797 = vmatprep.mubr.f32.mxu0 0.0
    %798 = vmatmul.mubr.f32.gmra.mrb[0].mxu0 %v729
    %v799 = vpop.f32.mrb[0].mxu0
    %v800 = vadd.f32 0.0, %v799
    %v801 = vpop.f32.mrb[0].mxu0
    %802 = vdwg.mxu0
    %803 = vrot.lane.b32.xlu0 %v269, 96
    %v804 = vpop.permute.xlu0 %803
    %v805 = vsel %vm272, %v269, 0
    %v807 = vsel %vm272, %v804, 0
    %809 = vmatprep.subr.mxu0 0.0
    %810 = vmatpush1.xpose.msra.mxu0 %v807
    %811 = vmatprep.subr.mxu0 0.0
    %812 = vmatpush1.xpose.msra.mxu0 0.0
    %813 = vmatprep.subr.mxu0 0.0
    %814 = vmatpush1.xpose.msra.mxu0 0.0
    %815 = vmatprep.subr.mxu0 0.0
    %816 = vmatpush1.xpose.msra.mxu0 0.0
    %817 = vmatprep.subr.mxu0 0.0
    %818 = vmatpush1.xpose.msra.mxu0 0.0
    %819 = vmatprep.subr.mxu0 0.0
    %820 = vmatpush1.xpose.msra.mxu0 0.0
    %821 = vmatprep.subr.mxu0 0.0
    %822 = vmatpush1.xpose.msra.mxu0 0.0
    %823 = vmatprep.subr.mxu0 0.0
    %824 = vmatpush1.xpose.msra.mxu0 0.0
    %825 = vmatprep.subr.mxu0 0.0
    %826 = vmatpush1.xpose.msra.mxu0 0.0
    %827 = vmatprep.subr.mxu0 0.0
    %828 = vmatpush1.xpose.msra.mxu0 0.0
    %829 = vmatprep.subr.mxu0 0.0
    %830 = vmatpush1.xpose.msra.mxu0 0.0
    %831 = vmatprep.subr.mxu0 0.0
    %832 = vmatpush1.xpose.msra.mxu0 0.0
    %833 = vmatprep.subr.mxu0 0.0
    %834 = vmatpush1.xpose.msra.mxu0 0.0
    %835 = vmatprep.subr.mxu0 0.0
    %836 = vmatpush1.xpose.msra.mxu0 0.0
    %837 = vmatprep.subr.mxu0 0.0
    %838 = vmatpush1.xpose.msra.mxu0 0.0
    %839 = vmatprep.subr.mxu0 0.0
    %840 = vmatpush1.xpose.msra.mxu0 0.0
    %841 = vmatprep.subr.mxu0 0.0
    %842 = vmatpush1.xpose.msra.mxu0 0.0
    %843 = vmatprep.subr.mxu0 0.0
    %844 = vmatpush1.xpose.msra.mxu0 0.0
    %845 = vmatprep.subr.mxu0 0.0
    %846 = vmatpush1.xpose.msra.mxu0 0.0
    %847 = vmatprep.subr.mxu0 0.0
    %848 = vmatpush1.xpose.msra.mxu0 0.0
    %849 = vmatprep.subr.mxu0 0.0
    %850 = vmatpush1.xpose.msra.mxu0 0.0
    %851 = vmatprep.subr.mxu0 0.0
    %852 = vmatpush1.xpose.msra.mxu0 0.0
    %853 = vmatprep.subr.mxu0 0.0
    %854 = vmatpush1.xpose.msra.mxu0 0.0
    %855 = vmatprep.subr.mxu0 0.0
    %856 = vmatpush1.xpose.msra.mxu0 0.0
    %857 = vmatprep.subr.mxu0 0.0
    %858 = vmatpush1.xpose.msra.mxu0 0.0
    %859 = vmatprep.subr.mxu0 0.0
    %860 = vmatpush1.xpose.msra.mxu0 0.0
    %861 = vmatprep.subr.mxu0 0.0
    %862 = vmatpush1.xpose.msra.mxu0 0.0
    %863 = vmatprep.subr.mxu0 0.0
    %864 = vmatpush1.xpose.msra.mxu0 0.0
    %865 = vmatprep.subr.mxu0 0.0
    %866 = vmatpush1.xpose.msra.mxu0 0.0
    %867 = vmatprep.subr.mxu0 0.0
    %868 = vmatpush1.xpose.msra.mxu0 0.0
    %869 = vmatprep.subr.mxu0 0.0
    %870 = vmatpush1.xpose.msra.mxu0 0.0
    %871 = vmatprep.subr.mxu0 0.0
    %872 = vmatpush1.xpose.msra.mxu0 0.0
    %873 = vmatprep.mubr.f32.mxu0 0.0
    %874 = vmatmul.mubr.f32.gmra.mrb[0].mxu0 %v805
    %v875 = vpop.f32.mrb[0].mxu0
    %v876 = vadd.f32 0.0, %v875
    %v877 = vpop.f32.mrb[0].mxu0
    %878 = vdwg.mxu0
    %v879 = vsel %vm272, %v344, -inf
    %880 = vmax.xlane.f32.xlu0 %v879
    %v881 = vpop.xlane.xlu0 %880
    %v882 = vsel %vm272, %v420, -inf
    %883 = vmax.xlane.f32.xlu0 %v882
    %v884 = vpop.xlane.xlu0 %883
    %v885 = vsel %vm272, %v496, -inf
    %886 = vmax.xlane.f32.xlu0 %v885
    %v887 = vpop.xlane.xlu0 %886
    %v888 = vsel %vm272, %v572, -inf
    %889 = vmax.xlane.f32.xlu0 %v888
    %v890 = vpop.xlane.xlu0 %889
    %v891 = vsel %vm272, %v648, -inf
    %892 = vmax.xlane.f32.xlu0 %v891
    %v893 = vpop.xlane.xlu0 %892
    %v894 = vsel %vm272, %v724, -inf
    %895 = vmax.xlane.f32.xlu0 %v894
    %v896 = vpop.xlane.xlu0 %895
    %v897 = vsel %vm272, %v800, -inf
    %898 = vmax.xlane.f32.xlu0 %v897
    %v899 = vpop.xlane.xlu0 %898
    %v900 = vsel %vm272, %v876, -inf
    %901 = vmax.xlane.f32.xlu0 %v900
    %v902 = vpop.xlane.xlu0 %901
    %v903 = vsub.f32 %v344, %v881
    %v904 = vsub.f32 %v420, %v884
    %v905 = vsub.f32 %v496, %v887
    %v906 = vsub.f32 %v572, %v890
    %v907 = vsub.f32 %v648, %v893
    %v908 = vsub.f32 %v724, %v896
    %v909 = vsub.f32 %v800, %v899
    %v910 = vsub.f32 %v876, %v902
    %v911 = vmul.f32 %v903, 1.442695
    %v912 = vpow.pop %v911
    %v913 = vmul.f32 %v904, 1.442695
    %v914 = vpow.pop %v913
    %v915 = vmul.f32 %v905, 1.442695
    %v916 = vpow.pop %v915
    %v917 = vmul.f32 %v906, 1.442695
    %v918 = vpow.pop %v917
    %v919 = vmul.f32 %v907, 1.442695
    %v920 = vpow.pop %v919
    %v921 = vmul.f32 %v908, 1.442695
    %v922 = vpow.pop %v921
    %v923 = vmul.f32 %v909, 1.442695
    %v924 = vpow.pop %v923
    %v925 = vmul.f32 %v910, 1.442695
    %v926 = vpow.pop %v925
    %v927 = vsel %vm272, %v912, 0.0
    %928 = vadd.xlane.f32.xlu0 %v927
    %v929 = vpop.xlane.xlu0 %928
    %v930 = vsel %vm272, %v914, 0.0
    %931 = vadd.xlane.f32.xlu0 %v930
    %v932 = vpop.xlane.xlu0 %931
    %v933 = vsel %vm272, %v916, 0.0
    %934 = vadd.xlane.f32.xlu0 %v933
    %v935 = vpop.xlane.xlu0 %934
    %v936 = vsel %vm272, %v918, 0.0
    %937 = vadd.xlane.f32.xlu0 %v936
    %v938 = vpop.xlane.xlu0 %937
    %v939 = vsel %vm272, %v920, 0.0
    %940 = vadd.xlane.f32.xlu0 %v939
    %v941 = vpop.xlane.xlu0 %940
    %v942 = vsel %vm272, %v922, 0.0
    %943 = vadd.xlane.f32.xlu0 %v942
    %v944 = vpop.xlane.xlu0 %943
    %v945 = vsel %vm272, %v924, 0.0
    %946 = vadd.xlane.f32.xlu0 %v945
    %v947 = vpop.xlane.xlu0 %946
    %v948 = vsel %vm272, %v926, 0.0
    %949 = vadd.xlane.f32.xlu0 %v948
    %v950 = vpop.xlane.xlu0 %949
    %v951 = vrcp.pop %v929
    %v952 = vrcp.pop %v932
    %v953 = vrcp.pop %v935
    %v954 = vrcp.pop %v938
    %v955 = vrcp.pop %v941
    %v956 = vrcp.pop %v944
    %v957 = vrcp.pop %v947
    %v958 = vrcp.pop %v950
    %v959 = vmul.f32 %v912, %v951
    %v960 = vmul.f32 %v914, %v952
    %v961 = vmul.f32 %v916, %v953
    %v962 = vmul.f32 %v918, %v954
    %v963 = vmul.f32 %v920, %v955
    %v964 = vmul.f32 %v922, %v956
    %v965 = vmul.f32 %v924, %v957
    %v966 = vmul.f32 %v926, %v958
    %967 = vrot.lane.b32.xlu0 %v248, 64
    %v968 = vpop.permute.xlu0 %967
    %v971 = vsel %vm272, %v959, 0
    %973 = vmatprep.subr.mxu0 0.0
    %974 = vmatpush1.msra.mxu0 %v968
    %975 = vmatprep.subr.mxu0 0.0
    %976 = vmatpush1.msra.mxu0 0.0
    %977 = vmatprep.subr.mxu0 0.0
    %978 = vmatpush1.msra.mxu0 0.0
    %979 = vmatprep.subr.mxu0 0.0
    %980 = vmatpush1.msra.mxu0 0.0
    %981 = vmatprep.subr.mxu0 0.0
    %982 = vmatpush1.msra.mxu0 0.0
    %983 = vmatprep.subr.mxu0 0.0
    %984 = vmatpush1.msra.mxu0 0.0
    %985 = vmatprep.subr.mxu0 0.0
    %986 = vmatpush1.msra.mxu0 0.0
    %987 = vmatprep.subr.mxu0 0.0
    %988 = vmatpush1.msra.mxu0 0.0
    %989 = vmatprep.subr.mxu0 0.0
    %990 = vmatpush1.msra.mxu0 0.0
    %991 = vmatprep.subr.mxu0 0.0
    %992 = vmatpush1.msra.mxu0 0.0
    %993 = vmatprep.subr.mxu0 0.0
    %994 = vmatpush1.msra.mxu0 0.0
    %995 = vmatprep.subr.mxu0 0.0
    %996 = vmatpush1.msra.mxu0 0.0
    %997 = vmatprep.subr.mxu0 0.0
    %998 = vmatpush1.msra.mxu0 0.0
    %999 = vmatprep.subr.mxu0 0.0
    %1000 = vmatpush1.msra.mxu0 0.0
    %1001 = vmatprep.subr.mxu0 0.0
    %1002 = vmatpush1.msra.mxu0 0.0
    %1003 = vmatprep.subr.mxu0 0.0
    %1004 = vmatpush1.msra.mxu0 0.0
    %1005 = vmatprep.subr.mxu0 0.0
    %1006 = vmatpush1.msra.mxu0 0.0
    %1007 = vmatprep.subr.mxu0 0.0
    %1008 = vmatpush1.msra.mxu0 0.0
    %1009 = vmatprep.subr.mxu0 0.0
    %1010 = vmatpush1.msra.mxu0 0.0
    %1011 = vmatprep.subr.mxu0 0.0
    %1012 = vmatpush1.msra.mxu0 0.0
    %1013 = vmatprep.subr.mxu0 0.0
    %1014 = vmatpush1.msra.mxu0 0.0
    %1015 = vmatprep.subr.mxu0 0.0
    %1016 = vmatpush1.msra.mxu0 0.0
    %1017 = vmatprep.subr.mxu0 0.0
    %1018 = vmatpush1.msra.mxu0 0.0
    %1019 = vmatprep.subr.mxu0 0.0
    %1020 = vmatpush1.msra.mxu0 0.0
    %1021 = vmatprep.subr.mxu0 0.0
    %1022 = vmatpush1.msra.mxu0 0.0
    %1023 = vmatprep.subr.mxu0 0.0
    %1024 = vmatpush1.msra.mxu0 0.0
    %1025 = vmatprep.subr.mxu0 0.0
    %1026 = vmatpush1.msra.mxu0 0.0
    %1027 = vmatprep.subr.mxu0 0.0
    %1028 = vmatpush1.msra.mxu0 0.0
    %1029 = vmatprep.subr.mxu0 0.0
    %1030 = vmatpush1.msra.mxu0 0.0
    %1031 = vmatprep.subr.mxu0 0.0
    %1032 = vmatpush1.msra.mxu0 0.0
    %1033 = vmatprep.subr.mxu0 0.0
    %1034 = vmatpush1.msra.mxu0 0.0
    %1035 = vmatprep.subr.mxu0 0.0
    %1036 = vmatpush1.msra.mxu0 0.0
    %1037 = vmatprep.mubr.f32.mxu0 0.0
    %1038 = vmatmul.mubr.f32.gmra.mrb[0].mxu0 %v971
    %v1039 = vpop.f32.mrb[0].mxu0
    %v1040 = vadd.f32 0.0, %v1039
    %v1041 = vpop.f32.mrb[0].mxu0
    %1042 = vdwg.mxu0
    %1043 = vrot.lane.b32.xlu0 %v253, 64
    %v1044 = vpop.permute.xlu0 %1043
    %v1047 = vsel %vm272, %v960, 0
    %1049 = vmatprep.subr.mxu0 0.0
    %1050 = vmatpush1.msra.mxu0 %v1044
    %1051 = vmatprep.subr.mxu0 0.0
    %1052 = vmatpush1.msra.mxu0 0.0
    %1053 = vmatprep.subr.mxu0 0.0
    %1054 = vmatpush1.msra.mxu0 0.0
    %1055 = vmatprep.subr.mxu0 0.0
    %1056 = vmatpush1.msra.mxu0 0.0
    %1057 = vmatprep.subr.mxu0 0.0
    %1058 = vmatpush1.msra.mxu0 0.0
    %1059 = vmatprep.subr.mxu0 0.0
    %1060 = vmatpush1.msra.mxu0 0.0
    %1061 = vmatprep.subr.mxu0 0.0
    %1062 = vmatpush1.msra.mxu0 0.0
    %1063 = vmatprep.subr.mxu0 0.0
    %1064 = vmatpush1.msra.mxu0 0.0
    %1065 = vmatprep.subr.mxu0 0.0
    %1066 = vmatpush1.msra.mxu0 0.0
    %1067 = vmatprep.subr.mxu0 0.0
    %1068 = vmatpush1.msra.mxu0 0.0
    %1069 = vmatprep.subr.mxu0 0.0
    %1070 = vmatpush1.msra.mxu0 0.0
    %1071 = vmatprep.subr.mxu0 0.0
    %1072 = vmatpush1.msra.mxu0 0.0
    %1073 = vmatprep.subr.mxu0 0.0
    %1074 = vmatpush1.msra.mxu0 0.0
    %1075 = vmatprep.subr.mxu0 0.0
    %1076 = vmatpush1.msra.mxu0 0.0
    %1077 = vmatprep.subr.mxu0 0.0
    %1078 = vmatpush1.msra.mxu0 0.0
    %1079 = vmatprep.subr.mxu0 0.0
    %1080 = vmatpush1.msra.mxu0 0.0
    %1081 = vmatprep.subr.mxu0 0.0
    %1082 = vmatpush1.msra.mxu0 0.0
    %1083 = vmatprep.subr.mxu0 0.0
    %1084 = vmatpush1.msra.mxu0 0.0
    %1085 = vmatprep.subr.mxu0 0.0
    %1086 = vmatpush1.msra.mxu0 0.0
    %1087 = vmatprep.subr.mxu0 0.0
    %1088 = vmatpush1.msra.mxu0 0.0
    %1089 = vmatprep.subr.mxu0 0.0
    %1090 = vmatpush1.msra.mxu0 0.0
    %1091 = vmatprep.subr.mxu0 0.0
    %1092 = vmatpush1.msra.mxu0 0.0
    %1093 = vmatprep.subr.mxu0 0.0
    %1094 = vmatpush1.msra.mxu0 0.0
    %1095 = vmatprep.subr.mxu0 0.0
    %1096 = vmatpush1.msra.mxu0 0.0
    %1097 = vmatprep.subr.mxu0 0.0
    %1098 = vmatpush1.msra.mxu0 0.0
    %1099 = vmatprep.subr.mxu0 0.0
    %1100 = vmatpush1.msra.mxu0 0.0
    %1101 = vmatprep.subr.mxu0 0.0
    %1102 = vmatpush1.msra.mxu0 0.0
    %1103 = vmatprep.subr.mxu0 0.0
    %1104 = vmatpush1.msra.mxu0 0.0
    %1105 = vmatprep.subr.mxu0 0.0
    %1106 = vmatpush1.msra.mxu0 0.0
    %1107 = vmatprep.subr.mxu0 0.0
    %1108 = vmatpush1.msra.mxu0 0.0
    %1109 = vmatprep.subr.mxu0 0.0
    %1110 = vmatpush1.msra.mxu0 0.0
    %1111 = vmatprep.subr.mxu0 0.0
    %1112 = vmatpush1.msra.mxu0 0.0
    %1113 = vmatprep.mubr.f32.mxu0 0.0
    %1114 = vmatmul.mubr.f32.gmra.mrb[0].mxu0 %v1047
    %v1115 = vpop.f32.mrb[0].mxu0
    %v1116 = vadd.f32 0.0, %v1115
    %v1117 = vpop.f32.mrb[0].mxu0
    %1118 = vdwg.mxu0
    %1119 = vrot.lane.b32.xlu0 %v259, 64
    %v1120 = vpop.permute.xlu0 %1119
    %v1123 = vsel %vm272, %v961, 0
    %1125 = vmatprep.subr.mxu0 0.0
    %1126 = vmatpush1.msra.mxu0 %v1120
    %1127 = vmatprep.subr.mxu0 0.0
    %1128 = vmatpush1.msra.mxu0 0.0
    %1129 = vmatprep.subr.mxu0 0.0
    %1130 = vmatpush1.msra.mxu0 0.0
    %1131 = vmatprep.subr.mxu0 0.0
    %1132 = vmatpush1.msra.mxu0 0.0
    %1133 = vmatprep.subr.mxu0 0.0
    %1134 = vmatpush1.msra.mxu0 0.0
    %1135 = vmatprep.subr.mxu0 0.0
    %1136 = vmatpush1.msra.mxu0 0.0
    %1137 = vmatprep.subr.mxu0 0.0
    %1138 = vmatpush1.msra.mxu0 0.0
    %1139 = vmatprep.subr.mxu0 0.0
    %1140 = vmatpush1.msra.mxu0 0.0
    %1141 = vmatprep.subr.mxu0 0.0
    %1142 = vmatpush1.msra.mxu0 0.0
    %1143 = vmatprep.subr.mxu0 0.0
    %1144 = vmatpush1.msra.mxu0 0.0
    %1145 = vmatprep.subr.mxu0 0.0
    %1146 = vmatpush1.msra.mxu0 0.0
    %1147 = vmatprep.subr.mxu0 0.0
    %1148 = vmatpush1.msra.mxu0 0.0
    %1149 = vmatprep.subr.mxu0 0.0
    %1150 = vmatpush1.msra.mxu0 0.0
    %1151 = vmatprep.subr.mxu0 0.0
    %1152 = vmatpush1.msra.mxu0 0.0
    %1153 = vmatprep.subr.mxu0 0.0
    %1154 = vmatpush1.msra.mxu0 0.0
    %1155 = vmatprep.subr.mxu0 0.0
    %1156 = vmatpush1.msra.mxu0 0.0
    %1157 = vmatprep.subr.mxu0 0.0
    %1158 = vmatpush1.msra.mxu0 0.0
    %1159 = vmatprep.subr.mxu0 0.0
    %1160 = vmatpush1.msra.mxu0 0.0
    %1161 = vmatprep.subr.mxu0 0.0
    %1162 = vmatpush1.msra.mxu0 0.0
    %1163 = vmatprep.subr.mxu0 0.0
    %1164 = vmatpush1.msra.mxu0 0.0
    %1165 = vmatprep.subr.mxu0 0.0
    %1166 = vmatpush1.msra.mxu0 0.0
    %1167 = vmatprep.subr.mxu0 0.0
    %1168 = vmatpush1.msra.mxu0 0.0
    %1169 = vmatprep.subr.mxu0 0.0
    %1170 = vmatpush1.msra.mxu0 0.0
    %1171 = vmatprep.subr.mxu0 0.0
    %1172 = vmatpush1.msra.mxu0 0.0
    %1173 = vmatprep.subr.mxu0 0.0
    %1174 = vmatpush1.msra.mxu0 0.0
    %1175 = vmatprep.subr.mxu0 0.0
    %1176 = vmatpush1.msra.mxu0 0.0
    %1177 = vmatprep.subr.mxu0 0.0
    %1178 = vmatpush1.msra.mxu0 0.0
    %1179 = vmatprep.subr.mxu0 0.0
    %1180 = vmatpush1.msra.mxu0 0.0
    %1181 = vmatprep.subr.mxu0 0.0
    %1182 = vmatpush1.msra.mxu0 0.0
    %1183 = vmatprep.subr.mxu0 0.0
    %1184 = vmatpush1.msra.mxu0 0.0
    %1185 = vmatprep.subr.mxu0 0.0
    %1186 = vmatpush1.msra.mxu0 0.0
    %1187 = vmatprep.subr.mxu0 0.0
    %1188 = vmatpush1.msra.mxu0 0.0
    %1189 = vmatprep.mubr.f32.mxu0 0.0
    %1190 = vmatmul.mubr.f32.gmra.mrb[0].mxu0 %v1123
    %v1191 = vpop.f32.mrb[0].mxu0
    %v1192 = vadd.f32 0.0, %v1191
    %v1193 = vpop.f32.mrb[0].mxu0
    %1194 = vdwg.mxu0
    %1195 = vrot.lane.b32.xlu0 %v261, 64
    %v1196 = vpop.permute.xlu0 %1195
    %v1199 = vsel %vm272, %v962, 0
    %1201 = vmatprep.subr.mxu0 0.0
    %1202 = vmatpush1.msra.mxu0 %v1196
    %1203 = vmatprep.subr.mxu0 0.0
    %1204 = vmatpush1.msra.mxu0 0.0
    %1205 = vmatprep.subr.mxu0 0.0
    %1206 = vmatpush1.msra.mxu0 0.0
    %1207 = vmatprep.subr.mxu0 0.0
    %1208 = vmatpush1.msra.mxu0 0.0
    %1209 = vmatprep.subr.mxu0 0.0
    %1210 = vmatpush1.msra.mxu0 0.0
    %1211 = vmatprep.subr.mxu0 0.0
    %1212 = vmatpush1.msra.mxu0 0.0
    %1213 = vmatprep.subr.mxu0 0.0
    %1214 = vmatpush1.msra.mxu0 0.0
    %1215 = vmatprep.subr.mxu0 0.0
    %1216 = vmatpush1.msra.mxu0 0.0
    %1217 = vmatprep.subr.mxu0 0.0
    %1218 = vmatpush1.msra.mxu0 0.0
    %1219 = vmatprep.subr.mxu0 0.0
    %1220 = vmatpush1.msra.mxu0 0.0
    %1221 = vmatprep.subr.mxu0 0.0
    %1222 = vmatpush1.msra.mxu0 0.0
    %1223 = vmatprep.subr.mxu0 0.0
    %1224 = vmatpush1.msra.mxu0 0.0
    %1225 = vmatprep.subr.mxu0 0.0
    %1226 = vmatpush1.msra.mxu0 0.0
    %1227 = vmatprep.subr.mxu0 0.0
    %1228 = vmatpush1.msra.mxu0 0.0
    %1229 = vmatprep.subr.mxu0 0.0
    %1230 = vmatpush1.msra.mxu0 0.0
    %1231 = vmatprep.subr.mxu0 0.0
    %1232 = vmatpush1.msra.mxu0 0.0
    %1233 = vmatprep.subr.mxu0 0.0
    %1234 = vmatpush1.msra.mxu0 0.0
    %1235 = vmatprep.subr.mxu0 0.0
    %1236 = vmatpush1.msra.mxu0 0.0
    %1237 = vmatprep.subr.mxu0 0.0
    %1238 = vmatpush1.msra.mxu0 0.0
    %1239 = vmatprep.subr.mxu0 0.0
    %1240 = vmatpush1.msra.mxu0 0.0
    %1241 = vmatprep.subr.mxu0 0.0
    %1242 = vmatpush1.msra.mxu0 0.0
    %1243 = vmatprep.subr.mxu0 0.0
    %1244 = vmatpush1.msra.mxu0 0.0
    %1245 = vmatprep.subr.mxu0 0.0
    %1246 = vmatpush1.msra.mxu0 0.0
    %1247 = vmatprep.subr.mxu0 0.0
    %1248 = vmatpush1.msra.mxu0 0.0
    %1249 = vmatprep.subr.mxu0 0.0
    %1250 = vmatpush1.msra.mxu0 0.0
    %1251 = vmatprep.subr.mxu0 0.0
    %1252 = vmatpush1.msra.mxu0 0.0
    %1253 = vmatprep.subr.mxu0 0.0
    %1254 = vmatpush1.msra.mxu0 0.0
    %1255 = vmatprep.subr.mxu0 0.0
    %1256 = vmatpush1.msra.mxu0 0.0
    %1257 = vmatprep.subr.mxu0 0.0
    %1258 = vmatpush1.msra.mxu0 0.0
    %1259 = vmatprep.subr.mxu0 0.0
    %1260 = vmatpush1.msra.mxu0 0.0
    %1261 = vmatprep.subr.mxu0 0.0
    %1262 = vmatpush1.msra.mxu0 0.0
    %1263 = vmatprep.subr.mxu0 0.0
    %1264 = vmatpush1.msra.mxu0 0.0
    %1265 = vmatprep.mubr.f32.mxu0 0.0
    %1266 = vmatmul.mubr.f32.gmra.mrb[0].mxu0 %v1199
    %v1267 = vpop.f32.mrb[0].mxu0
    %v1268 = vadd.f32 0.0, %v1267
    %v1269 = vpop.f32.mrb[0].mxu0
    %1270 = vdwg.mxu0
    %1271 = vrot.lane.b32.xlu0 %v263, 64
    %v1272 = vpop.permute.xlu0 %1271
    %v1275 = vsel %vm272, %v963, 0
    %1277 = vmatprep.subr.mxu0 0.0
    %1278 = vmatpush1.msra.mxu0 %v1272
    %1279 = vmatprep.subr.mxu0 0.0
    %1280 = vmatpush1.msra.mxu0 0.0
    %1281 = vmatprep.subr.mxu0 0.0
    %1282 = vmatpush1.msra.mxu0 0.0
    %1283 = vmatprep.subr.mxu0 0.0
    %1284 = vmatpush1.msra.mxu0 0.0
    %1285 = vmatprep.subr.mxu0 0.0
    %1286 = vmatpush1.msra.mxu0 0.0
    %1287 = vmatprep.subr.mxu0 0.0
    %1288 = vmatpush1.msra.mxu0 0.0
    %1289 = vmatprep.subr.mxu0 0.0
    %1290 = vmatpush1.msra.mxu0 0.0
    %1291 = vmatprep.subr.mxu0 0.0
    %1292 = vmatpush1.msra.mxu0 0.0
    %1293 = vmatprep.subr.mxu0 0.0
    %1294 = vmatpush1.msra.mxu0 0.0
    %1295 = vmatprep.subr.mxu0 0.0
    %1296 = vmatpush1.msra.mxu0 0.0
    %1297 = vmatprep.subr.mxu0 0.0
    %1298 = vmatpush1.msra.mxu0 0.0
    %1299 = vmatprep.subr.mxu0 0.0
    %1300 = vmatpush1.msra.mxu0 0.0
    %1301 = vmatprep.subr.mxu0 0.0
    %1302 = vmatpush1.msra.mxu0 0.0
    %1303 = vmatprep.subr.mxu0 0.0
    %1304 = vmatpush1.msra.mxu0 0.0
    %1305 = vmatprep.subr.mxu0 0.0
    %1306 = vmatpush1.msra.mxu0 0.0
    %1307 = vmatprep.subr.mxu0 0.0
    %1308 = vmatpush1.msra.mxu0 0.0
    %1309 = vmatprep.subr.mxu0 0.0
    %1310 = vmatpush1.msra.mxu0 0.0
    %1311 = vmatprep.subr.mxu0 0.0
    %1312 = vmatpush1.msra.mxu0 0.0
    %1313 = vmatprep.subr.mxu0 0.0
    %1314 = vmatpush1.msra.mxu0 0.0
    %1315 = vmatprep.subr.mxu0 0.0
    %1316 = vmatpush1.msra.mxu0 0.0
    %1317 = vmatprep.subr.mxu0 0.0
    %1318 = vmatpush1.msra.mxu0 0.0
    %1319 = vmatprep.subr.mxu0 0.0
    %1320 = vmatpush1.msra.mxu0 0.0
    %1321 = vmatprep.subr.mxu0 0.0
    %1322 = vmatpush1.msra.mxu0 0.0
    %1323 = vmatprep.subr.mxu0 0.0
    %1324 = vmatpush1.msra.mxu0 0.0
    %1325 = vmatprep.subr.mxu0 0.0
    %1326 = vmatpush1.msra.mxu0 0.0
    %1327 = vmatprep.subr.mxu0 0.0
    %1328 = vmatpush1.msra.mxu0 0.0
    %1329 = vmatprep.subr.mxu0 0.0
    %1330 = vmatpush1.msra.mxu0 0.0
    %1331 = vmatprep.subr.mxu0 0.0
    %1332 = vmatpush1.msra.mxu0 0.0
    %1333 = vmatprep.subr.mxu0 0.0
    %1334 = vmatpush1.msra.mxu0 0.0
    %1335 = vmatprep.subr.mxu0 0.0
    %1336 = vmatpush1.msra.mxu0 0.0
    %1337 = vmatprep.subr.mxu0 0.0
    %1338 = vmatpush1.msra.mxu0 0.0
    %1339 = vmatprep.subr.mxu0 0.0
    %1340 = vmatpush1.msra.mxu0 0.0
    %1341 = vmatprep.mubr.f32.mxu0 0.0
    %1342 = vmatmul.mubr.f32.gmra.mrb[0].mxu0 %v1275
    %v1343 = vpop.f32.mrb[0].mxu0
    %v1344 = vadd.f32 0.0, %v1343
    %v1345 = vpop.f32.mrb[0].mxu0
    %1346 = vdwg.mxu0
    %1347 = vrot.lane.b32.xlu0 %v265, 64
    %v1348 = vpop.permute.xlu0 %1347
    %v1351 = vsel %vm272, %v964, 0
    %1353 = vmatprep.subr.mxu0 0.0
    %1354 = vmatpush1.msra.mxu0 %v1348
    %1355 = vmatprep.subr.mxu0 0.0
    %1356 = vmatpush1.msra.mxu0 0.0
    %1357 = vmatprep.subr.mxu0 0.0
    %1358 = vmatpush1.msra.mxu0 0.0
    %1359 = vmatprep.subr.mxu0 0.0
    %1360 = vmatpush1.msra.mxu0 0.0
    %1361 = vmatprep.subr.mxu0 0.0
    %1362 = vmatpush1.msra.mxu0 0.0
    %1363 = vmatprep.subr.mxu0 0.0
    %1364 = vmatpush1.msra.mxu0 0.0
    %1365 = vmatprep.subr.mxu0 0.0
    %1366 = vmatpush1.msra.mxu0 0.0
    %1367 = vmatprep.subr.mxu0 0.0
    %1368 = vmatpush1.msra.mxu0 0.0
    %1369 = vmatprep.subr.mxu0 0.0
    %1370 = vmatpush1.msra.mxu0 0.0
    %1371 = vmatprep.subr.mxu0 0.0
    %1372 = vmatpush1.msra.mxu0 0.0
    %1373 = vmatprep.subr.mxu0 0.0
    %1374 = vmatpush1.msra.mxu0 0.0
    %1375 = vmatprep.subr.mxu0 0.0
    %1376 = vmatpush1.msra.mxu0 0.0
    %1377 = vmatprep.subr.mxu0 0.0
    %1378 = vmatpush1.msra.mxu0 0.0
    %1379 = vmatprep.subr.mxu0 0.0
    %1380 = vmatpush1.msra.mxu0 0.0
    %1381 = vmatprep.subr.mxu0 0.0
    %1382 = vmatpush1.msra.mxu0 0.0
    %1383 = vmatprep.subr.mxu0 0.0
    %1384 = vmatpush1.msra.mxu0 0.0
    %1385 = vmatprep.subr.mxu0 0.0
    %1386 = vmatpush1.msra.mxu0 0.0
    %1387 = vmatprep.subr.mxu0 0.0
    %1388 = vmatpush1.msra.mxu0 0.0
    %1389 = vmatprep.subr.mxu0 0.0
    %1390 = vmatpush1.msra.mxu0 0.0
    %1391 = vmatprep.subr.mxu0 0.0
    %1392 = vmatpush1.msra.mxu0 0.0
    %1393 = vmatprep.subr.mxu0 0.0
    %1394 = vmatpush1.msra.mxu0 0.0
    %1395 = vmatprep.subr.mxu0 0.0
    %1396 = vmatpush1.msra.mxu0 0.0
    %1397 = vmatprep.subr.mxu0 0.0
    %1398 = vmatpush1.msra.mxu0 0.0
    %1399 = vmatprep.subr.mxu0 0.0
    %1400 = vmatpush1.msra.mxu0 0.0
    %1401 = vmatprep.subr.mxu0 0.0
    %1402 = vmatpush1.msra.mxu0 0.0
    %1403 = vmatprep.subr.mxu0 0.0
    %1404 = vmatpush1.msra.mxu0 0.0
    %1405 = vmatprep.subr.mxu0 0.0
    %1406 = vmatpush1.msra.mxu0 0.0
    %1407 = vmatprep.subr.mxu0 0.0
    %1408 = vmatpush1.msra.mxu0 0.0
    %1409 = vmatprep.subr.mxu0 0.0
    %1410 = vmatpush1.msra.mxu0 0.0
    %1411 = vmatprep.subr.mxu0 0.0
    %1412 = vmatpush1.msra.mxu0 0.0
    %1413 = vmatprep.subr.mxu0 0.0
    %1414 = vmatpush1.msra.mxu0 0.0
    %1415 = vmatprep.subr.mxu0 0.0
    %1416 = vmatpush1.msra.mxu0 0.0
    %1417 = vmatprep.mubr.f32.mxu0 0.0
    %1418 = vmatmul.mubr.f32.gmra.mrb[0].mxu0 %v1351
    %v1419 = vpop.f32.mrb[0].mxu0
    %v1420 = vadd.f32 0.0, %v1419
    %v1421 = vpop.f32.mrb[0].mxu0
    %1422 = vdwg.mxu0
    %1423 = vrot.lane.b32.xlu0 %v267, 64
    %v1424 = vpop.permute.xlu0 %1423
    %v1427 = vsel %vm272, %v965, 0
    %1429 = vmatprep.subr.mxu0 0.0
    %1430 = vmatpush1.msra.mxu0 %v1424
    %1431 = vmatprep.subr.mxu0 0.0
    %1432 = vmatpush1.msra.mxu0 0.0
    %1433 = vmatprep.subr.mxu0 0.0
    %1434 = vmatpush1.msra.mxu0 0.0
    %1435 = vmatprep.subr.mxu0 0.0
    %1436 = vmatpush1.msra.mxu0 0.0
    %1437 = vmatprep.subr.mxu0 0.0
    %1438 = vmatpush1.msra.mxu0 0.0
    %1439 = vmatprep.subr.mxu0 0.0
    %1440 = vmatpush1.msra.mxu0 0.0
    %1441 = vmatprep.subr.mxu0 0.0
    %1442 = vmatpush1.msra.mxu0 0.0
    %1443 = vmatprep.subr.mxu0 0.0
    %1444 = vmatpush1.msra.mxu0 0.0
    %1445 = vmatprep.subr.mxu0 0.0
    %1446 = vmatpush1.msra.mxu0 0.0
    %1447 = vmatprep.subr.mxu0 0.0
    %1448 = vmatpush1.msra.mxu0 0.0
    %1449 = vmatprep.subr.mxu0 0.0
    %1450 = vmatpush1.msra.mxu0 0.0
    %1451 = vmatprep.subr.mxu0 0.0
    %1452 = vmatpush1.msra.mxu0 0.0
    %1453 = vmatprep.subr.mxu0 0.0
    %1454 = vmatpush1.msra.mxu0 0.0
    %1455 = vmatprep.subr.mxu0 0.0
    %1456 = vmatpush1.msra.mxu0 0.0
    %1457 = vmatprep.subr.mxu0 0.0
    %1458 = vmatpush1.msra.mxu0 0.0
    %1459 = vmatprep.subr.mxu0 0.0
    %1460 = vmatpush1.msra.mxu0 0.0
    %1461 = vmatprep.subr.mxu0 0.0
    %1462 = vmatpush1.msra.mxu0 0.0
    %1463 = vmatprep.subr.mxu0 0.0
    %1464 = vmatpush1.msra.mxu0 0.0
    %1465 = vmatprep.subr.mxu0 0.0
    %1466 = vmatpush1.msra.mxu0 0.0
    %1467 = vmatprep.subr.mxu0 0.0
    %1468 = vmatpush1.msra.mxu0 0.0
    %1469 = vmatprep.subr.mxu0 0.0
    %1470 = vmatpush1.msra.mxu0 0.0
    %1471 = vmatprep.subr.mxu0 0.0
    %1472 = vmatpush1.msra.mxu0 0.0
    %1473 = vmatprep.subr.mxu0 0.0
    %1474 = vmatpush1.msra.mxu0 0.0
    %1475 = vmatprep.subr.mxu0 0.0
    %1476 = vmatpush1.msra.mxu0 0.0
    %1477 = vmatprep.subr.mxu0 0.0
    %1478 = vmatpush1.msra.mxu0 0.0
    %1479 = vmatprep.subr.mxu0 0.0
    %1480 = vmatpush1.msra.mxu0 0.0
    %1481 = vmatprep.subr.mxu0 0.0
    %1482 = vmatpush1.msra.mxu0 0.0
    %1483 = vmatprep.subr.mxu0 0.0
    %1484 = vmatpush1.msra.mxu0 0.0
    %1485 = vmatprep.subr.mxu0 0.0
    %1486 = vmatpush1.msra.mxu0 0.0
    %1487 = vmatprep.subr.mxu0 0.0
    %1488 = vmatpush1.msra.mxu0 0.0
    %1489 = vmatprep.subr.mxu0 0.0
    %1490 = vmatpush1.msra.mxu0 0.0
    %1491 = vmatprep.subr.mxu0 0.0
    %1492 = vmatpush1.msra.mxu0 0.0
    %1493 = vmatprep.mubr.f32.mxu0 0.0
    %1494 = vmatmul.mubr.f32.gmra.mrb[0].mxu0 %v1427
    %v1495 = vpop.f32.mrb[0].mxu0
    %v1496 = vadd.f32 0.0, %v1495
    %v1497 = vpop.f32.mrb[0].mxu0
    %1498 = vdwg.mxu0
    %1499 = vrot.lane.b32.xlu0 %v269, 64
    %v1500 = vpop.permute.xlu0 %1499
    %v1503 = vsel %vm272, %v966, 0
    %1505 = vmatprep.subr.mxu0 0.0
    %1506 = vmatpush1.msra.mxu0 %v1500
    %1507 = vmatprep.subr.mxu0 0.0
    %1508 = vmatpush1.msra.mxu0 0.0
    %1509 = vmatprep.subr.mxu0 0.0
    %1510 = vmatpush1.msra.mxu0 0.0
    %1511 = vmatprep.subr.mxu0 0.0
    %1512 = vmatpush1.msra.mxu0 0.0
    %1513 = vmatprep.subr.mxu0 0.0
    %1514 = vmatpush1.msra.mxu0 0.0
    %1515 = vmatprep.subr.mxu0 0.0
    %1516 = vmatpush1.msra.mxu0 0.0
    %1517 = vmatprep.subr.mxu0 0.0
    %1518 = vmatpush1.msra.mxu0 0.0
    %1519 = vmatprep.subr.mxu0 0.0
    %1520 = vmatpush1.msra.mxu0 0.0
    %1521 = vmatprep.subr.mxu0 0.0
    %1522 = vmatpush1.msra.mxu0 0.0
    %1523 = vmatprep.subr.mxu0 0.0
    %1524 = vmatpush1.msra.mxu0 0.0
    %1525 = vmatprep.subr.mxu0 0.0
    %1526 = vmatpush1.msra.mxu0 0.0
    %1527 = vmatprep.subr.mxu0 0.0
    %1528 = vmatpush1.msra.mxu0 0.0
    %1529 = vmatprep.subr.mxu0 0.0
    %1530 = vmatpush1.msra.mxu0 0.0
    %1531 = vmatprep.subr.mxu0 0.0
    %1532 = vmatpush1.msra.mxu0 0.0
    %1533 = vmatprep.subr.mxu0 0.0
    %1534 = vmatpush1.msra.mxu0 0.0
    %1535 = vmatprep.subr.mxu0 0.0
    %1536 = vmatpush1.msra.mxu0 0.0
    %1537 = vmatprep.subr.mxu0 0.0
    %1538 = vmatpush1.msra.mxu0 0.0
    %1539 = vmatprep.subr.mxu0 0.0
    %1540 = vmatpush1.msra.mxu0 0.0
    %1541 = vmatprep.subr.mxu0 0.0
    %1542 = vmatpush1.msra.mxu0 0.0
    %1543 = vmatprep.subr.mxu0 0.0
    %1544 = vmatpush1.msra.mxu0 0.0
    %1545 = vmatprep.subr.mxu0 0.0
    %1546 = vmatpush1.msra.mxu0 0.0
    %1547 = vmatprep.subr.mxu0 0.0
    %1548 = vmatpush1.msra.mxu0 0.0
    %1549 = vmatprep.subr.mxu0 0.0
    %1550 = vmatpush1.msra.mxu0 0.0
    %1551 = vmatprep.subr.mxu0 0.0
    %1552 = vmatpush1.msra.mxu0 0.0
    %1553 = vmatprep.subr.mxu0 0.0
    %1554 = vmatpush1.msra.mxu0 0.0
    %1555 = vmatprep.subr.mxu0 0.0
    %1556 = vmatpush1.msra.mxu0 0.0
    %1557 = vmatprep.subr.mxu0 0.0
    %1558 = vmatpush1.msra.mxu0 0.0
    %1559 = vmatprep.subr.mxu0 0.0
    %1560 = vmatpush1.msra.mxu0 0.0
    %1561 = vmatprep.subr.mxu0 0.0
    %1562 = vmatpush1.msra.mxu0 0.0
    %1563 = vmatprep.subr.mxu0 0.0
    %1564 = vmatpush1.msra.mxu0 0.0
    %1565 = vmatprep.subr.mxu0 0.0
    %1566 = vmatpush1.msra.mxu0 0.0
    %1567 = vmatprep.subr.mxu0 0.0
    %1568 = vmatpush1.msra.mxu0 0.0
    %1569 = vmatprep.mubr.f32.mxu0 0.0
    %1570 = vmatmul.mubr.f32.gmra.mrb[0].mxu0 %v1503
    %v1571 = vpop.f32.mrb[0].mxu0
    %v1572 = vadd.f32 0.0, %v1571
    %v1573 = vpop.f32.mrb[0].mxu0
    %1574 = vdwg.mxu0
    %1576 = vrot.lane.b32.xlu0 %v115, 32
    %v1577 = vpop.permute.xlu0 %1576
    %v1580 = vsel %vm272, %v1040, 0
    %v1583 = vsel %vm272, %v1116, 0
    %1585 = vmatprep.subr.mxu0 0.0
    %1586 = vmatpush1.msra.mxu0 %v1577
    %1587 = vmatprep.subr.mxu0 0.0
    %1588 = vmatpush1.msra.mxu0 0.0
    %1589 = vmatprep.subr.mxu0 0.0
    %1590 = vmatpush1.msra.mxu0 0.0
    %1591 = vmatprep.subr.mxu0 0.0
    %1592 = vmatpush1.msra.mxu0 0.0
    %1593 = vmatprep.subr.mxu0 0.0
    %1594 = vmatpush1.msra.mxu0 0.0
    %1595 = vmatprep.subr.mxu0 0.0
    %1596 = vmatpush1.msra.mxu0 0.0
    %1597 = vmatprep.subr.mxu0 0.0
    %1598 = vmatpush1.msra.mxu0 0.0
    %1599 = vmatprep.subr.mxu0 0.0
    %1600 = vmatpush1.msra.mxu0 0.0
    %1601 = vmatprep.subr.mxu0 0.0
    %1602 = vmatpush1.msra.mxu0 0.0
    %1603 = vmatprep.subr.mxu0 0.0
    %1604 = vmatpush1.msra.mxu0 0.0
    %1605 = vmatprep.subr.mxu0 0.0
    %1606 = vmatpush1.msra.mxu0 0.0
    %1607 = vmatprep.subr.mxu0 0.0
    %1608 = vmatpush1.msra.mxu0 0.0
    %1609 = vmatprep.subr.mxu0 0.0
    %1610 = vmatpush1.msra.mxu0 0.0
    %1611 = vmatprep.subr.mxu0 0.0
    %1612 = vmatpush1.msra.mxu0 0.0
    %1613 = vmatprep.subr.mxu0 0.0
    %1614 = vmatpush1.msra.mxu0 0.0
    %1615 = vmatprep.subr.mxu0 0.0
    %1616 = vmatpush1.msra.mxu0 0.0
    %1617 = vmatprep.subr.mxu0 0.0
    %1618 = vmatpush1.msra.mxu0 0.0
    %1619 = vmatprep.subr.mxu0 0.0
    %1620 = vmatpush1.msra.mxu0 0.0
    %1621 = vmatprep.subr.mxu0 0.0
    %1622 = vmatpush1.msra.mxu0 0.0
    %1623 = vmatprep.subr.mxu0 0.0
    %1624 = vmatpush1.msra.mxu0 0.0
    %1625 = vmatprep.subr.mxu0 0.0
    %1626 = vmatpush1.msra.mxu0 0.0
    %1627 = vmatprep.subr.mxu0 0.0
    %1628 = vmatpush1.msra.mxu0 0.0
    %1629 = vmatprep.subr.mxu0 0.0
    %1630 = vmatpush1.msra.mxu0 0.0
    %1631 = vmatprep.subr.mxu0 0.0
    %1632 = vmatpush1.msra.mxu0 0.0
    %1633 = vmatprep.subr.mxu0 0.0
    %1634 = vmatpush1.msra.mxu0 0.0
    %1635 = vmatprep.subr.mxu0 0.0
    %1636 = vmatpush1.msra.mxu0 0.0
    %1637 = vmatprep.subr.mxu0 0.0
    %1638 = vmatpush1.msra.mxu0 0.0
    %1639 = vmatprep.subr.mxu0 0.0
    %1640 = vmatpush1.msra.mxu0 0.0
    %1641 = vmatprep.subr.mxu0 0.0
    %1642 = vmatpush1.msra.mxu0 0.0
    %1643 = vmatprep.subr.mxu0 0.0
    %1644 = vmatpush1.msra.mxu0 0.0
    %1645 = vmatprep.subr.mxu0 0.0
    %1646 = vmatpush1.msra.mxu0 0.0
    %1647 = vmatprep.subr.mxu0 0.0
    %1648 = vmatpush1.msra.mxu0 0.0
    %1649 = vmatprep.mubr.f32.mxu0 0.0
    %1650 = vmatmul.mubr.f32.gmra.mrb[0].mxu0 %v1580
    %v1651 = vpop.f32.mrb[0].mxu0
    %v1652 = vadd.f32 0.0, %v1651
    %v1653 = vpop.f32.mrb[0].mxu0
    %1654 = vmatprep.mubr.f32.mxu0 0.0
    %1655 = vmatmul.mubr.f32.gmra.mrb[0].mxu0 %v1583
    %v1656 = vpop.f32.mrb[0].mxu0
    %v1657 = vadd.f32 0.0, %v1656
    %v1658 = vpop.f32.mrb[0].mxu0
    %1659 = vdwg.mxu0
    %1661 = vrot.lane.b32.xlu0 %v117, 32
    %v1662 = vpop.permute.xlu0 %1661
    %v1665 = vsel %vm272, %v1192, 0
    %v1668 = vsel %vm272, %v1268, 0
    %1670 = vmatprep.subr.mxu0 0.0
    %1671 = vmatpush1.msra.mxu0 %v1662
    %1672 = vmatprep.subr.mxu0 0.0
    %1673 = vmatpush1.msra.mxu0 0.0
    %1674 = vmatprep.subr.mxu0 0.0
    %1675 = vmatpush1.msra.mxu0 0.0
    %1676 = vmatprep.subr.mxu0 0.0
    %1677 = vmatpush1.msra.mxu0 0.0
    %1678 = vmatprep.subr.mxu0 0.0
    %1679 = vmatpush1.msra.mxu0 0.0
    %1680 = vmatprep.subr.mxu0 0.0
    %1681 = vmatpush1.msra.mxu0 0.0
    %1682 = vmatprep.subr.mxu0 0.0
    %1683 = vmatpush1.msra.mxu0 0.0
    %1684 = vmatprep.subr.mxu0 0.0
    %1685 = vmatpush1.msra.mxu0 0.0
    %1686 = vmatprep.subr.mxu0 0.0
    %1687 = vmatpush1.msra.mxu0 0.0
    %1688 = vmatprep.subr.mxu0 0.0
    %1689 = vmatpush1.msra.mxu0 0.0
    %1690 = vmatprep.subr.mxu0 0.0
    %1691 = vmatpush1.msra.mxu0 0.0
    %1692 = vmatprep.subr.mxu0 0.0
    %1693 = vmatpush1.msra.mxu0 0.0
    %1694 = vmatprep.subr.mxu0 0.0
    %1695 = vmatpush1.msra.mxu0 0.0
    %1696 = vmatprep.subr.mxu0 0.0
    %1697 = vmatpush1.msra.mxu0 0.0
    %1698 = vmatprep.subr.mxu0 0.0
    %1699 = vmatpush1.msra.mxu0 0.0
    %1700 = vmatprep.subr.mxu0 0.0
    %1701 = vmatpush1.msra.mxu0 0.0
    %1702 = vmatprep.subr.mxu0 0.0
    %1703 = vmatpush1.msra.mxu0 0.0
    %1704 = vmatprep.subr.mxu0 0.0
    %1705 = vmatpush1.msra.mxu0 0.0
    %1706 = vmatprep.subr.mxu0 0.0
    %1707 = vmatpush1.msra.mxu0 0.0
    %1708 = vmatprep.subr.mxu0 0.0
    %1709 = vmatpush1.msra.mxu0 0.0
    %1710 = vmatprep.subr.mxu0 0.0
    %1711 = vmatpush1.msra.mxu0 0.0
    %1712 = vmatprep.subr.mxu0 0.0
    %1713 = vmatpush1.msra.mxu0 0.0
    %1714 = vmatprep.subr.mxu0 0.0
    %1715 = vmatpush1.msra.mxu0 0.0
    %1716 = vmatprep.subr.mxu0 0.0
    %1717 = vmatpush1.msra.mxu0 0.0
    %1718 = vmatprep.subr.mxu0 0.0
    %1719 = vmatpush1.msra.mxu0 0.0
    %1720 = vmatprep.subr.mxu0 0.0
    %1721 = vmatpush1.msra.mxu0 0.0
    %1722 = vmatprep.subr.mxu0 0.0
    %1723 = vmatpush1.msra.mxu0 0.0
    %1724 = vmatprep.subr.mxu0 0.0
    %1725 = vmatpush1.msra.mxu0 0.0
    %1726 = vmatprep.subr.mxu0 0.0
    %1727 = vmatpush1.msra.mxu0 0.0
    %1728 = vmatprep.subr.mxu0 0.0
    %1729 = vmatpush1.msra.mxu0 0.0
    %1730 = vmatprep.subr.mxu0 0.0
    %1731 = vmatpush1.msra.mxu0 0.0
    %1732 = vmatprep.subr.mxu0 0.0
    %1733 = vmatpush1.msra.mxu0 0.0
    %1734 = vmatprep.mubr.f32.mxu0 0.0
    %1735 = vmatmul.mubr.f32.gmra.mrb[0].mxu0 %v1665
    %v1736 = vpop.f32.mrb[0].mxu0
    %v1737 = vadd.f32 0.0, %v1736
    %v1738 = vpop.f32.mrb[0].mxu0
    %1739 = vmatprep.mubr.f32.mxu0 0.0
    %1740 = vmatmul.mubr.f32.gmra.mrb[0].mxu0 %v1668
    %v1741 = vpop.f32.mrb[0].mxu0
    %v1742 = vadd.f32 0.0, %v1741
    %v1743 = vpop.f32.mrb[0].mxu0
    %1744 = vdwg.mxu0
    %1746 = vrot.lane.b32.xlu0 %v119, 32
    %v1747 = vpop.permute.xlu0 %1746
    %v1750 = vsel %vm272, %v1344, 0
    %v1753 = vsel %vm272, %v1420, 0
    %1755 = vmatprep.subr.mxu0 0.0
    %1756 = vmatpush1.msra.mxu0 %v1747
    %1757 = vmatprep.subr.mxu0 0.0
    %1758 = vmatpush1.msra.mxu0 0.0
    %1759 = vmatprep.subr.mxu0 0.0
    %1760 = vmatpush1.msra.mxu0 0.0
    %1761 = vmatprep.subr.mxu0 0.0
    %1762 = vmatpush1.msra.mxu0 0.0
    %1763 = vmatprep.subr.mxu0 0.0
    %1764 = vmatpush1.msra.mxu0 0.0
    %1765 = vmatprep.subr.mxu0 0.0
    %1766 = vmatpush1.msra.mxu0 0.0
    %1767 = vmatprep.subr.mxu0 0.0
    %1768 = vmatpush1.msra.mxu0 0.0
    %1769 = vmatprep.subr.mxu0 0.0
    %1770 = vmatpush1.msra.mxu0 0.0
    %1771 = vmatprep.subr.mxu0 0.0
    %1772 = vmatpush1.msra.mxu0 0.0
    %1773 = vmatprep.subr.mxu0 0.0
    %1774 = vmatpush1.msra.mxu0 0.0
    %1775 = vmatprep.subr.mxu0 0.0
    %1776 = vmatpush1.msra.mxu0 0.0
    %1777 = vmatprep.subr.mxu0 0.0
    %1778 = vmatpush1.msra.mxu0 0.0
    %1779 = vmatprep.subr.mxu0 0.0
    %1780 = vmatpush1.msra.mxu0 0.0
    %1781 = vmatprep.subr.mxu0 0.0
    %1782 = vmatpush1.msra.mxu0 0.0
    %1783 = vmatprep.subr.mxu0 0.0
    %1784 = vmatpush1.msra.mxu0 0.0
    %1785 = vmatprep.subr.mxu0 0.0
    %1786 = vmatpush1.msra.mxu0 0.0
    %1787 = vmatprep.subr.mxu0 0.0
    %1788 = vmatpush1.msra.mxu0 0.0
    %1789 = vmatprep.subr.mxu0 0.0
    %1790 = vmatpush1.msra.mxu0 0.0
    %1791 = vmatprep.subr.mxu0 0.0
    %1792 = vmatpush1.msra.mxu0 0.0
    %1793 = vmatprep.subr.mxu0 0.0
    %1794 = vmatpush1.msra.mxu0 0.0
    %1795 = vmatprep.subr.mxu0 0.0
    %1796 = vmatpush1.msra.mxu0 0.0
    %1797 = vmatprep.subr.mxu0 0.0
    %1798 = vmatpush1.msra.mxu0 0.0
    %1799 = vmatprep.subr.mxu0 0.0
    %1800 = vmatpush1.msra.mxu0 0.0
    %1801 = vmatprep.subr.mxu0 0.0
    %1802 = vmatpush1.msra.mxu0 0.0
    %1803 = vmatprep.subr.mxu0 0.0
    %1804 = vmatpush1.msra.mxu0 0.0
    %1805 = vmatprep.subr.mxu0 0.0
    %1806 = vmatpush1.msra.mxu0 0.0
    %1807 = vmatprep.subr.mxu0 0.0
    %1808 = vmatpush1.msra.mxu0 0.0
    %1809 = vmatprep.subr.mxu0 0.0
    %1810 = vmatpush1.msra.mxu0 0.0
    %1811 = vmatprep.subr.mxu0 0.0
    %1812 = vmatpush1.msra.mxu0 0.0
    %1813 = vmatprep.subr.mxu0 0.0
    %1814 = vmatpush1.msra.mxu0 0.0
    %1815 = vmatprep.subr.mxu0 0.0
    %1816 = vmatpush1.msra.mxu0 0.0
    %1817 = vmatprep.subr.mxu0 0.0
    %1818 = vmatpush1.msra.mxu0 0.0
    %1819 = vmatprep.mubr.f32.mxu0 0.0
    %1820 = vmatmul.mubr.f32.gmra.mrb[0].mxu0 %v1750
    %v1821 = vpop.f32.mrb[0].mxu0
    %v1822 = vadd.f32 0.0, %v1821
    %v1823 = vpop.f32.mrb[0].mxu0
    %1824 = vmatprep.mubr.f32.mxu0 0.0
    %1825 = vmatmul.mubr.f32.gmra.mrb[0].mxu0 %v1753
    %v1826 = vpop.f32.mrb[0].mxu0
    %v1827 = vadd.f32 0.0, %v1826
    %v1828 = vpop.f32.mrb[0].mxu0
    %1829 = vdwg.mxu0
    %1831 = vrot.lane.b32.xlu0 %v121, 32
    %v1832 = vpop.permute.xlu0 %1831
    %v1835 = vsel %vm272, %v1496, 0
    %v1838 = vsel %vm272, %v1572, 0
    %1840 = vmatprep.subr.mxu0 0.0
    %1841 = vmatpush1.msra.mxu0 %v1832
    %1842 = vmatprep.subr.mxu0 0.0
    %1843 = vmatpush1.msra.mxu0 0.0
    %1844 = vmatprep.subr.mxu0 0.0
    %1845 = vmatpush1.msra.mxu0 0.0
    %1846 = vmatprep.subr.mxu0 0.0
    %1847 = vmatpush1.msra.mxu0 0.0
    %1848 = vmatprep.subr.mxu0 0.0
    %1849 = vmatpush1.msra.mxu0 0.0
    %1850 = vmatprep.subr.mxu0 0.0
    %1851 = vmatpush1.msra.mxu0 0.0
    %1852 = vmatprep.subr.mxu0 0.0
    %1853 = vmatpush1.msra.mxu0 0.0
    %1854 = vmatprep.subr.mxu0 0.0
    %1855 = vmatpush1.msra.mxu0 0.0
    %1856 = vmatprep.subr.mxu0 0.0
    %1857 = vmatpush1.msra.mxu0 0.0
    %1858 = vmatprep.subr.mxu0 0.0
    %1859 = vmatpush1.msra.mxu0 0.0
    %1860 = vmatprep.subr.mxu0 0.0
    %1861 = vmatpush1.msra.mxu0 0.0
    %1862 = vmatprep.subr.mxu0 0.0
    %1863 = vmatpush1.msra.mxu0 0.0
    %1864 = vmatprep.subr.mxu0 0.0
    %1865 = vmatpush1.msra.mxu0 0.0
    %1866 = vmatprep.subr.mxu0 0.0
    %1867 = vmatpush1.msra.mxu0 0.0
    %1868 = vmatprep.subr.mxu0 0.0
    %1869 = vmatpush1.msra.mxu0 0.0
    %1870 = vmatprep.subr.mxu0 0.0
    %1871 = vmatpush1.msra.mxu0 0.0
    %1872 = vmatprep.subr.mxu0 0.0
    %1873 = vmatpush1.msra.mxu0 0.0
    %1874 = vmatprep.subr.mxu0 0.0
    %1875 = vmatpush1.msra.mxu0 0.0
    %1876 = vmatprep.subr.mxu0 0.0
    %1877 = vmatpush1.msra.mxu0 0.0
    %1878 = vmatprep.subr.mxu0 0.0
    %1879 = vmatpush1.msra.mxu0 0.0
    %1880 = vmatprep.subr.mxu0 0.0
    %1881 = vmatpush1.msra.mxu0 0.0
    %1882 = vmatprep.subr.mxu0 0.0
    %1883 = vmatpush1.msra.mxu0 0.0
    %1884 = vmatprep.subr.mxu0 0.0
    %1885 = vmatpush1.msra.mxu0 0.0
    %1886 = vmatprep.subr.mxu0 0.0
    %1887 = vmatpush1.msra.mxu0 0.0
    %1888 = vmatprep.subr.mxu0 0.0
    %1889 = vmatpush1.msra.mxu0 0.0
    %1890 = vmatprep.subr.mxu0 0.0
    %1891 = vmatpush1.msra.mxu0 0.0
    %1892 = vmatprep.subr.mxu0 0.0
    %1893 = vmatpush1.msra.mxu0 0.0
    %1894 = vmatprep.subr.mxu0 0.0
    %1895 = vmatpush1.msra.mxu0 0.0
    %1896 = vmatprep.subr.mxu0 0.0
    %1897 = vmatpush1.msra.mxu0 0.0
    %1898 = vmatprep.subr.mxu0 0.0
    %1899 = vmatpush1.msra.mxu0 0.0
    %1900 = vmatprep.subr.mxu0 0.0
    %1901 = vmatpush1.msra.mxu0 0.0
    %1902 = vmatprep.subr.mxu0 0.0
    %1903 = vmatpush1.msra.mxu0 0.0
    %1904 = vmatprep.mubr.f32.mxu0 0.0
    %1905 = vmatmul.mubr.f32.gmra.mrb[0].mxu0 %v1835
    %v1906 = vpop.f32.mrb[0].mxu0
    %v1907 = vadd.f32 0.0, %v1906
    %v1908 = vpop.f32.mrb[0].mxu0
    %1909 = vmatprep.mubr.f32.mxu0 0.0
    %1910 = vmatmul.mubr.f32.gmra.mrb[0].mxu0 %v1838
    %v1911 = vpop.f32.mrb[0].mxu0
    %v1912 = vadd.f32 0.0, %v1911
    %v1913 = vpop.f32.mrb[0].mxu0
    %1914 = vdwg.mxu0
    %v1915 = vsel %vm33, %v1652, 0.0
    %v1916 = vsel %vm33, %v1737, 0.0
    %v1917 = vadd.f32 %v1915, %v1916
    %v1918 = vsel %vm33, %v1822, 0.0
    %v1919 = vadd.f32 %v1917, %v1918
    %v1920 = vsel %vm33, %v1907, 0.0
    %v1921 = vadd.f32 %v1919, %v1920
    %v1922 = vsel %vm33, %v1657, 0.0
    %v1923 = vsel %vm33, %v1742, 0.0
    %v1924 = vadd.f32 %v1922, %v1923
    %v1925 = vsel %vm33, %v1827, 0.0
    %v1926 = vadd.f32 %v1924, %v1925
    %v1927 = vsel %vm33, %v1912, 0.0
    %v1928 = vadd.f32 %v1926, %v1927
    %v1929 = vadd.f32 %v107, %v1921
    %v1930 = vadd.f32 %v112, %v1928
    %1932 = vrot.lane.b32.xlu0 %v174, 32
    %v1933 = vpop.permute.xlu0 %1932
    %v1935 = vadd.f32 %v1929, %v1933
    %v1936 = vadd.f32 %v1930, %v1933
    %v1937 = vsel %vm33, %v1935, 0.0
    %1938 = vadd.xlane.f32.xlu0 %v1937
    %v1939 = vpop.xlane.xlu0 %1938
    %v1940 = vsel %vm33, %v1936, 0.0
    %1941 = vadd.xlane.f32.xlu0 %v1940
    %v1942 = vpop.xlane.xlu0 %1941
    %v1943 = vmul.f32 %v1939, %v138
    %v1944 = vmul.f32 %v1942, %v138
    %v1945 = vsub.f32 %v1935, %v1943
    %v1946 = vsub.f32 %v1936, %v1944
    %v1947 = vmul.f32 %v1945, %v1945
    %v1948 = vmul.f32 %v1946, %v1946
    %v1949 = vsel %vm33, %v1947, 0.0
    %1950 = vadd.xlane.f32.xlu0 %v1949
    %v1951 = vpop.xlane.xlu0 %1950
    %v1952 = vsel %vm33, %v1948, 0.0
    %1953 = vadd.xlane.f32.xlu0 %v1952
    %v1954 = vpop.xlane.xlu0 %1953
    %v1955 = vmul.f32 %v1951, %v138
    %v1956 = vmul.f32 %v1954, %v138
    %v1957 = vadd.f32 %v1955, 1e-05
    %v1958 = vadd.f32 %v1956, 1e-05
    %v1959 = vrsqrt.pop %v1957
    %v1960 = vrsqrt.pop %v1958
    %v1961 = vmul.f32 %v1945, %v1959
    %v1962 = vmul.f32 %v1946, %v1960
    %1963 = vrot.lane.b32.xlu0 %v162, 64
    %v1964 = vpop.permute.xlu0 %1963
    %v1966 = vmul.f32 %v1961, %v1964
    %v1967 = vmul.f32 %v1962, %v1964
    %1968 = vrot.lane.b32.xlu0 %v162, 32
    %v1969 = vpop.permute.xlu0 %1968
    %v1971 = vadd.f32 %v1966, %v1969
    %v1972 = vadd.f32 %v1967, %v1969
    %v1973 = vlaneseq
    %v1974 = vshrl.u32 %v1973, 7
    %v1975 = vsub.s32 2, %v1974
    %v1976 = vrot.slane %v123, %v1975
    %v1978 = vsel %vm33, %v1971, 0
    %v1981 = vsel %vm33, %v1972, 0
    %1983 = vmatprep.subr.mxu0 0.0
    %1984 = vmatpush1.msra.mxu0 %v116
    %1985 = vmatprep.subr.mxu0 0.0
    %1986 = vmatpush1.msra.mxu0 %v118
    %1987 = vmatprep.subr.mxu0 0.0
    %1988 = vmatpush1.msra.mxu0 %v120
    %1989 = vmatprep.subr.mxu0 0.0
    %1990 = vmatpush1.msra.mxu0 %v122
    %1991 = vmatprep.subr.mxu0 0.0
    %1992 = vmatpush1.msra.mxu0 0.0
    %1993 = vmatprep.subr.mxu0 0.0
    %1994 = vmatpush1.msra.mxu0 0.0
    %1995 = vmatprep.subr.mxu0 0.0
    %1996 = vmatpush1.msra.mxu0 0.0
    %1997 = vmatprep.subr.mxu0 0.0
    %1998 = vmatpush1.msra.mxu0 0.0
    %1999 = vmatprep.subr.mxu0 0.0
    %2000 = vmatpush1.msra.mxu0 0.0
    %2001 = vmatprep.subr.mxu0 0.0
    %2002 = vmatpush1.msra.mxu0 0.0
    %2003 = vmatprep.subr.mxu0 0.0
    %2004 = vmatpush1.msra.mxu0 0.0
    %2005 = vmatprep.subr.mxu0 0.0
    %2006 = vmatpush1.msra.mxu0 0.0
    %2007 = vmatprep.subr.mxu0 0.0
    %2008 = vmatpush1.msra.mxu0 0.0
    %2009 = vmatprep.subr.mxu0 0.0
    %2010 = vmatpush1.msra.mxu0 0.0
    %2011 = vmatprep.subr.mxu0 0.0
    %2012 = vmatpush1.msra.mxu0 0.0
    %2013 = vmatprep.subr.mxu0 0.0
    %2014 = vmatpush1.msra.mxu0 0.0
    %2015 = vmatprep.subr.mxu0 0.0
    %2016 = vmatpush1.msra.mxu0 0.0
    %2017 = vmatprep.subr.mxu0 0.0
    %2018 = vmatpush1.msra.mxu0 0.0
    %2019 = vmatprep.subr.mxu0 0.0
    %2020 = vmatpush1.msra.mxu0 0.0
    %2021 = vmatprep.subr.mxu0 0.0
    %2022 = vmatpush1.msra.mxu0 0.0
    %2023 = vmatprep.subr.mxu0 0.0
    %2024 = vmatpush1.msra.mxu0 0.0
    %2025 = vmatprep.subr.mxu0 0.0
    %2026 = vmatpush1.msra.mxu0 0.0
    %2027 = vmatprep.subr.mxu0 0.0
    %2028 = vmatpush1.msra.mxu0 0.0
    %2029 = vmatprep.subr.mxu0 0.0
    %2030 = vmatpush1.msra.mxu0 0.0
    %2031 = vmatprep.subr.mxu0 0.0
    %2032 = vmatpush1.msra.mxu0 0.0
    %2033 = vmatprep.subr.mxu0 0.0
    %2034 = vmatpush1.msra.mxu0 0.0
    %2035 = vmatprep.subr.mxu0 0.0
    %2036 = vmatpush1.msra.mxu0 0.0
    %2037 = vmatprep.subr.mxu0 0.0
    %2038 = vmatpush1.msra.mxu0 0.0
    %2039 = vmatprep.subr.mxu0 0.0
    %2040 = vmatpush1.msra.mxu0 0.0
    %2041 = vmatprep.subr.mxu0 0.0
    %2042 = vmatpush1.msra.mxu0 0.0
    %2043 = vmatprep.subr.mxu0 0.0
    %2044 = vmatpush1.msra.mxu0 0.0
    %2045 = vmatprep.subr.mxu0 0.0
    %2046 = vmatpush1.msra.mxu0 0.0
    %2047 = vmatprep.mubr.f32.mxu0 0.0
    %2048 = vmatmul.mubr.f32.gmra.mrb[0].mxu0 %v1978
    %v2049 = vpop.f32.mrb[0].mxu0
    %v2050 = vadd.f32 %v1976, %v2049
    %v2051 = vpop.f32.mrb[0].mxu0
    %2052 = vmatprep.mubr.f32.mxu0 0.0
    %2053 = vmatmul.mubr.f32.gmra.mrb[0].mxu0 %v1981
    %v2054 = vpop.f32.mrb[0].mxu0
    %v2055 = vadd.f32 %v1976, %v2054
    %v2056 = vpop.f32.mrb[0].mxu0
    %2057 = vdwg.mxu0
    %v2058 = vmax.f32 %v2050, 0.0
    %v2059 = vmax.f32 %v2055, 0.0
    %vm2060 = vcmask 523264
    %v2062 = vsel %vm2060, %v2058, 0
    %v2065 = vsel %vm2060, %v2059, 0
    %2067 = vmatprep.subr.mxu0 0.0
    %2068 = vmatpush1.msra.mxu0 %v124
    %2069 = vmatprep.subr.mxu0 0.0
    %2070 = vmatpush1.msra.mxu0 %v125
    %2071 = vmatprep.subr.mxu0 0.0
    %2072 = vmatpush1.msra.mxu0 %v126
    %2073 = vmatprep.subr.mxu0 0.0
    %2074 = vmatpush1.msra.mxu0 %v127
    %2075 = vmatprep.subr.mxu0 0.0
    %2076 = vmatpush1.msra.mxu0 %v128
    %2077 = vmatprep.subr.mxu0 0.0
    %2078 = vmatpush1.msra.mxu0 %v129
    %2079 = vmatprep.subr.mxu0 0.0
    %2080 = vmatpush1.msra.mxu0 %v130
    %2081 = vmatprep.subr.mxu0 0.0
    %2082 = vmatpush1.msra.mxu0 %v131
    %2083 = vmatprep.subr.mxu0 0.0
    %2084 = vmatpush1.msra.mxu0 0.0
    %2085 = vmatprep.subr.mxu0 0.0
    %2086 = vmatpush1.msra.mxu0 0.0
    %2087 = vmatprep.subr.mxu0 0.0
    %2088 = vmatpush1.msra.mxu0 0.0
    %2089 = vmatprep.subr.mxu0 0.0
    %2090 = vmatpush1.msra.mxu0 0.0
    %2091 = vmatprep.subr.mxu0 0.0
    %2092 = vmatpush1.msra.mxu0 0.0
    %2093 = vmatprep.subr.mxu0 0.0
    %2094 = vmatpush1.msra.mxu0 0.0
    %2095 = vmatprep.subr.mxu0 0.0
    %2096 = vmatpush1.msra.mxu0 0.0
    %2097 = vmatprep.subr.mxu0 0.0
    %2098 = vmatpush1.msra.mxu0 0.0
    %2099 = vmatprep.subr.mxu0 0.0
    %2100 = vmatpush1.msra.mxu0 0.0
    %2101 = vmatprep.subr.mxu0 0.0
    %2102 = vmatpush1.msra.mxu0 0.0
    %2103 = vmatprep.subr.mxu0 0.0
    %2104 = vmatpush1.msra.mxu0 0.0
    %2105 = vmatprep.subr.mxu0 0.0
    %2106 = vmatpush1.msra.mxu0 0.0
    %2107 = vmatprep.subr.mxu0 0.0
    %2108 = vmatpush1.msra.mxu0 0.0
    %2109 = vmatprep.subr.mxu0 0.0
    %2110 = vmatpush1.msra.mxu0 0.0
    %2111 = vmatprep.subr.mxu0 0.0
    %2112 = vmatpush1.msra.mxu0 0.0
    %2113 = vmatprep.subr.mxu0 0.0
    %2114 = vmatpush1.msra.mxu0 0.0
    %2115 = vmatprep.subr.mxu0 0.0
    %2116 = vmatpush1.msra.mxu0 0.0
    %2117 = vmatprep.subr.mxu0 0.0
    %2118 = vmatpush1.msra.mxu0 0.0
    %2119 = vmatprep.subr.mxu0 0.0
    %2120 = vmatpush1.msra.mxu0 0.0
    %2121 = vmatprep.subr.mxu0 0.0
    %2122 = vmatpush1.msra.mxu0 0.0
    %2123 = vmatprep.subr.mxu0 0.0
    %2124 = vmatpush1.msra.mxu0 0.0
    %2125 = vmatprep.subr.mxu0 0.0
    %2126 = vmatpush1.msra.mxu0 0.0
    %2127 = vmatprep.subr.mxu0 0.0
    %2128 = vmatpush1.msra.mxu0 0.0
    %2129 = vmatprep.subr.mxu0 0.0
    %2130 = vmatpush1.msra.mxu0 0.0
    %2131 = vmatprep.mubr.f32.mxu0 0.0
    %2132 = vmatmul.mubr.f32.gmra.mrb[0].mxu0 %v2062
    %v2133 = vpop.f32.mrb[0].mxu0
    %v2134 = vadd.f32 0.0, %v2133
    %v2135 = vpop.f32.mrb[0].mxu0
    %2136 = vmatprep.mubr.f32.mxu0 0.0
    %2137 = vmatmul.mubr.f32.gmra.mrb[0].mxu0 %v2065
    %v2138 = vpop.f32.mrb[0].mxu0
    %v2139 = vadd.f32 0.0, %v2138
    %v2140 = vpop.f32.mrb[0].mxu0
    %2141 = vdwg.mxu0
    %v2142 = vadd.f32 %v1935, %v2134
    %v2143 = vadd.f32 %v1936, %v2139
    %2145 = vrot.lane.b32.xlu0 %v1976, 64
    %v2146 = vpop.permute.xlu0 %2145
    %v2148 = vadd.f32 %v2142, %v2146
    %v2149 = vadd.f32 %v2143, %v2146
    %s2150 = scalar_lea.vmem %s2, 64
    %v2151 = vld [vmem:[%s2150] sm:$0xff]
    %v2152 = vld [vmem:[%s2150 + $0x8] sm:$0xff]
    %v2153 = vld [vmem:[%s2150 + $0x10] sm:$0xff]
    %v2154 = vld [vmem:[%s2150 + $0x18] sm:$0xff]
    %v2155 = vld [vmem:[%s2150 + $0x20] sm:$0xff]
    %v2156 = vld [vmem:[%s2150 + $0x28] sm:$0xff]
    %v2157 = vld [vmem:[%s2150 + $0x30] sm:$0xff]
    %v2158 = vld [vmem:[%s2150 + $0x38] sm:$0xff]
    %s2159 = scalar_lea.vmem %s4, 4
    %v2160 = vld [vmem:[%s2159] sm:$0x7]
    %s2161 = scalar_lea.vmem %s3, 64
    %v2162 = vld [vmem:[%s2161] sm:$0xff]
    %v2163 = vld [vmem:[%s2161 + $0x8] sm:$0xff]
    %v2164 = vld [vmem:[%s2161 + $0x10] sm:$0xff]
    %v2165 = vld [vmem:[%s2161 + $0x18] sm:$0xff]
    %v2166 = vld [vmem:[%s2161 + $0x20] sm:$0xff]
    %v2167 = vld [vmem:[%s2161 + $0x28] sm:$0xff]
    %v2168 = vld [vmem:[%s2161 + $0x30] sm:$0xff]
    %v2169 = vld [vmem:[%s2161 + $0x38] sm:$0xff]
    %v2170 = vsel %vm33, %v2148, 0.0
    %2171 = vadd.xlane.f32.xlu0 %v2170
    %v2172 = vpop.xlane.xlu0 %2171
    %v2173 = vsel %vm33, %v2149, 0.0
    %2174 = vadd.xlane.f32.xlu0 %v2173
    %v2175 = vpop.xlane.xlu0 %2174
    %v2176 = vmul.f32 %v2172, %v138
    %v2177 = vmul.f32 %v2175, %v138
    %v2178 = vsub.f32 %v2148, %v2176
    %v2179 = vsub.f32 %v2149, %v2177
    %v2180 = vmul.f32 %v2178, %v2178
    %v2181 = vmul.f32 %v2179, %v2179
    %v2182 = vsel %vm33, %v2180, 0.0
    %2183 = vadd.xlane.f32.xlu0 %v2182
    %v2184 = vpop.xlane.xlu0 %2183
    %v2185 = vsel %vm33, %v2181, 0.0
    %2186 = vadd.xlane.f32.xlu0 %v2185
    %v2187 = vpop.xlane.xlu0 %2186
    %v2188 = vmul.f32 %v2184, %v138
    %v2189 = vmul.f32 %v2187, %v138
    %v2190 = vadd.f32 %v2188, 1e-05
    %v2191 = vadd.f32 %v2189, 1e-05
    %v2192 = vrsqrt.pop %v2190
    %v2193 = vrsqrt.pop %v2191
    %v2194 = vmul.f32 %v2178, %v2192
    %v2195 = vmul.f32 %v2179, %v2193
    %v2196 = vlaneseq
    %v2197 = vshrl.u32 %v2196, 7
    %v2198 = vsub.s32 0, %v2197
    %v2199 = vrot.slane %v2160, %v2198
    %v2200 = vmul.f32 %v2194, %v2199
    %v2201 = vmul.f32 %v2195, %v2199
    %2203 = vrot.lane.b32.xlu0 %v2199, 96
    %v2204 = vpop.permute.xlu0 %2203
    %v2206 = vadd.f32 %v2200, %v2204
    %v2207 = vadd.f32 %v2201, %v2204
    %v2208 = vlaneseq
    %v2209 = vshrl.u32 %v2208, 7
    %v2210 = vsub.s32 1, %v2209
    %v2211 = vrot.slane %v2160, %v2210
    %v2213 = vsel %vm33, %v2206, 0
    %v2216 = vsel %vm33, %v2207, 0
    %2218 = vmatprep.subr.mxu0 0.0
    %2219 = vmatpush1.msra.mxu0 %v2151
    %2220 = vmatprep.subr.mxu0 0.0
    %2221 = vmatpush1.msra.mxu0 %v2153
    %2222 = vmatprep.subr.mxu0 0.0
    %2223 = vmatpush1.msra.mxu0 %v2155
    %2224 = vmatprep.subr.mxu0 0.0
    %2225 = vmatpush1.msra.mxu0 %v2157
    %2226 = vmatprep.subr.mxu0 0.0
    %2227 = vmatpush1.msra.mxu0 0.0
    %2228 = vmatprep.subr.mxu0 0.0
    %2229 = vmatpush1.msra.mxu0 0.0
    %2230 = vmatprep.subr.mxu0 0.0
    %2231 = vmatpush1.msra.mxu0 0.0
    %2232 = vmatprep.subr.mxu0 0.0
    %2233 = vmatpush1.msra.mxu0 0.0
    %2234 = vmatprep.subr.mxu0 0.0
    %2235 = vmatpush1.msra.mxu0 0.0
    %2236 = vmatprep.subr.mxu0 0.0
    %2237 = vmatpush1.msra.mxu0 0.0
    %2238 = vmatprep.subr.mxu0 0.0
    %2239 = vmatpush1.msra.mxu0 0.0
    %2240 = vmatprep.subr.mxu0 0.0
    %2241 = vmatpush1.msra.mxu0 0.0
    %2242 = vmatprep.subr.mxu0 0.0
    %2243 = vmatpush1.msra.mxu0 0.0
    %2244 = vmatprep.subr.mxu0 0.0
    %2245 = vmatpush1.msra.mxu0 0.0
    %2246 = vmatprep.subr.mxu0 0.0
    %2247 = vmatpush1.msra.mxu0 0.0
    %2248 = vmatprep.subr.mxu0 0.0
    %2249 = vmatpush1.msra.mxu0 0.0
    %2250 = vmatprep.subr.mxu0 0.0
    %2251 = vmatpush1.msra.mxu0 0.0
    %2252 = vmatprep.subr.mxu0 0.0
    %2253 = vmatpush1.msra.mxu0 0.0
    %2254 = vmatprep.subr.mxu0 0.0
    %2255 = vmatpush1.msra.mxu0 0.0
    %2256 = vmatprep.subr.mxu0 0.0
    %2257 = vmatpush1.msra.mxu0 0.0
    %2258 = vmatprep.subr.mxu0 0.0
    %2259 = vmatpush1.msra.mxu0 0.0
    %2260 = vmatprep.subr.mxu0 0.0
    %2261 = vmatpush1.msra.mxu0 0.0
    %2262 = vmatprep.subr.mxu0 0.0
    %2263 = vmatpush1.msra.mxu0 0.0
    %2264 = vmatprep.subr.mxu0 0.0
    %2265 = vmatpush1.msra.mxu0 0.0
    %2266 = vmatprep.subr.mxu0 0.0
    %2267 = vmatpush1.msra.mxu0 0.0
    %2268 = vmatprep.subr.mxu0 0.0
    %2269 = vmatpush1.msra.mxu0 0.0
    %2270 = vmatprep.subr.mxu0 0.0
    %2271 = vmatpush1.msra.mxu0 0.0
    %2272 = vmatprep.subr.mxu0 0.0
    %2273 = vmatpush1.msra.mxu0 0.0
    %2274 = vmatprep.subr.mxu0 0.0
    %2275 = vmatpush1.msra.mxu0 0.0
    %2276 = vmatprep.subr.mxu0 0.0
    %2277 = vmatpush1.msra.mxu0 0.0
    %2278 = vmatprep.subr.mxu0 0.0
    %2279 = vmatpush1.msra.mxu0 0.0
    %2280 = vmatprep.subr.mxu0 0.0
    %2281 = vmatpush1.msra.mxu0 0.0
    %2282 = vmatprep.mubr.f32.mxu0 0.0
    %2283 = vmatmul.mubr.f32.gmra.mrb[0].mxu0 %v2213
    %v2284 = vpop.f32.mrb[0].mxu0
    %v2285 = vadd.f32 %v2211, %v2284
    %v2286 = vpop.f32.mrb[0].mxu0
    %2287 = vmatprep.mubr.f32.mxu0 0.0
    %2288 = vmatmul.mubr.f32.gmra.mrb[0].mxu0 %v2216
    %v2289 = vpop.f32.mrb[0].mxu0
    %v2290 = vadd.f32 %v2211, %v2289
    %v2291 = vpop.f32.mrb[0].mxu0
    %2292 = vdwg.mxu0
    %2295 = vrot.lane.b32.xlu0 %v2285, 120
    %v2296 = vpop.permute.xlu0 %2295
    %2297 = vrot.lane.b32.xlu0 %v2290, 120
    %v2298 = vpop.permute.xlu0 %2297
    %2299 = vrot.lane.b32.xlu0 %v2285, 112
    %v2300 = vpop.permute.xlu0 %2299
    %2301 = vrot.lane.b32.xlu0 %v2290, 112
    %v2302 = vpop.permute.xlu0 %2301
    %2303 = vrot.lane.b32.xlu0 %v2285, 104
    %v2304 = vpop.permute.xlu0 %2303
    %2305 = vrot.lane.b32.xlu0 %v2290, 104
    %v2306 = vpop.permute.xlu0 %2305
    %2307 = vrot.lane.b32.xlu0 %v2285, 96
    %v2308 = vpop.permute.xlu0 %2307
    %v2309 = vsel %vm272, %v2285, 0
    %v2311 = vsel %vm272, %v2308, 0
    %2313 = vmatprep.subr.mxu0 0.0
    %2314 = vmatpush1.xpose.msra.mxu0 %v2311
    %2315 = vmatprep.subr.mxu0 0.0
    %2316 = vmatpush1.xpose.msra.mxu0 0.0
    %2317 = vmatprep.subr.mxu0 0.0
    %2318 = vmatpush1.xpose.msra.mxu0 0.0
    %2319 = vmatprep.subr.mxu0 0.0
    %2320 = vmatpush1.xpose.msra.mxu0 0.0
    %2321 = vmatprep.subr.mxu0 0.0
    %2322 = vmatpush1.xpose.msra.mxu0 0.0
    %2323 = vmatprep.subr.mxu0 0.0
    %2324 = vmatpush1.xpose.msra.mxu0 0.0
    %2325 = vmatprep.subr.mxu0 0.0
    %2326 = vmatpush1.xpose.msra.mxu0 0.0
    %2327 = vmatprep.subr.mxu0 0.0
    %2328 = vmatpush1.xpose.msra.mxu0 0.0
    %2329 = vmatprep.subr.mxu0 0.0
    %2330 = vmatpush1.xpose.msra.mxu0 0.0
    %2331 = vmatprep.subr.mxu0 0.0
    %2332 = vmatpush1.xpose.msra.mxu0 0.0
    %2333 = vmatprep.subr.mxu0 0.0
    %2334 = vmatpush1.xpose.msra.mxu0 0.0
    %2335 = vmatprep.subr.mxu0 0.0
    %2336 = vmatpush1.xpose.msra.mxu0 0.0
    %2337 = vmatprep.subr.mxu0 0.0
    %2338 = vmatpush1.xpose.msra.mxu0 0.0
    %2339 = vmatprep.subr.mxu0 0.0
    %2340 = vmatpush1.xpose.msra.mxu0 0.0
    %2341 = vmatprep.subr.mxu0 0.0
    %2342 = vmatpush1.xpose.msra.mxu0 0.0
    %2343 = vmatprep.subr.mxu0 0.0
    %2344 = vmatpush1.xpose.msra.mxu0 0.0
    %2345 = vmatprep.subr.mxu0 0.0
    %2346 = vmatpush1.xpose.msra.mxu0 0.0
    %2347 = vmatprep.subr.mxu0 0.0
    %2348 = vmatpush1.xpose.msra.mxu0 0.0
    %2349 = vmatprep.subr.mxu0 0.0
    %2350 = vmatpush1.xpose.msra.mxu0 0.0
    %2351 = vmatprep.subr.mxu0 0.0
    %2352 = vmatpush1.xpose.msra.mxu0 0.0
    %2353 = vmatprep.subr.mxu0 0.0
    %2354 = vmatpush1.xpose.msra.mxu0 0.0
    %2355 = vmatprep.subr.mxu0 0.0
    %2356 = vmatpush1.xpose.msra.mxu0 0.0
    %2357 = vmatprep.subr.mxu0 0.0
    %2358 = vmatpush1.xpose.msra.mxu0 0.0
    %2359 = vmatprep.subr.mxu0 0.0
    %2360 = vmatpush1.xpose.msra.mxu0 0.0
    %2361 = vmatprep.subr.mxu0 0.0
    %2362 = vmatpush1.xpose.msra.mxu0 0.0
    %2363 = vmatprep.subr.mxu0 0.0
    %2364 = vmatpush1.xpose.msra.mxu0 0.0
    %2365 = vmatprep.subr.mxu0 0.0
    %2366 = vmatpush1.xpose.msra.mxu0 0.0
    %2367 = vmatprep.subr.mxu0 0.0
    %2368 = vmatpush1.xpose.msra.mxu0 0.0
    %2369 = vmatprep.subr.mxu0 0.0
    %2370 = vmatpush1.xpose.msra.mxu0 0.0
    %2371 = vmatprep.subr.mxu0 0.0
    %2372 = vmatpush1.xpose.msra.mxu0 0.0
    %2373 = vmatprep.subr.mxu0 0.0
    %2374 = vmatpush1.xpose.msra.mxu0 0.0
    %2375 = vmatprep.subr.mxu0 0.0
    %2376 = vmatpush1.xpose.msra.mxu0 0.0
    %2377 = vmatprep.mubr.f32.mxu0 0.0
    %2378 = vmatmul.mubr.f32.gmra.mrb[0].mxu0 %v2309
    %v2379 = vpop.f32.mrb[0].mxu0
    %v2380 = vadd.f32 0.0, %v2379
    %v2381 = vpop.f32.mrb[0].mxu0
    %2382 = vdwg.mxu0
    %2383 = vrot.lane.b32.xlu0 %v2290, 96
    %v2384 = vpop.permute.xlu0 %2383
    %v2385 = vsel %vm272, %v2290, 0
    %v2387 = vsel %vm272, %v2384, 0
    %2389 = vmatprep.subr.mxu0 0.0
    %2390 = vmatpush1.xpose.msra.mxu0 %v2387
    %2391 = vmatprep.subr.mxu0 0.0
    %2392 = vmatpush1.xpose.msra.mxu0 0.0
    %2393 = vmatprep.subr.mxu0 0.0
    %2394 = vmatpush1.xpose.msra.mxu0 0.0
    %2395 = vmatprep.subr.mxu0 0.0
    %2396 = vmatpush1.xpose.msra.mxu0 0.0
    %2397 = vmatprep.subr.mxu0 0.0
    %2398 = vmatpush1.xpose.msra.mxu0 0.0
    %2399 = vmatprep.subr.mxu0 0.0
    %2400 = vmatpush1.xpose.msra.mxu0 0.0
    %2401 = vmatprep.subr.mxu0 0.0
    %2402 = vmatpush1.xpose.msra.mxu0 0.0
    %2403 = vmatprep.subr.mxu0 0.0
    %2404 = vmatpush1.xpose.msra.mxu0 0.0
    %2405 = vmatprep.subr.mxu0 0.0
    %2406 = vmatpush1.xpose.msra.mxu0 0.0
    %2407 = vmatprep.subr.mxu0 0.0
    %2408 = vmatpush1.xpose.msra.mxu0 0.0
    %2409 = vmatprep.subr.mxu0 0.0
    %2410 = vmatpush1.xpose.msra.mxu0 0.0
    %2411 = vmatprep.subr.mxu0 0.0
    %2412 = vmatpush1.xpose.msra.mxu0 0.0
    %2413 = vmatprep.subr.mxu0 0.0
    %2414 = vmatpush1.xpose.msra.mxu0 0.0
    %2415 = vmatprep.subr.mxu0 0.0
    %2416 = vmatpush1.xpose.msra.mxu0 0.0
    %2417 = vmatprep.subr.mxu0 0.0
    %2418 = vmatpush1.xpose.msra.mxu0 0.0
    %2419 = vmatprep.subr.mxu0 0.0
    %2420 = vmatpush1.xpose.msra.mxu0 0.0
    %2421 = vmatprep.subr.mxu0 0.0
    %2422 = vmatpush1.xpose.msra.mxu0 0.0
    %2423 = vmatprep.subr.mxu0 0.0
    %2424 = vmatpush1.xpose.msra.mxu0 0.0
    %2425 = vmatprep.subr.mxu0 0.0
    %2426 = vmatpush1.xpose.msra.mxu0 0.0
    %2427 = vmatprep.subr.mxu0 0.0
    %2428 = vmatpush1.xpose.msra.mxu0 0.0
    %2429 = vmatprep.subr.mxu0 0.0
    %2430 = vmatpush1.xpose.msra.mxu0 0.0
    %2431 = vmatprep.subr.mxu0 0.0
    %2432 = vmatpush1.xpose.msra.mxu0 0.0
    %2433 = vmatprep.subr.mxu0 0.0
    %2434 = vmatpush1.xpose.msra.mxu0 0.0
    %2435 = vmatprep.subr.mxu0 0.0
    %2436 = vmatpush1.xpose.msra.mxu0 0.0
    %2437 = vmatprep.subr.mxu0 0.0
    %2438 = vmatpush1.xpose.msra.mxu0 0.0
    %2439 = vmatprep.subr.mxu0 0.0
    %2440 = vmatpush1.xpose.msra.mxu0 0.0
    %2441 = vmatprep.subr.mxu0 0.0
    %2442 = vmatpush1.xpose.msra.mxu0 0.0
    %2443 = vmatprep.subr.mxu0 0.0
    %2444 = vmatpush1.xpose.msra.mxu0 0.0
    %2445 = vmatprep.subr.mxu0 0.0
    %2446 = vmatpush1.xpose.msra.mxu0 0.0
    %2447 = vmatprep.subr.mxu0 0.0
    %2448 = vmatpush1.xpose.msra.mxu0 0.0
    %2449 = vmatprep.subr.mxu0 0.0
    %2450 = vmatpush1.xpose.msra.mxu0 0.0
    %2451 = vmatprep.subr.mxu0 0.0
    %2452 = vmatpush1.xpose.msra.mxu0 0.0
    %2453 = vmatprep.mubr.f32.mxu0 0.0
    %2454 = vmatmul.mubr.f32.gmra.mrb[0].mxu0 %v2385
    %v2455 = vpop.f32.mrb[0].mxu0
    %v2456 = vadd.f32 0.0, %v2455
    %v2457 = vpop.f32.mrb[0].mxu0
    %2458 = vdwg.mxu0
    %2459 = vrot.lane.b32.xlu0 %v2296, 96
    %v2460 = vpop.permute.xlu0 %2459
    %v2461 = vsel %vm272, %v2296, 0
    %v2463 = vsel %vm272, %v2460, 0
    %2465 = vmatprep.subr.mxu0 0.0
    %2466 = vmatpush1.xpose.msra.mxu0 %v2463
    %2467 = vmatprep.subr.mxu0 0.0
    %2468 = vmatpush1.xpose.msra.mxu0 0.0
    %2469 = vmatprep.subr.mxu0 0.0
    %2470 = vmatpush1.xpose.msra.mxu0 0.0
    %2471 = vmatprep.subr.mxu0 0.0
    %2472 = vmatpush1.xpose.msra.mxu0 0.0
    %2473 = vmatprep.subr.mxu0 0.0
    %2474 = vmatpush1.xpose.msra.mxu0 0.0
    %2475 = vmatprep.subr.mxu0 0.0
    %2476 = vmatpush1.xpose.msra.mxu0 0.0
    %2477 = vmatprep.subr.mxu0 0.0
    %2478 = vmatpush1.xpose.msra.mxu0 0.0
    %2479 = vmatprep.subr.mxu0 0.0
    %2480 = vmatpush1.xpose.msra.mxu0 0.0
    %2481 = vmatprep.subr.mxu0 0.0
    %2482 = vmatpush1.xpose.msra.mxu0 0.0
    %2483 = vmatprep.subr.mxu0 0.0
    %2484 = vmatpush1.xpose.msra.mxu0 0.0
    %2485 = vmatprep.subr.mxu0 0.0
    %2486 = vmatpush1.xpose.msra.mxu0 0.0
    %2487 = vmatprep.subr.mxu0 0.0
    %2488 = vmatpush1.xpose.msra.mxu0 0.0
    %2489 = vmatprep.subr.mxu0 0.0
    %2490 = vmatpush1.xpose.msra.mxu0 0.0
    %2491 = vmatprep.subr.mxu0 0.0
    %2492 = vmatpush1.xpose.msra.mxu0 0.0
    %2493 = vmatprep.subr.mxu0 0.0
    %2494 = vmatpush1.xpose.msra.mxu0 0.0
    %2495 = vmatprep.subr.mxu0 0.0
    %2496 = vmatpush1.xpose.msra.mxu0 0.0
    %2497 = vmatprep.subr.mxu0 0.0
    %2498 = vmatpush1.xpose.msra.mxu0 0.0
    %2499 = vmatprep.subr.mxu0 0.0
    %2500 = vmatpush1.xpose.msra.mxu0 0.0
    %2501 = vmatprep.subr.mxu0 0.0
    %2502 = vmatpush1.xpose.msra.mxu0 0.0
    %2503 = vmatprep.subr.mxu0 0.0
    %2504 = vmatpush1.xpose.msra.mxu0 0.0
    %2505 = vmatprep.subr.mxu0 0.0
    %2506 = vmatpush1.xpose.msra.mxu0 0.0
    %2507 = vmatprep.subr.mxu0 0.0
    %2508 = vmatpush1.xpose.msra.mxu0 0.0
    %2509 = vmatprep.subr.mxu0 0.0
    %2510 = vmatpush1.xpose.msra.mxu0 0.0
    %2511 = vmatprep.subr.mxu0 0.0
    %2512 = vmatpush1.xpose.msra.mxu0 0.0
    %2513 = vmatprep.subr.mxu0 0.0
    %2514 = vmatpush1.xpose.msra.mxu0 0.0
    %2515 = vmatprep.subr.mxu0 0.0
    %2516 = vmatpush1.xpose.msra.mxu0 0.0
    %2517 = vmatprep.subr.mxu0 0.0
    %2518 = vmatpush1.xpose.msra.mxu0 0.0
    %2519 = vmatprep.subr.mxu0 0.0
    %2520 = vmatpush1.xpose.msra.mxu0 0.0
    %2521 = vmatprep.subr.mxu0 0.0
    %2522 = vmatpush1.xpose.msra.mxu0 0.0
    %2523 = vmatprep.subr.mxu0 0.0
    %2524 = vmatpush1.xpose.msra.mxu0 0.0
    %2525 = vmatprep.subr.mxu0 0.0
    %2526 = vmatpush1.xpose.msra.mxu0 0.0
    %2527 = vmatprep.subr.mxu0 0.0
    %2528 = vmatpush1.xpose.msra.mxu0 0.0
    %2529 = vmatprep.mubr.f32.mxu0 0.0
    %2530 = vmatmul.mubr.f32.gmra.mrb[0].mxu0 %v2461
    %v2531 = vpop.f32.mrb[0].mxu0
    %v2532 = vadd.f32 0.0, %v2531
    %v2533 = vpop.f32.mrb[0].mxu0
    %2534 = vdwg.mxu0
    %2535 = vrot.lane.b32.xlu0 %v2298, 96
    %v2536 = vpop.permute.xlu0 %2535
    %v2537 = vsel %vm272, %v2298, 0
    %v2539 = vsel %vm272, %v2536, 0
    %2541 = vmatprep.subr.mxu0 0.0
    %2542 = vmatpush1.xpose.msra.mxu0 %v2539
    %2543 = vmatprep.subr.mxu0 0.0
    %2544 = vmatpush1.xpose.msra.mxu0 0.0
    %2545 = vmatprep.subr.mxu0 0.0
    %2546 = vmatpush1.xpose.msra.mxu0 0.0
    %2547 = vmatprep.subr.mxu0 0.0
    %2548 = vmatpush1.xpose.msra.mxu0 0.0
    %2549 = vmatprep.subr.mxu0 0.0
    %2550 = vmatpush1.xpose.msra.mxu0 0.0
    %2551 = vmatprep.subr.mxu0 0.0
    %2552 = vmatpush1.xpose.msra.mxu0 0.0
    %2553 = vmatprep.subr.mxu0 0.0
    %2554 = vmatpush1.xpose.msra.mxu0 0.0
    %2555 = vmatprep.subr.mxu0 0.0
    %2556 = vmatpush1.xpose.msra.mxu0 0.0
    %2557 = vmatprep.subr.mxu0 0.0
    %2558 = vmatpush1.xpose.msra.mxu0 0.0
    %2559 = vmatprep.subr.mxu0 0.0
    %2560 = vmatpush1.xpose.msra.mxu0 0.0
    %2561 = vmatprep.subr.mxu0 0.0
    %2562 = vmatpush1.xpose.msra.mxu0 0.0
    %2563 = vmatprep.subr.mxu0 0.0
    %2564 = vmatpush1.xpose.msra.mxu0 0.0
    %2565 = vmatprep.subr.mxu0 0.0
    %2566 = vmatpush1.xpose.msra.mxu0 0.0
    %2567 = vmatprep.subr.mxu0 0.0
    %2568 = vmatpush1.xpose.msra.mxu0 0.0
    %2569 = vmatprep.subr.mxu0 0.0
    %2570 = vmatpush1.xpose.msra.mxu0 0.0
    %2571 = vmatprep.subr.mxu0 0.0
    %2572 = vmatpush1.xpose.msra.mxu0 0.0
    %2573 = vmatprep.subr.mxu0 0.0
    %2574 = vmatpush1.xpose.msra.mxu0 0.0
    %2575 = vmatprep.subr.mxu0 0.0
    %2576 = vmatpush1.xpose.msra.mxu0 0.0
    %2577 = vmatprep.subr.mxu0 0.0
    %2578 = vmatpush1.xpose.msra.mxu0 0.0
    %2579 = vmatprep.subr.mxu0 0.0
    %2580 = vmatpush1.xpose.msra.mxu0 0.0
    %2581 = vmatprep.subr.mxu0 0.0
    %2582 = vmatpush1.xpose.msra.mxu0 0.0
    %2583 = vmatprep.subr.mxu0 0.0
    %2584 = vmatpush1.xpose.msra.mxu0 0.0
    %2585 = vmatprep.subr.mxu0 0.0
    %2586 = vmatpush1.xpose.msra.mxu0 0.0
    %2587 = vmatprep.subr.mxu0 0.0
    %2588 = vmatpush1.xpose.msra.mxu0 0.0
    %2589 = vmatprep.subr.mxu0 0.0
    %2590 = vmatpush1.xpose.msra.mxu0 0.0
    %2591 = vmatprep.subr.mxu0 0.0
    %2592 = vmatpush1.xpose.msra.mxu0 0.0
    %2593 = vmatprep.subr.mxu0 0.0
    %2594 = vmatpush1.xpose.msra.mxu0 0.0
    %2595 = vmatprep.subr.mxu0 0.0
    %2596 = vmatpush1.xpose.msra.mxu0 0.0
    %2597 = vmatprep.subr.mxu0 0.0
    %2598 = vmatpush1.xpose.msra.mxu0 0.0
    %2599 = vmatprep.subr.mxu0 0.0
    %2600 = vmatpush1.xpose.msra.mxu0 0.0
    %2601 = vmatprep.subr.mxu0 0.0
    %2602 = vmatpush1.xpose.msra.mxu0 0.0
    %2603 = vmatprep.subr.mxu0 0.0
    %2604 = vmatpush1.xpose.msra.mxu0 0.0
    %2605 = vmatprep.mubr.f32.mxu0 0.0
    %2606 = vmatmul.mubr.f32.gmra.mrb[0].mxu0 %v2537
    %v2607 = vpop.f32.mrb[0].mxu0
    %v2608 = vadd.f32 0.0, %v2607
    %v2609 = vpop.f32.mrb[0].mxu0
    %2610 = vdwg.mxu0
    %2611 = vrot.lane.b32.xlu0 %v2300, 96
    %v2612 = vpop.permute.xlu0 %2611
    %v2613 = vsel %vm272, %v2300, 0
    %v2615 = vsel %vm272, %v2612, 0
    %2617 = vmatprep.subr.mxu0 0.0
    %2618 = vmatpush1.xpose.msra.mxu0 %v2615
    %2619 = vmatprep.subr.mxu0 0.0
    %2620 = vmatpush1.xpose.msra.mxu0 0.0
    %2621 = vmatprep.subr.mxu0 0.0
    %2622 = vmatpush1.xpose.msra.mxu0 0.0
    %2623 = vmatprep.subr.mxu0 0.0
    %2624 = vmatpush1.xpose.msra.mxu0 0.0
    %2625 = vmatprep.subr.mxu0 0.0
    %2626 = vmatpush1.xpose.msra.mxu0 0.0
    %2627 = vmatprep.subr.mxu0 0.0
    %2628 = vmatpush1.xpose.msra.mxu0 0.0
    %2629 = vmatprep.subr.mxu0 0.0
    %2630 = vmatpush1.xpose.msra.mxu0 0.0
    %2631 = vmatprep.subr.mxu0 0.0
    %2632 = vmatpush1.xpose.msra.mxu0 0.0
    %2633 = vmatprep.subr.mxu0 0.0
    %2634 = vmatpush1.xpose.msra.mxu0 0.0
    %2635 = vmatprep.subr.mxu0 0.0
    %2636 = vmatpush1.xpose.msra.mxu0 0.0
    %2637 = vmatprep.subr.mxu0 0.0
    %2638 = vmatpush1.xpose.msra.mxu0 0.0
    %2639 = vmatprep.subr.mxu0 0.0
    %2640 = vmatpush1.xpose.msra.mxu0 0.0
    %2641 = vmatprep.subr.mxu0 0.0
    %2642 = vmatpush1.xpose.msra.mxu0 0.0
    %2643 = vmatprep.subr.mxu0 0.0
    %2644 = vmatpush1.xpose.msra.mxu0 0.0
    %2645 = vmatprep.subr.mxu0 0.0
    %2646 = vmatpush1.xpose.msra.mxu0 0.0
    %2647 = vmatprep.subr.mxu0 0.0
    %2648 = vmatpush1.xpose.msra.mxu0 0.0
    %2649 = vmatprep.subr.mxu0 0.0
    %2650 = vmatpush1.xpose.msra.mxu0 0.0
    %2651 = vmatprep.subr.mxu0 0.0
    %2652 = vmatpush1.xpose.msra.mxu0 0.0
    %2653 = vmatprep.subr.mxu0 0.0
    %2654 = vmatpush1.xpose.msra.mxu0 0.0
    %2655 = vmatprep.subr.mxu0 0.0
    %2656 = vmatpush1.xpose.msra.mxu0 0.0
    %2657 = vmatprep.subr.mxu0 0.0
    %2658 = vmatpush1.xpose.msra.mxu0 0.0
    %2659 = vmatprep.subr.mxu0 0.0
    %2660 = vmatpush1.xpose.msra.mxu0 0.0
    %2661 = vmatprep.subr.mxu0 0.0
    %2662 = vmatpush1.xpose.msra.mxu0 0.0
    %2663 = vmatprep.subr.mxu0 0.0
    %2664 = vmatpush1.xpose.msra.mxu0 0.0
    %2665 = vmatprep.subr.mxu0 0.0
    %2666 = vmatpush1.xpose.msra.mxu0 0.0
    %2667 = vmatprep.subr.mxu0 0.0
    %2668 = vmatpush1.xpose.msra.mxu0 0.0
    %2669 = vmatprep.subr.mxu0 0.0
    %2670 = vmatpush1.xpose.msra.mxu0 0.0
    %2671 = vmatprep.subr.mxu0 0.0
    %2672 = vmatpush1.xpose.msra.mxu0 0.0
    %2673 = vmatprep.subr.mxu0 0.0
    %2674 = vmatpush1.xpose.msra.mxu0 0.0
    %2675 = vmatprep.subr.mxu0 0.0
    %2676 = vmatpush1.xpose.msra.mxu0 0.0
    %2677 = vmatprep.subr.mxu0 0.0
    %2678 = vmatpush1.xpose.msra.mxu0 0.0
    %2679 = vmatprep.subr.mxu0 0.0
    %2680 = vmatpush1.xpose.msra.mxu0 0.0
    %2681 = vmatprep.mubr.f32.mxu0 0.0
    %2682 = vmatmul.mubr.f32.gmra.mrb[0].mxu0 %v2613
    %v2683 = vpop.f32.mrb[0].mxu0
    %v2684 = vadd.f32 0.0, %v2683
    %v2685 = vpop.f32.mrb[0].mxu0
    %2686 = vdwg.mxu0
    %2687 = vrot.lane.b32.xlu0 %v2302, 96
    %v2688 = vpop.permute.xlu0 %2687
    %v2689 = vsel %vm272, %v2302, 0
    %v2691 = vsel %vm272, %v2688, 0
    %2693 = vmatprep.subr.mxu0 0.0
    %2694 = vmatpush1.xpose.msra.mxu0 %v2691
    %2695 = vmatprep.subr.mxu0 0.0
    %2696 = vmatpush1.xpose.msra.mxu0 0.0
    %2697 = vmatprep.subr.mxu0 0.0
    %2698 = vmatpush1.xpose.msra.mxu0 0.0
    %2699 = vmatprep.subr.mxu0 0.0
    %2700 = vmatpush1.xpose.msra.mxu0 0.0
    %2701 = vmatprep.subr.mxu0 0.0
    %2702 = vmatpush1.xpose.msra.mxu0 0.0
    %2703 = vmatprep.subr.mxu0 0.0
    %2704 = vmatpush1.xpose.msra.mxu0 0.0
    %2705 = vmatprep.subr.mxu0 0.0
    %2706 = vmatpush1.xpose.msra.mxu0 0.0
    %2707 = vmatprep.subr.mxu0 0.0
    %2708 = vmatpush1.xpose.msra.mxu0 0.0
    %2709 = vmatprep.subr.mxu0 0.0
    %2710 = vmatpush1.xpose.msra.mxu0 0.0
    %2711 = vmatprep.subr.mxu0 0.0
    %2712 = vmatpush1.xpose.msra.mxu0 0.0
    %2713 = vmatprep.subr.mxu0 0.0
    %2714 = vmatpush1.xpose.msra.mxu0 0.0
    %2715 = vmatprep.subr.mxu0 0.0
    %2716 = vmatpush1.xpose.msra.mxu0 0.0
    %2717 = vmatprep.subr.mxu0 0.0
    %2718 = vmatpush1.xpose.msra.mxu0 0.0
    %2719 = vmatprep.subr.mxu0 0.0
    %2720 = vmatpush1.xpose.msra.mxu0 0.0
    %2721 = vmatprep.subr.mxu0 0.0
    %2722 = vmatpush1.xpose.msra.mxu0 0.0
    %2723 = vmatprep.subr.mxu0 0.0
    %2724 = vmatpush1.xpose.msra.mxu0 0.0
    %2725 = vmatprep.subr.mxu0 0.0
    %2726 = vmatpush1.xpose.msra.mxu0 0.0
    %2727 = vmatprep.subr.mxu0 0.0
    %2728 = vmatpush1.xpose.msra.mxu0 0.0
    %2729 = vmatprep.subr.mxu0 0.0
    %2730 = vmatpush1.xpose.msra.mxu0 0.0
    %2731 = vmatprep.subr.mxu0 0.0
    %2732 = vmatpush1.xpose.msra.mxu0 0.0
    %2733 = vmatprep.subr.mxu0 0.0
    %2734 = vmatpush1.xpose.msra.mxu0 0.0
    %2735 = vmatprep.subr.mxu0 0.0
    %2736 = vmatpush1.xpose.msra.mxu0 0.0
    %2737 = vmatprep.subr.mxu0 0.0
    %2738 = vmatpush1.xpose.msra.mxu0 0.0
    %2739 = vmatprep.subr.mxu0 0.0
    %2740 = vmatpush1.xpose.msra.mxu0 0.0
    %2741 = vmatprep.subr.mxu0 0.0
    %2742 = vmatpush1.xpose.msra.mxu0 0.0
    %2743 = vmatprep.subr.mxu0 0.0
    %2744 = vmatpush1.xpose.msra.mxu0 0.0
    %2745 = vmatprep.subr.mxu0 0.0
    %2746 = vmatpush1.xpose.msra.mxu0 0.0
    %2747 = vmatprep.subr.mxu0 0.0
    %2748 = vmatpush1.xpose.msra.mxu0 0.0
    %2749 = vmatprep.subr.mxu0 0.0
    %2750 = vmatpush1.xpose.msra.mxu0 0.0
    %2751 = vmatprep.subr.mxu0 0.0
    %2752 = vmatpush1.xpose.msra.mxu0 0.0
    %2753 = vmatprep.subr.mxu0 0.0
    %2754 = vmatpush1.xpose.msra.mxu0 0.0
    %2755 = vmatprep.subr.mxu0 0.0
    %2756 = vmatpush1.xpose.msra.mxu0 0.0
    %2757 = vmatprep.mubr.f32.mxu0 0.0
    %2758 = vmatmul.mubr.f32.gmra.mrb[0].mxu0 %v2689
    %v2759 = vpop.f32.mrb[0].mxu0
    %v2760 = vadd.f32 0.0, %v2759
    %v2761 = vpop.f32.mrb[0].mxu0
    %2762 = vdwg.mxu0
    %2763 = vrot.lane.b32.xlu0 %v2304, 96
    %v2764 = vpop.permute.xlu0 %2763
    %v2765 = vsel %vm272, %v2304, 0
    %v2767 = vsel %vm272, %v2764, 0
    %2769 = vmatprep.subr.mxu0 0.0
    %2770 = vmatpush1.xpose.msra.mxu0 %v2767
    %2771 = vmatprep.subr.mxu0 0.0
    %2772 = vmatpush1.xpose.msra.mxu0 0.0
    %2773 = vmatprep.subr.mxu0 0.0
    %2774 = vmatpush1.xpose.msra.mxu0 0.0
    %2775 = vmatprep.subr.mxu0 0.0
    %2776 = vmatpush1.xpose.msra.mxu0 0.0
    %2777 = vmatprep.subr.mxu0 0.0
    %2778 = vmatpush1.xpose.msra.mxu0 0.0
    %2779 = vmatprep.subr.mxu0 0.0
    %2780 = vmatpush1.xpose.msra.mxu0 0.0
    %2781 = vmatprep.subr.mxu0 0.0
    %2782 = vmatpush1.xpose.msra.mxu0 0.0
    %2783 = vmatprep.subr.mxu0 0.0
    %2784 = vmatpush1.xpose.msra.mxu0 0.0
    %2785 = vmatprep.subr.mxu0 0.0
    %2786 = vmatpush1.xpose.msra.mxu0 0.0
    %2787 = vmatprep.subr.mxu0 0.0
    %2788 = vmatpush1.xpose.msra.mxu0 0.0
    %2789 = vmatprep.subr.mxu0 0.0
    %2790 = vmatpush1.xpose.msra.mxu0 0.0
    %2791 = vmatprep.subr.mxu0 0.0
    %2792 = vmatpush1.xpose.msra.mxu0 0.0
    %2793 = vmatprep.subr.mxu0 0.0
    %2794 = vmatpush1.xpose.msra.mxu0 0.0
    %2795 = vmatprep.subr.mxu0 0.0
    %2796 = vmatpush1.xpose.msra.mxu0 0.0
    %2797 = vmatprep.subr.mxu0 0.0
    %2798 = vmatpush1.xpose.msra.mxu0 0.0
    %2799 = vmatprep.subr.mxu0 0.0
    %2800 = vmatpush1.xpose.msra.mxu0 0.0
    %2801 = vmatprep.subr.mxu0 0.0
    %2802 = vmatpush1.xpose.msra.mxu0 0.0
    %2803 = vmatprep.subr.mxu0 0.0
    %2804 = vmatpush1.xpose.msra.mxu0 0.0
    %2805 = vmatprep.subr.mxu0 0.0
    %2806 = vmatpush1.xpose.msra.mxu0 0.0
    %2807 = vmatprep.subr.mxu0 0.0
    %2808 = vmatpush1.xpose.msra.mxu0 0.0
    %2809 = vmatprep.subr.mxu0 0.0
    %2810 = vmatpush1.xpose.msra.mxu0 0.0
    %2811 = vmatprep.subr.mxu0 0.0
    %2812 = vmatpush1.xpose.msra.mxu0 0.0
    %2813 = vmatprep.subr.mxu0 0.0
    %2814 = vmatpush1.xpose.msra.mxu0 0.0
    %2815 = vmatprep.subr.mxu0 0.0
    %2816 = vmatpush1.xpose.msra.mxu0 0.0
    %2817 = vmatprep.subr.mxu0 0.0
    %2818 = vmatpush1.xpose.msra.mxu0 0.0
    %2819 = vmatprep.subr.mxu0 0.0
    %2820 = vmatpush1.xpose.msra.mxu0 0.0
    %2821 = vmatprep.subr.mxu0 0.0
    %2822 = vmatpush1.xpose.msra.mxu0 0.0
    %2823 = vmatprep.subr.mxu0 0.0
    %2824 = vmatpush1.xpose.msra.mxu0 0.0
    %2825 = vmatprep.subr.mxu0 0.0
    %2826 = vmatpush1.xpose.msra.mxu0 0.0
    %2827 = vmatprep.subr.mxu0 0.0
    %2828 = vmatpush1.xpose.msra.mxu0 0.0
    %2829 = vmatprep.subr.mxu0 0.0
    %2830 = vmatpush1.xpose.msra.mxu0 0.0
    %2831 = vmatprep.subr.mxu0 0.0
    %2832 = vmatpush1.xpose.msra.mxu0 0.0
    %2833 = vmatprep.mubr.f32.mxu0 0.0
    %2834 = vmatmul.mubr.f32.gmra.mrb[0].mxu0 %v2765
    %v2835 = vpop.f32.mrb[0].mxu0
    %v2836 = vadd.f32 0.0, %v2835
    %v2837 = vpop.f32.mrb[0].mxu0
    %2838 = vdwg.mxu0
    %2839 = vrot.lane.b32.xlu0 %v2306, 96
    %v2840 = vpop.permute.xlu0 %2839
    %v2841 = vsel %vm272, %v2306, 0
    %v2843 = vsel %vm272, %v2840, 0
    %2845 = vmatprep.subr.mxu0 0.0
    %2846 = vmatpush1.xpose.msra.mxu0 %v2843
    %2847 = vmatprep.subr.mxu0 0.0
    %2848 = vmatpush1.xpose.msra.mxu0 0.0
    %2849 = vmatprep.subr.mxu0 0.0
    %2850 = vmatpush1.xpose.msra.mxu0 0.0
    %2851 = vmatprep.subr.mxu0 0.0
    %2852 = vmatpush1.xpose.msra.mxu0 0.0
    %2853 = vmatprep.subr.mxu0 0.0
    %2854 = vmatpush1.xpose.msra.mxu0 0.0
    %2855 = vmatprep.subr.mxu0 0.0
    %2856 = vmatpush1.xpose.msra.mxu0 0.0
    %2857 = vmatprep.subr.mxu0 0.0
    %2858 = vmatpush1.xpose.msra.mxu0 0.0
    %2859 = vmatprep.subr.mxu0 0.0
    %2860 = vmatpush1.xpose.msra.mxu0 0.0
    %2861 = vmatprep.subr.mxu0 0.0
    %2862 = vmatpush1.xpose.msra.mxu0 0.0
    %2863 = vmatprep.subr.mxu0 0.0
    %2864 = vmatpush1.xpose.msra.mxu0 0.0
    %2865 = vmatprep.subr.mxu0 0.0
    %2866 = vmatpush1.xpose.msra.mxu0 0.0
    %2867 = vmatprep.subr.mxu0 0.0
    %2868 = vmatpush1.xpose.msra.mxu0 0.0
    %2869 = vmatprep.subr.mxu0 0.0
    %2870 = vmatpush1.xpose.msra.mxu0 0.0
    %2871 = vmatprep.subr.mxu0 0.0
    %2872 = vmatpush1.xpose.msra.mxu0 0.0
    %2873 = vmatprep.subr.mxu0 0.0
    %2874 = vmatpush1.xpose.msra.mxu0 0.0
    %2875 = vmatprep.subr.mxu0 0.0
    %2876 = vmatpush1.xpose.msra.mxu0 0.0
    %2877 = vmatprep.subr.mxu0 0.0
    %2878 = vmatpush1.xpose.msra.mxu0 0.0
    %2879 = vmatprep.subr.mxu0 0.0
    %2880 = vmatpush1.xpose.msra.mxu0 0.0
    %2881 = vmatprep.subr.mxu0 0.0
    %2882 = vmatpush1.xpose.msra.mxu0 0.0
    %2883 = vmatprep.subr.mxu0 0.0
    %2884 = vmatpush1.xpose.msra.mxu0 0.0
    %2885 = vmatprep.subr.mxu0 0.0
    %2886 = vmatpush1.xpose.msra.mxu0 0.0
    %2887 = vmatprep.subr.mxu0 0.0
    %2888 = vmatpush1.xpose.msra.mxu0 0.0
    %2889 = vmatprep.subr.mxu0 0.0
    %2890 = vmatpush1.xpose.msra.mxu0 0.0
    %2891 = vmatprep.subr.mxu0 0.0
    %2892 = vmatpush1.xpose.msra.mxu0 0.0
    %2893 = vmatprep.subr.mxu0 0.0
    %2894 = vmatpush1.xpose.msra.mxu0 0.0
    %2895 = vmatprep.subr.mxu0 0.0
    %2896 = vmatpush1.xpose.msra.mxu0 0.0
    %2897 = vmatprep.subr.mxu0 0.0
    %2898 = vmatpush1.xpose.msra.mxu0 0.0
    %2899 = vmatprep.subr.mxu0 0.0
    %2900 = vmatpush1.xpose.msra.mxu0 0.0
    %2901 = vmatprep.subr.mxu0 0.0
    %2902 = vmatpush1.xpose.msra.mxu0 0.0
    %2903 = vmatprep.subr.mxu0 0.0
    %2904 = vmatpush1.xpose.msra.mxu0 0.0
    %2905 = vmatprep.subr.mxu0 0.0
    %2906 = vmatpush1.xpose.msra.mxu0 0.0
    %2907 = vmatprep.subr.mxu0 0.0
    %2908 = vmatpush1.xpose.msra.mxu0 0.0
    %2909 = vmatprep.mubr.f32.mxu0 0.0
    %2910 = vmatmul.mubr.f32.gmra.mrb[0].mxu0 %v2841
    %v2911 = vpop.f32.mrb[0].mxu0
    %v2912 = vadd.f32 0.0, %v2911
    %v2913 = vpop.f32.mrb[0].mxu0
    %2914 = vdwg.mxu0
    %v2915 = vsel %vm272, %v2380, -inf
    %2916 = vmax.xlane.f32.xlu0 %v2915
    %v2917 = vpop.xlane.xlu0 %2916
    %v2918 = vsel %vm272, %v2456, -inf
    %2919 = vmax.xlane.f32.xlu0 %v2918
    %v2920 = vpop.xlane.xlu0 %2919
    %v2921 = vsel %vm272, %v2532, -inf
    %2922 = vmax.xlane.f32.xlu0 %v2921
    %v2923 = vpop.xlane.xlu0 %2922
    %v2924 = vsel %vm272, %v2608, -inf
    %2925 = vmax.xlane.f32.xlu0 %v2924
    %v2926 = vpop.xlane.xlu0 %2925
    %v2927 = vsel %vm272, %v2684, -inf
    %2928 = vmax.xlane.f32.xlu0 %v2927
    %v2929 = vpop.xlane.xlu0 %2928
    %v2930 = vsel %vm272, %v2760, -inf
    %2931 = vmax.xlane.f32.xlu0 %v2930
    %v2932 = vpop.xlane.xlu0 %2931
    %v2933 = vsel %vm272, %v2836, -inf
    %2934 = vmax.xlane.f32.xlu0 %v2933
    %v2935 = vpop.xlane.xlu0 %2934
    %v2936 = vsel %vm272, %v2912, -inf
    %2937 = vmax.xlane.f32.xlu0 %v2936
    %v2938 = vpop.xlane.xlu0 %2937
    %v2939 = vsub.f32 %v2380, %v2917
    %v2940 = vsub.f32 %v2456, %v2920
    %v2941 = vsub.f32 %v2532, %v2923
    %v2942 = vsub.f32 %v2608, %v2926
    %v2943 = vsub.f32 %v2684, %v2929
    %v2944 = vsub.f32 %v2760, %v2932
    %v2945 = vsub.f32 %v2836, %v2935
    %v2946 = vsub.f32 %v2912, %v2938
    %v2947 = vmul.f32 %v2939, 1.442695
    %v2948 = vpow.pop %v2947
    %v2949 = vmul.f32 %v2940, 1.442695
    %v2950 = vpow.pop %v2949
    %v2951 = vmul.f32 %v2941, 1.442695
    %v2952 = vpow.pop %v2951
    %v2953 = vmul.f32 %v2942, 1.442695
    %v2954 = vpow.pop %v2953
    %v2955 = vmul.f32 %v2943, 1.442695
    %v2956 = vpow.pop %v2955
    %v2957 = vmul.f32 %v2944, 1.442695
    %v2958 = vpow.pop %v2957
    %v2959 = vmul.f32 %v2945, 1.442695
    %v2960 = vpow.pop %v2959
    %v2961 = vmul.f32 %v2946, 1.442695
    %v2962 = vpow.pop %v2961
    %v2963 = vsel %vm272, %v2948, 0.0
    %2964 = vadd.xlane.f32.xlu0 %v2963
    %v2965 = vpop.xlane.xlu0 %2964
    %v2966 = vsel %vm272, %v2950, 0.0
    %2967 = vadd.xlane.f32.xlu0 %v2966
    %v2968 = vpop.xlane.xlu0 %2967
    %v2969 = vsel %vm272, %v2952, 0.0
    %2970 = vadd.xlane.f32.xlu0 %v2969
    %v2971 = vpop.xlane.xlu0 %2970
    %v2972 = vsel %vm272, %v2954, 0.0
    %2973 = vadd.xlane.f32.xlu0 %v2972
    %v2974 = vpop.xlane.xlu0 %2973
    %v2975 = vsel %vm272, %v2956, 0.0
    %2976 = vadd.xlane.f32.xlu0 %v2975
    %v2977 = vpop.xlane.xlu0 %2976
    %v2978 = vsel %vm272, %v2958, 0.0
    %2979 = vadd.xlane.f32.xlu0 %v2978
    %v2980 = vpop.xlane.xlu0 %2979
    %v2981 = vsel %vm272, %v2960, 0.0
    %2982 = vadd.xlane.f32.xlu0 %v2981
    %v2983 = vpop.xlane.xlu0 %2982
    %v2984 = vsel %vm272, %v2962, 0.0
    %2985 = vadd.xlane.f32.xlu0 %v2984
    %v2986 = vpop.xlane.xlu0 %2985
    %v2987 = vrcp.pop %v2965
    %v2988 = vrcp.pop %v2968
    %v2989 = vrcp.pop %v2971
    %v2990 = vrcp.pop %v2974
    %v2991 = vrcp.pop %v2977
    %v2992 = vrcp.pop %v2980
    %v2993 = vrcp.pop %v2983
    %v2994 = vrcp.pop %v2986
    %v2995 = vmul.f32 %v2948, %v2987
    %v2996 = vmul.f32 %v2950, %v2988
    %v2997 = vmul.f32 %v2952, %v2989
    %v2998 = vmul.f32 %v2954, %v2990
    %v2999 = vmul.f32 %v2956, %v2991
    %v3000 = vmul.f32 %v2958, %v2992
    %v3001 = vmul.f32 %v2960, %v2993
    %v3002 = vmul.f32 %v2962, %v2994
    %3003 = vrot.lane.b32.xlu0 %v2285, 64
    %v3004 = vpop.permute.xlu0 %3003
    %v3007 = vsel %vm272, %v2995, 0
    %3009 = vmatprep.subr.mxu0 0.0
    %3010 = vmatpush1.msra.mxu0 %v3004
    %3011 = vmatprep.subr.mxu0 0.0
    %3012 = vmatpush1.msra.mxu0 0.0
    %3013 = vmatprep.subr.mxu0 0.0
    %3014 = vmatpush1.msra.mxu0 0.0
    %3015 = vmatprep.subr.mxu0 0.0
    %3016 = vmatpush1.msra.mxu0 0.0
    %3017 = vmatprep.subr.mxu0 0.0
    %3018 = vmatpush1.msra.mxu0 0.0
    %3019 = vmatprep.subr.mxu0 0.0
    %3020 = vmatpush1.msra.mxu0 0.0
    %3021 = vmatprep.subr.mxu0 0.0
    %3022 = vmatpush1.msra.mxu0 0.0
    %3023 = vmatprep.subr.mxu0 0.0
    %3024 = vmatpush1.msra.mxu0 0.0
    %3025 = vmatprep.subr.mxu0 0.0
    %3026 = vmatpush1.msra.mxu0 0.0
    %3027 = vmatprep.subr.mxu0 0.0
    %3028 = vmatpush1.msra.mxu0 0.0
    %3029 = vmatprep.subr.mxu0 0.0
    %3030 = vmatpush1.msra.mxu0 0.0
    %3031 = vmatprep.subr.mxu0 0.0
    %3032 = vmatpush1.msra.mxu0 0.0
    %3033 = vmatprep.subr.mxu0 0.0
    %3034 = vmatpush1.msra.mxu0 0.0
    %3035 = vmatprep.subr.mxu0 0.0
    %3036 = vmatpush1.msra.mxu0 0.0
    %3037 = vmatprep.subr.mxu0 0.0
    %3038 = vmatpush1.msra.mxu0 0.0
    %3039 = vmatprep.subr.mxu0 0.0
    %3040 = vmatpush1.msra.mxu0 0.0
    %3041 = vmatprep.subr.mxu0 0.0
    %3042 = vmatpush1.msra.mxu0 0.0
    %3043 = vmatprep.subr.mxu0 0.0
    %3044 = vmatpush1.msra.mxu0 0.0
    %3045 = vmatprep.subr.mxu0 0.0
    %3046 = vmatpush1.msra.mxu0 0.0
    %3047 = vmatprep.subr.mxu0 0.0
    %3048 = vmatpush1.msra.mxu0 0.0
    %3049 = vmatprep.subr.mxu0 0.0
    %3050 = vmatpush1.msra.mxu0 0.0
    %3051 = vmatprep.subr.mxu0 0.0
    %3052 = vmatpush1.msra.mxu0 0.0
    %3053 = vmatprep.subr.mxu0 0.0
    %3054 = vmatpush1.msra.mxu0 0.0
    %3055 = vmatprep.subr.mxu0 0.0
    %3056 = vmatpush1.msra.mxu0 0.0
    %3057 = vmatprep.subr.mxu0 0.0
    %3058 = vmatpush1.msra.mxu0 0.0
    %3059 = vmatprep.subr.mxu0 0.0
    %3060 = vmatpush1.msra.mxu0 0.0
    %3061 = vmatprep.subr.mxu0 0.0
    %3062 = vmatpush1.msra.mxu0 0.0
    %3063 = vmatprep.subr.mxu0 0.0
    %3064 = vmatpush1.msra.mxu0 0.0
    %3065 = vmatprep.subr.mxu0 0.0
    %3066 = vmatpush1.msra.mxu0 0.0
    %3067 = vmatprep.subr.mxu0 0.0
    %3068 = vmatpush1.msra.mxu0 0.0
    %3069 = vmatprep.subr.mxu0 0.0
    %3070 = vmatpush1.msra.mxu0 0.0
    %3071 = vmatprep.subr.mxu0 0.0
    %3072 = vmatpush1.msra.mxu0 0.0
    %3073 = vmatprep.mubr.f32.mxu0 0.0
    %3074 = vmatmul.mubr.f32.gmra.mrb[0].mxu0 %v3007
    %v3075 = vpop.f32.mrb[0].mxu0
    %v3076 = vadd.f32 0.0, %v3075
    %v3077 = vpop.f32.mrb[0].mxu0
    %3078 = vdwg.mxu0
    %3079 = vrot.lane.b32.xlu0 %v2290, 64
    %v3080 = vpop.permute.xlu0 %3079
    %v3083 = vsel %vm272, %v2996, 0
    %3085 = vmatprep.subr.mxu0 0.0
    %3086 = vmatpush1.msra.mxu0 %v3080
    %3087 = vmatprep.subr.mxu0 0.0
    %3088 = vmatpush1.msra.mxu0 0.0
    %3089 = vmatprep.subr.mxu0 0.0
    %3090 = vmatpush1.msra.mxu0 0.0
    %3091 = vmatprep.subr.mxu0 0.0
    %3092 = vmatpush1.msra.mxu0 0.0
    %3093 = vmatprep.subr.mxu0 0.0
    %3094 = vmatpush1.msra.mxu0 0.0
    %3095 = vmatprep.subr.mxu0 0.0
    %3096 = vmatpush1.msra.mxu0 0.0
    %3097 = vmatprep.subr.mxu0 0.0
    %3098 = vmatpush1.msra.mxu0 0.0
    %3099 = vmatprep.subr.mxu0 0.0
    %3100 = vmatpush1.msra.mxu0 0.0
    %3101 = vmatprep.subr.mxu0 0.0
    %3102 = vmatpush1.msra.mxu0 0.0
    %3103 = vmatprep.subr.mxu0 0.0
    %3104 = vmatpush1.msra.mxu0 0.0
    %3105 = vmatprep.subr.mxu0 0.0
    %3106 = vmatpush1.msra.mxu0 0.0
    %3107 = vmatprep.subr.mxu0 0.0
    %3108 = vmatpush1.msra.mxu0 0.0
    %3109 = vmatprep.subr.mxu0 0.0
    %3110 = vmatpush1.msra.mxu0 0.0
    %3111 = vmatprep.subr.mxu0 0.0
    %3112 = vmatpush1.msra.mxu0 0.0
    %3113 = vmatprep.subr.mxu0 0.0
    %3114 = vmatpush1.msra.mxu0 0.0
    %3115 = vmatprep.subr.mxu0 0.0
    %3116 = vmatpush1.msra.mxu0 0.0
    %3117 = vmatprep.subr.mxu0 0.0
    %3118 = vmatpush1.msra.mxu0 0.0
    %3119 = vmatprep.subr.mxu0 0.0
    %3120 = vmatpush1.msra.mxu0 0.0
    %3121 = vmatprep.subr.mxu0 0.0
    %3122 = vmatpush1.msra.mxu0 0.0
    %3123 = vmatprep.subr.mxu0 0.0
    %3124 = vmatpush1.msra.mxu0 0.0
    %3125 = vmatprep.subr.mxu0 0.0
    %3126 = vmatpush1.msra.mxu0 0.0
    %3127 = vmatprep.subr.mxu0 0.0
    %3128 = vmatpush1.msra.mxu0 0.0
    %3129 = vmatprep.subr.mxu0 0.0
    %3130 = vmatpush1.msra.mxu0 0.0
    %3131 = vmatprep.subr.mxu0 0.0
    %3132 = vmatpush1.msra.mxu0 0.0
    %3133 = vmatprep.subr.mxu0 0.0
    %3134 = vmatpush1.msra.mxu0 0.0
    %3135 = vmatprep.subr.mxu0 0.0
    %3136 = vmatpush1.msra.mxu0 0.0
    %3137 = vmatprep.subr.mxu0 0.0
    %3138 = vmatpush1.msra.mxu0 0.0
    %3139 = vmatprep.subr.mxu0 0.0
    %3140 = vmatpush1.msra.mxu0 0.0
    %3141 = vmatprep.subr.mxu0 0.0
    %3142 = vmatpush1.msra.mxu0 0.0
    %3143 = vmatprep.subr.mxu0 0.0
    %3144 = vmatpush1.msra.mxu0 0.0
    %3145 = vmatprep.subr.mxu0 0.0
    %3146 = vmatpush1.msra.mxu0 0.0
    %3147 = vmatprep.subr.mxu0 0.0
    %3148 = vmatpush1.msra.mxu0 0.0
    %3149 = vmatprep.mubr.f32.mxu0 0.0
    %3150 = vmatmul.mubr.f32.gmra.mrb[0].mxu0 %v3083
    %v3151 = vpop.f32.mrb[0].mxu0
    %v3152 = vadd.f32 0.0, %v3151
    %v3153 = vpop.f32.mrb[0].mxu0
    %3154 = vdwg.mxu0
    %3155 = vrot.lane.b32.xlu0 %v2296, 64
    %v3156 = vpop.permute.xlu0 %3155
    %v3159 = vsel %vm272, %v2997, 0
    %3161 = vmatprep.subr.mxu0 0.0
    %3162 = vmatpush1.msra.mxu0 %v3156
    %3163 = vmatprep.subr.mxu0 0.0
    %3164 = vmatpush1.msra.mxu0 0.0
    %3165 = vmatprep.subr.mxu0 0.0
    %3166 = vmatpush1.msra.mxu0 0.0
    %3167 = vmatprep.subr.mxu0 0.0
    %3168 = vmatpush1.msra.mxu0 0.0
    %3169 = vmatprep.subr.mxu0 0.0
    %3170 = vmatpush1.msra.mxu0 0.0
    %3171 = vmatprep.subr.mxu0 0.0
    %3172 = vmatpush1.msra.mxu0 0.0
    %3173 = vmatprep.subr.mxu0 0.0
    %3174 = vmatpush1.msra.mxu0 0.0
    %3175 = vmatprep.subr.mxu0 0.0
    %3176 = vmatpush1.msra.mxu0 0.0
    %3177 = vmatprep.subr.mxu0 0.0
    %3178 = vmatpush1.msra.mxu0 0.0
    %3179 = vmatprep.subr.mxu0 0.0
    %3180 = vmatpush1.msra.mxu0 0.0
    %3181 = vmatprep.subr.mxu0 0.0
    %3182 = vmatpush1.msra.mxu0 0.0
    %3183 = vmatprep.subr.mxu0 0.0
    %3184 = vmatpush1.msra.mxu0 0.0
    %3185 = vmatprep.subr.mxu0 0.0
    %3186 = vmatpush1.msra.mxu0 0.0
    %3187 = vmatprep.subr.mxu0 0.0
    %3188 = vmatpush1.msra.mxu0 0.0
    %3189 = vmatprep.subr.mxu0 0.0
    %3190 = vmatpush1.msra.mxu0 0.0
    %3191 = vmatprep.subr.mxu0 0.0
    %3192 = vmatpush1.msra.mxu0 0.0
    %3193 = vmatprep.subr.mxu0 0.0
    %3194 = vmatpush1.msra.mxu0 0.0
    %3195 = vmatprep.subr.mxu0 0.0
    %3196 = vmatpush1.msra.mxu0 0.0
    %3197 = vmatprep.subr.mxu0 0.0
    %3198 = vmatpush1.msra.mxu0 0.0
    %3199 = vmatprep.subr.mxu0 0.0
    %3200 = vmatpush1.msra.mxu0 0.0
    %3201 = vmatprep.subr.mxu0 0.0
    %3202 = vmatpush1.msra.mxu0 0.0
    %3203 = vmatprep.subr.mxu0 0.0
    %3204 = vmatpush1.msra.mxu0 0.0
    %3205 = vmatprep.subr.mxu0 0.0
    %3206 = vmatpush1.msra.mxu0 0.0
    %3207 = vmatprep.subr.mxu0 0.0
    %3208 = vmatpush1.msra.mxu0 0.0
    %3209 = vmatprep.subr.mxu0 0.0
    %3210 = vmatpush1.msra.mxu0 0.0
    %3211 = vmatprep.subr.mxu0 0.0
    %3212 = vmatpush1.msra.mxu0 0.0
    %3213 = vmatprep.subr.mxu0 0.0
    %3214 = vmatpush1.msra.mxu0 0.0
    %3215 = vmatprep.subr.mxu0 0.0
    %3216 = vmatpush1.msra.mxu0 0.0
    %3217 = vmatprep.subr.mxu0 0.0
    %3218 = vmatpush1.msra.mxu0 0.0
    %3219 = vmatprep.subr.mxu0 0.0
    %3220 = vmatpush1.msra.mxu0 0.0
    %3221 = vmatprep.subr.mxu0 0.0
    %3222 = vmatpush1.msra.mxu0 0.0
    %3223 = vmatprep.subr.mxu0 0.0
    %3224 = vmatpush1.msra.mxu0 0.0
    %3225 = vmatprep.mubr.f32.mxu0 0.0
    %3226 = vmatmul.mubr.f32.gmra.mrb[0].mxu0 %v3159
    %v3227 = vpop.f32.mrb[0].mxu0
    %v3228 = vadd.f32 0.0, %v3227
    %v3229 = vpop.f32.mrb[0].mxu0
    %3230 = vdwg.mxu0
    %3231 = vrot.lane.b32.xlu0 %v2298, 64
    %v3232 = vpop.permute.xlu0 %3231
    %v3235 = vsel %vm272, %v2998, 0
    %3237 = vmatprep.subr.mxu0 0.0
    %3238 = vmatpush1.msra.mxu0 %v3232
    %3239 = vmatprep.subr.mxu0 0.0
    %3240 = vmatpush1.msra.mxu0 0.0
    %3241 = vmatprep.subr.mxu0 0.0
    %3242 = vmatpush1.msra.mxu0 0.0
    %3243 = vmatprep.subr.mxu0 0.0
    %3244 = vmatpush1.msra.mxu0 0.0
    %3245 = vmatprep.subr.mxu0 0.0
    %3246 = vmatpush1.msra.mxu0 0.0
    %3247 = vmatprep.subr.mxu0 0.0
    %3248 = vmatpush1.msra.mxu0 0.0
    %3249 = vmatprep.subr.mxu0 0.0
    %3250 = vmatpush1.msra.mxu0 0.0
    %3251 = vmatprep.subr.mxu0 0.0
    %3252 = vmatpush1.msra.mxu0 0.0
    %3253 = vmatprep.subr.mxu0 0.0
    %3254 = vmatpush1.msra.mxu0 0.0
    %3255 = vmatprep.subr.mxu0 0.0
    %3256 = vmatpush1.msra.mxu0 0.0
    %3257 = vmatprep.subr.mxu0 0.0
    %3258 = vmatpush1.msra.mxu0 0.0
    %3259 = vmatprep.subr.mxu0 0.0
    %3260 = vmatpush1.msra.mxu0 0.0
    %3261 = vmatprep.subr.mxu0 0.0
    %3262 = vmatpush1.msra.mxu0 0.0
    %3263 = vmatprep.subr.mxu0 0.0
    %3264 = vmatpush1.msra.mxu0 0.0
    %3265 = vmatprep.subr.mxu0 0.0
    %3266 = vmatpush1.msra.mxu0 0.0
    %3267 = vmatprep.subr.mxu0 0.0
    %3268 = vmatpush1.msra.mxu0 0.0
    %3269 = vmatprep.subr.mxu0 0.0
    %3270 = vmatpush1.msra.mxu0 0.0
    %3271 = vmatprep.subr.mxu0 0.0
    %3272 = vmatpush1.msra.mxu0 0.0
    %3273 = vmatprep.subr.mxu0 0.0
    %3274 = vmatpush1.msra.mxu0 0.0
    %3275 = vmatprep.subr.mxu0 0.0
    %3276 = vmatpush1.msra.mxu0 0.0
    %3277 = vmatprep.subr.mxu0 0.0
    %3278 = vmatpush1.msra.mxu0 0.0
    %3279 = vmatprep.subr.mxu0 0.0
    %3280 = vmatpush1.msra.mxu0 0.0
    %3281 = vmatprep.subr.mxu0 0.0
    %3282 = vmatpush1.msra.mxu0 0.0
    %3283 = vmatprep.subr.mxu0 0.0
    %3284 = vmatpush1.msra.mxu0 0.0
    %3285 = vmatprep.subr.mxu0 0.0
    %3286 = vmatpush1.msra.mxu0 0.0
    %3287 = vmatprep.subr.mxu0 0.0
    %3288 = vmatpush1.msra.mxu0 0.0
    %3289 = vmatprep.subr.mxu0 0.0
    %3290 = vmatpush1.msra.mxu0 0.0
    %3291 = vmatprep.subr.mxu0 0.0
    %3292 = vmatpush1.msra.mxu0 0.0
    %3293 = vmatprep.subr.mxu0 0.0
    %3294 = vmatpush1.msra.mxu0 0.0
    %3295 = vmatprep.subr.mxu0 0.0
    %3296 = vmatpush1.msra.mxu0 0.0
    %3297 = vmatprep.subr.mxu0 0.0
    %3298 = vmatpush1.msra.mxu0 0.0
    %3299 = vmatprep.subr.mxu0 0.0
    %3300 = vmatpush1.msra.mxu0 0.0
    %3301 = vmatprep.mubr.f32.mxu0 0.0
    %3302 = vmatmul.mubr.f32.gmra.mrb[0].mxu0 %v3235
    %v3303 = vpop.f32.mrb[0].mxu0
    %v3304 = vadd.f32 0.0, %v3303
    %v3305 = vpop.f32.mrb[0].mxu0
    %3306 = vdwg.mxu0
    %3307 = vrot.lane.b32.xlu0 %v2300, 64
    %v3308 = vpop.permute.xlu0 %3307
    %v3311 = vsel %vm272, %v2999, 0
    %3313 = vmatprep.subr.mxu0 0.0
    %3314 = vmatpush1.msra.mxu0 %v3308
    %3315 = vmatprep.subr.mxu0 0.0
    %3316 = vmatpush1.msra.mxu0 0.0
    %3317 = vmatprep.subr.mxu0 0.0
    %3318 = vmatpush1.msra.mxu0 0.0
    %3319 = vmatprep.subr.mxu0 0.0
    %3320 = vmatpush1.msra.mxu0 0.0
    %3321 = vmatprep.subr.mxu0 0.0
    %3322 = vmatpush1.msra.mxu0 0.0
    %3323 = vmatprep.subr.mxu0 0.0
    %3324 = vmatpush1.msra.mxu0 0.0
    %3325 = vmatprep.subr.mxu0 0.0
    %3326 = vmatpush1.msra.mxu0 0.0
    %3327 = vmatprep.subr.mxu0 0.0
    %3328 = vmatpush1.msra.mxu0 0.0
    %3329 = vmatprep.subr.mxu0 0.0
    %3330 = vmatpush1.msra.mxu0 0.0
    %3331 = vmatprep.subr.mxu0 0.0
    %3332 = vmatpush1.msra.mxu0 0.0
    %3333 = vmatprep.subr.mxu0 0.0
    %3334 = vmatpush1.msra.mxu0 0.0
    %3335 = vmatprep.subr.mxu0 0.0
    %3336 = vmatpush1.msra.mxu0 0.0
    %3337 = vmatprep.subr.mxu0 0.0
    %3338 = vmatpush1.msra.mxu0 0.0
    %3339 = vmatprep.subr.mxu0 0.0
    %3340 = vmatpush1.msra.mxu0 0.0
    %3341 = vmatprep.subr.mxu0 0.0
    %3342 = vmatpush1.msra.mxu0 0.0
    %3343 = vmatprep.subr.mxu0 0.0
    %3344 = vmatpush1.msra.mxu0 0.0
    %3345 = vmatprep.subr.mxu0 0.0
    %3346 = vmatpush1.msra.mxu0 0.0
    %3347 = vmatprep.subr.mxu0 0.0
    %3348 = vmatpush1.msra.mxu0 0.0
    %3349 = vmatprep.subr.mxu0 0.0
    %3350 = vmatpush1.msra.mxu0 0.0
    %3351 = vmatprep.subr.mxu0 0.0
    %3352 = vmatpush1.msra.mxu0 0.0
    %3353 = vmatprep.subr.mxu0 0.0
    %3354 = vmatpush1.msra.mxu0 0.0
    %3355 = vmatprep.subr.mxu0 0.0
    %3356 = vmatpush1.msra.mxu0 0.0
    %3357 = vmatprep.subr.mxu0 0.0
    %3358 = vmatpush1.msra.mxu0 0.0
    %3359 = vmatprep.subr.mxu0 0.0
    %3360 = vmatpush1.msra.mxu0 0.0
    %3361 = vmatprep.subr.mxu0 0.0
    %3362 = vmatpush1.msra.mxu0 0.0
    %3363 = vmatprep.subr.mxu0 0.0
    %3364 = vmatpush1.msra.mxu0 0.0
    %3365 = vmatprep.subr.mxu0 0.0
    %3366 = vmatpush1.msra.mxu0 0.0
    %3367 = vmatprep.subr.mxu0 0.0
    %3368 = vmatpush1.msra.mxu0 0.0
    %3369 = vmatprep.subr.mxu0 0.0
    %3370 = vmatpush1.msra.mxu0 0.0
    %3371 = vmatprep.subr.mxu0 0.0
    %3372 = vmatpush1.msra.mxu0 0.0
    %3373 = vmatprep.subr.mxu0 0.0
    %3374 = vmatpush1.msra.mxu0 0.0
    %3375 = vmatprep.subr.mxu0 0.0
    %3376 = vmatpush1.msra.mxu0 0.0
    %3377 = vmatprep.mubr.f32.mxu0 0.0
    %3378 = vmatmul.mubr.f32.gmra.mrb[0].mxu0 %v3311
    %v3379 = vpop.f32.mrb[0].mxu0
    %v3380 = vadd.f32 0.0, %v3379
    %v3381 = vpop.f32.mrb[0].mxu0
    %3382 = vdwg.mxu0
    %3383 = vrot.lane.b32.xlu0 %v2302, 64
    %v3384 = vpop.permute.xlu0 %3383
    %v3387 = vsel %vm272, %v3000, 0
    %3389 = vmatprep.subr.mxu0 0.0
    %3390 = vmatpush1.msra.mxu0 %v3384
    %3391 = vmatprep.subr.mxu0 0.0
    %3392 = vmatpush1.msra.mxu0 0.0
    %3393 = vmatprep.subr.mxu0 0.0
    %3394 = vmatpush1.msra.mxu0 0.0
    %3395 = vmatprep.subr.mxu0 0.0
    %3396 = vmatpush1.msra.mxu0 0.0
    %3397 = vmatprep.subr.mxu0 0.0
    %3398 = vmatpush1.msra.mxu0 0.0
    %3399 = vmatprep.subr.mxu0 0.0
    %3400 = vmatpush1.msra.mxu0 0.0
    %3401 = vmatprep.subr.mxu0 0.0
    %3402 = vmatpush1.msra.mxu0 0.0
    %3403 = vmatprep.subr.mxu0 0.0
    %3404 = vmatpush1.msra.mxu0 0.0
    %3405 = vmatprep.subr.mxu0 0.0
    %3406 = vmatpush1.msra.mxu0 0.0
    %3407 = vmatprep.subr.mxu0 0.0
    %3408 = vmatpush1.msra.mxu0 0.0
    %3409 = vmatprep.subr.mxu0 0.0
    %3410 = vmatpush1.msra.mxu0 0.0
    %3411 = vmatprep.subr.mxu0 0.0
    %3412 = vmatpush1.msra.mxu0 0.0
    %3413 = vmatprep.subr.mxu0 0.0
    %3414 = vmatpush1.msra.mxu0 0.0
    %3415 = vmatprep.subr.mxu0 0.0
    %3416 = vmatpush1.msra.mxu0 0.0
    %3417 = vmatprep.subr.mxu0 0.0
    %3418 = vmatpush1.msra.mxu0 0.0
    %3419 = vmatprep.subr.mxu0 0.0
    %3420 = vmatpush1.msra.mxu0 0.0
    %3421 = vmatprep.subr.mxu0 0.0
    %3422 = vmatpush1.msra.mxu0 0.0
    %3423 = vmatprep.subr.mxu0 0.0
    %3424 = vmatpush1.msra.mxu0 0.0
    %3425 = vmatprep.subr.mxu0 0.0
    %3426 = vmatpush1.msra.mxu0 0.0
    %3427 = vmatprep.subr.mxu0 0.0
    %3428 = vmatpush1.msra.mxu0 0.0
    %3429 = vmatprep.subr.mxu0 0.0
    %3430 = vmatpush1.msra.mxu0 0.0
    %3431 = vmatprep.subr.mxu0 0.0
    %3432 = vmatpush1.msra.mxu0 0.0
    %3433 = vmatprep.subr.mxu0 0.0
    %3434 = vmatpush1.msra.mxu0 0.0
    %3435 = vmatprep.subr.mxu0 0.0
    %3436 = vmatpush1.msra.mxu0 0.0
    %3437 = vmatprep.subr.mxu0 0.0
    %3438 = vmatpush1.msra.mxu0 0.0
    %3439 = vmatprep.subr.mxu0 0.0
    %3440 = vmatpush1.msra.mxu0 0.0
    %3441 = vmatprep.subr.mxu0 0.0
    %3442 = vmatpush1.msra.mxu0 0.0
    %3443 = vmatprep.subr.mxu0 0.0
    %3444 = vmatpush1.msra.mxu0 0.0
    %3445 = vmatprep.subr.mxu0 0.0
    %3446 = vmatpush1.msra.mxu0 0.0
    %3447 = vmatprep.subr.mxu0 0.0
    %3448 = vmatpush1.msra.mxu0 0.0
    %3449 = vmatprep.subr.mxu0 0.0
    %3450 = vmatpush1.msra.mxu0 0.0
    %3451 = vmatprep.subr.mxu0 0.0
    %3452 = vmatpush1.msra.mxu0 0.0
    %3453 = vmatprep.mubr.f32.mxu0 0.0
    %3454 = vmatmul.mubr.f32.gmra.mrb[0].mxu0 %v3387
    %v3455 = vpop.f32.mrb[0].mxu0
    %v3456 = vadd.f32 0.0, %v3455
    %v3457 = vpop.f32.mrb[0].mxu0
    %3458 = vdwg.mxu0
    %3459 = vrot.lane.b32.xlu0 %v2304, 64
    %v3460 = vpop.permute.xlu0 %3459
    %v3463 = vsel %vm272, %v3001, 0
    %3465 = vmatprep.subr.mxu0 0.0
    %3466 = vmatpush1.msra.mxu0 %v3460
    %3467 = vmatprep.subr.mxu0 0.0
    %3468 = vmatpush1.msra.mxu0 0.0
    %3469 = vmatprep.subr.mxu0 0.0
    %3470 = vmatpush1.msra.mxu0 0.0
    %3471 = vmatprep.subr.mxu0 0.0
    %3472 = vmatpush1.msra.mxu0 0.0
    %3473 = vmatprep.subr.mxu0 0.0
    %3474 = vmatpush1.msra.mxu0 0.0
    %3475 = vmatprep.subr.mxu0 0.0
    %3476 = vmatpush1.msra.mxu0 0.0
    %3477 = vmatprep.subr.mxu0 0.0
    %3478 = vmatpush1.msra.mxu0 0.0
    %3479 = vmatprep.subr.mxu0 0.0
    %3480 = vmatpush1.msra.mxu0 0.0
    %3481 = vmatprep.subr.mxu0 0.0
    %3482 = vmatpush1.msra.mxu0 0.0
    %3483 = vmatprep.subr.mxu0 0.0
    %3484 = vmatpush1.msra.mxu0 0.0
    %3485 = vmatprep.subr.mxu0 0.0
    %3486 = vmatpush1.msra.mxu0 0.0
    %3487 = vmatprep.subr.mxu0 0.0
    %3488 = vmatpush1.msra.mxu0 0.0
    %3489 = vmatprep.subr.mxu0 0.0
    %3490 = vmatpush1.msra.mxu0 0.0
    %3491 = vmatprep.subr.mxu0 0.0
    %3492 = vmatpush1.msra.mxu0 0.0
    %3493 = vmatprep.subr.mxu0 0.0
    %3494 = vmatpush1.msra.mxu0 0.0
    %3495 = vmatprep.subr.mxu0 0.0
    %3496 = vmatpush1.msra.mxu0 0.0
    %3497 = vmatprep.subr.mxu0 0.0
    %3498 = vmatpush1.msra.mxu0 0.0
    %3499 = vmatprep.subr.mxu0 0.0
    %3500 = vmatpush1.msra.mxu0 0.0
    %3501 = vmatprep.subr.mxu0 0.0
    %3502 = vmatpush1.msra.mxu0 0.0
    %3503 = vmatprep.subr.mxu0 0.0
    %3504 = vmatpush1.msra.mxu0 0.0
    %3505 = vmatprep.subr.mxu0 0.0
    %3506 = vmatpush1.msra.mxu0 0.0
    %3507 = vmatprep.subr.mxu0 0.0
    %3508 = vmatpush1.msra.mxu0 0.0
    %3509 = vmatprep.subr.mxu0 0.0
    %3510 = vmatpush1.msra.mxu0 0.0
    %3511 = vmatprep.subr.mxu0 0.0
    %3512 = vmatpush1.msra.mxu0 0.0
    %3513 = vmatprep.subr.mxu0 0.0
    %3514 = vmatpush1.msra.mxu0 0.0
    %3515 = vmatprep.subr.mxu0 0.0
    %3516 = vmatpush1.msra.mxu0 0.0
    %3517 = vmatprep.subr.mxu0 0.0
    %3518 = vmatpush1.msra.mxu0 0.0
    %3519 = vmatprep.subr.mxu0 0.0
    %3520 = vmatpush1.msra.mxu0 0.0
    %3521 = vmatprep.subr.mxu0 0.0
    %3522 = vmatpush1.msra.mxu0 0.0
    %3523 = vmatprep.subr.mxu0 0.0
    %3524 = vmatpush1.msra.mxu0 0.0
    %3525 = vmatprep.subr.mxu0 0.0
    %3526 = vmatpush1.msra.mxu0 0.0
    %3527 = vmatprep.subr.mxu0 0.0
    %3528 = vmatpush1.msra.mxu0 0.0
    %3529 = vmatprep.mubr.f32.mxu0 0.0
    %3530 = vmatmul.mubr.f32.gmra.mrb[0].mxu0 %v3463
    %v3531 = vpop.f32.mrb[0].mxu0
    %v3532 = vadd.f32 0.0, %v3531
    %v3533 = vpop.f32.mrb[0].mxu0
    %3534 = vdwg.mxu0
    %3535 = vrot.lane.b32.xlu0 %v2306, 64
    %v3536 = vpop.permute.xlu0 %3535
    %v3539 = vsel %vm272, %v3002, 0
    %3541 = vmatprep.subr.mxu0 0.0
    %3542 = vmatpush1.msra.mxu0 %v3536
    %3543 = vmatprep.subr.mxu0 0.0
    %3544 = vmatpush1.msra.mxu0 0.0
    %3545 = vmatprep.subr.mxu0 0.0
    %3546 = vmatpush1.msra.mxu0 0.0
    %3547 = vmatprep.subr.mxu0 0.0
    %3548 = vmatpush1.msra.mxu0 0.0
    %3549 = vmatprep.subr.mxu0 0.0
    %3550 = vmatpush1.msra.mxu0 0.0
    %3551 = vmatprep.subr.mxu0 0.0
    %3552 = vmatpush1.msra.mxu0 0.0
    %3553 = vmatprep.subr.mxu0 0.0
    %3554 = vmatpush1.msra.mxu0 0.0
    %3555 = vmatprep.subr.mxu0 0.0
    %3556 = vmatpush1.msra.mxu0 0.0
    %3557 = vmatprep.subr.mxu0 0.0
    %3558 = vmatpush1.msra.mxu0 0.0
    %3559 = vmatprep.subr.mxu0 0.0
    %3560 = vmatpush1.msra.mxu0 0.0
    %3561 = vmatprep.subr.mxu0 0.0
    %3562 = vmatpush1.msra.mxu0 0.0
    %3563 = vmatprep.subr.mxu0 0.0
    %3564 = vmatpush1.msra.mxu0 0.0
    %3565 = vmatprep.subr.mxu0 0.0
    %3566 = vmatpush1.msra.mxu0 0.0
    %3567 = vmatprep.subr.mxu0 0.0
    %3568 = vmatpush1.msra.mxu0 0.0
    %3569 = vmatprep.subr.mxu0 0.0
    %3570 = vmatpush1.msra.mxu0 0.0
    %3571 = vmatprep.subr.mxu0 0.0
    %3572 = vmatpush1.msra.mxu0 0.0
    %3573 = vmatprep.subr.mxu0 0.0
    %3574 = vmatpush1.msra.mxu0 0.0
    %3575 = vmatprep.subr.mxu0 0.0
    %3576 = vmatpush1.msra.mxu0 0.0
    %3577 = vmatprep.subr.mxu0 0.0
    %3578 = vmatpush1.msra.mxu0 0.0
    %3579 = vmatprep.subr.mxu0 0.0
    %3580 = vmatpush1.msra.mxu0 0.0
    %3581 = vmatprep.subr.mxu0 0.0
    %3582 = vmatpush1.msra.mxu0 0.0
    %3583 = vmatprep.subr.mxu0 0.0
    %3584 = vmatpush1.msra.mxu0 0.0
    %3585 = vmatprep.subr.mxu0 0.0
    %3586 = vmatpush1.msra.mxu0 0.0
    %3587 = vmatprep.subr.mxu0 0.0
    %3588 = vmatpush1.msra.mxu0 0.0
    %3589 = vmatprep.subr.mxu0 0.0
    %3590 = vmatpush1.msra.mxu0 0.0
    %3591 = vmatprep.subr.mxu0 0.0
    %3592 = vmatpush1.msra.mxu0 0.0
    %3593 = vmatprep.subr.mxu0 0.0
    %3594 = vmatpush1.msra.mxu0 0.0
    %3595 = vmatprep.subr.mxu0 0.0
    %3596 = vmatpush1.msra.mxu0 0.0
    %3597 = vmatprep.subr.mxu0 0.0
    %3598 = vmatpush1.msra.mxu0 0.0
    %3599 = vmatprep.subr.mxu0 0.0
    %3600 = vmatpush1.msra.mxu0 0.0
    %3601 = vmatprep.subr.mxu0 0.0
    %3602 = vmatpush1.msra.mxu0 0.0
    %3603 = vmatprep.subr.mxu0 0.0
    %3604 = vmatpush1.msra.mxu0 0.0
    %3605 = vmatprep.mubr.f32.mxu0 0.0
    %3606 = vmatmul.mubr.f32.gmra.mrb[0].mxu0 %v3539
    %v3607 = vpop.f32.mrb[0].mxu0
    %v3608 = vadd.f32 0.0, %v3607
    %v3609 = vpop.f32.mrb[0].mxu0
    %3610 = vdwg.mxu0
    %3612 = vrot.lane.b32.xlu0 %v2151, 32
    %v3613 = vpop.permute.xlu0 %3612
    %v3616 = vsel %vm272, %v3076, 0
    %v3619 = vsel %vm272, %v3152, 0
    %3621 = vmatprep.subr.mxu0 0.0
    %3622 = vmatpush1.msra.mxu0 %v3613
    %3623 = vmatprep.subr.mxu0 0.0
    %3624 = vmatpush1.msra.mxu0 0.0
    %3625 = vmatprep.subr.mxu0 0.0
    %3626 = vmatpush1.msra.mxu0 0.0
    %3627 = vmatprep.subr.mxu0 0.0
    %3628 = vmatpush1.msra.mxu0 0.0
    %3629 = vmatprep.subr.mxu0 0.0
    %3630 = vmatpush1.msra.mxu0 0.0
    %3631 = vmatprep.subr.mxu0 0.0
    %3632 = vmatpush1.msra.mxu0 0.0
    %3633 = vmatprep.subr.mxu0 0.0
    %3634 = vmatpush1.msra.mxu0 0.0
    %3635 = vmatprep.subr.mxu0 0.0
    %3636 = vmatpush1.msra.mxu0 0.0
    %3637 = vmatprep.subr.mxu0 0.0
    %3638 = vmatpush1.msra.mxu0 0.0
    %3639 = vmatprep.subr.mxu0 0.0
    %3640 = vmatpush1.msra.mxu0 0.0
    %3641 = vmatprep.subr.mxu0 0.0
    %3642 = vmatpush1.msra.mxu0 0.0
    %3643 = vmatprep.subr.mxu0 0.0
    %3644 = vmatpush1.msra.mxu0 0.0
    %3645 = vmatprep.subr.mxu0 0.0
    %3646 = vmatpush1.msra.mxu0 0.0
    %3647 = vmatprep.subr.mxu0 0.0
    %3648 = vmatpush1.msra.mxu0 0.0
    %3649 = vmatprep.subr.mxu0 0.0
    %3650 = vmatpush1.msra.mxu0 0.0
    %3651 = vmatprep.subr.mxu0 0.0
    %3652 = vmatpush1.msra.mxu0 0.0
    %3653 = vmatprep.subr.mxu0 0.0
    %3654 = vmatpush1.msra.mxu0 0.0
    %3655 = vmatprep.subr.mxu0 0.0
    %3656 = vmatpush1.msra.mxu0 0.0
    %3657 = vmatprep.subr.mxu0 0.0
    %3658 = vmatpush1.msra.mxu0 0.0
    %3659 = vmatprep.subr.mxu0 0.0
    %3660 = vmatpush1.msra.mxu0 0.0
    %3661 = vmatprep.subr.mxu0 0.0
    %3662 = vmatpush1.msra.mxu0 0.0
    %3663 = vmatprep.subr.mxu0 0.0
    %3664 = vmatpush1.msra.mxu0 0.0
    %3665 = vmatprep.subr.mxu0 0.0
    %3666 = vmatpush1.msra.mxu0 0.0
    %3667 = vmatprep.subr.mxu0 0.0
    %3668 = vmatpush1.msra.mxu0 0.0
    %3669 = vmatprep.subr.mxu0 0.0
    %3670 = vmatpush1.msra.mxu0 0.0
    %3671 = vmatprep.subr.mxu0 0.0
    %3672 = vmatpush1.msra.mxu0 0.0
    %3673 = vmatprep.subr.mxu0 0.0
    %3674 = vmatpush1.msra.mxu0 0.0
    %3675 = vmatprep.subr.mxu0 0.0
    %3676 = vmatpush1.msra.mxu0 0.0
    %3677 = vmatprep.subr.mxu0 0.0
    %3678 = vmatpush1.msra.mxu0 0.0
    %3679 = vmatprep.subr.mxu0 0.0
    %3680 = vmatpush1.msra.mxu0 0.0
    %3681 = vmatprep.subr.mxu0 0.0
    %3682 = vmatpush1.msra.mxu0 0.0
    %3683 = vmatprep.subr.mxu0 0.0
    %3684 = vmatpush1.msra.mxu0 0.0
    %3685 = vmatprep.mubr.f32.mxu0 0.0
    %3686 = vmatmul.mubr.f32.gmra.mrb[0].mxu0 %v3616
    %v3687 = vpop.f32.mrb[0].mxu0
    %v3688 = vadd.f32 0.0, %v3687
    %v3689 = vpop.f32.mrb[0].mxu0
    %3690 = vmatprep.mubr.f32.mxu0 0.0
    %3691 = vmatmul.mubr.f32.gmra.mrb[0].mxu0 %v3619
    %v3692 = vpop.f32.mrb[0].mxu0
    %v3693 = vadd.f32 0.0, %v3692
    %v3694 = vpop.f32.mrb[0].mxu0
    %3695 = vdwg.mxu0
    %3697 = vrot.lane.b32.xlu0 %v2153, 32
    %v3698 = vpop.permute.xlu0 %3697
    %v3701 = vsel %vm272, %v3228, 0
    %v3704 = vsel %vm272, %v3304, 0
    %3706 = vmatprep.subr.mxu0 0.0
    %3707 = vmatpush1.msra.mxu0 %v3698
    %3708 = vmatprep.subr.mxu0 0.0
    %3709 = vmatpush1.msra.mxu0 0.0
    %3710 = vmatprep.subr.mxu0 0.0
    %3711 = vmatpush1.msra.mxu0 0.0
    %3712 = vmatprep.subr.mxu0 0.0
    %3713 = vmatpush1.msra.mxu0 0.0
    %3714 = vmatprep.subr.mxu0 0.0
    %3715 = vmatpush1.msra.mxu0 0.0
    %3716 = vmatprep.subr.mxu0 0.0
    %3717 = vmatpush1.msra.mxu0 0.0
    %3718 = vmatprep.subr.mxu0 0.0
    %3719 = vmatpush1.msra.mxu0 0.0
    %3720 = vmatprep.subr.mxu0 0.0
    %3721 = vmatpush1.msra.mxu0 0.0
    %3722 = vmatprep.subr.mxu0 0.0
    %3723 = vmatpush1.msra.mxu0 0.0
    %3724 = vmatprep.subr.mxu0 0.0
    %3725 = vmatpush1.msra.mxu0 0.0
    %3726 = vmatprep.subr.mxu0 0.0
    %3727 = vmatpush1.msra.mxu0 0.0
    %3728 = vmatprep.subr.mxu0 0.0
    %3729 = vmatpush1.msra.mxu0 0.0
    %3730 = vmatprep.subr.mxu0 0.0
    %3731 = vmatpush1.msra.mxu0 0.0
    %3732 = vmatprep.subr.mxu0 0.0
    %3733 = vmatpush1.msra.mxu0 0.0
    %3734 = vmatprep.subr.mxu0 0.0
    %3735 = vmatpush1.msra.mxu0 0.0
    %3736 = vmatprep.subr.mxu0 0.0
    %3737 = vmatpush1.msra.mxu0 0.0
    %3738 = vmatprep.subr.mxu0 0.0
    %3739 = vmatpush1.msra.mxu0 0.0
    %3740 = vmatprep.subr.mxu0 0.0
    %3741 = vmatpush1.msra.mxu0 0.0
    %3742 = vmatprep.subr.mxu0 0.0
    %3743 = vmatpush1.msra.mxu0 0.0
    %3744 = vmatprep.subr.mxu0 0.0
    %3745 = vmatpush1.msra.mxu0 0.0
    %3746 = vmatprep.subr.mxu0 0.0
    %3747 = vmatpush1.msra.mxu0 0.0
    %3748 = vmatprep.subr.mxu0 0.0
    %3749 = vmatpush1.msra.mxu0 0.0
    %3750 = vmatprep.subr.mxu0 0.0
    %3751 = vmatpush1.msra.mxu0 0.0
    %3752 = vmatprep.subr.mxu0 0.0
    %3753 = vmatpush1.msra.mxu0 0.0
    %3754 = vmatprep.subr.mxu0 0.0
    %3755 = vmatpush1.msra.mxu0 0.0
    %3756 = vmatprep.subr.mxu0 0.0
    %3757 = vmatpush1.msra.mxu0 0.0
    %3758 = vmatprep.subr.mxu0 0.0
    %3759 = vmatpush1.msra.mxu0 0.0
    %3760 = vmatprep.subr.mxu0 0.0
    %3761 = vmatpush1.msra.mxu0 0.0
    %3762 = vmatprep.subr.mxu0 0.0
    %3763 = vmatpush1.msra.mxu0 0.0
    %3764 = vmatprep.subr.mxu0 0.0
    %3765 = vmatpush1.msra.mxu0 0.0
    %3766 = vmatprep.subr.mxu0 0.0
    %3767 = vmatpush1.msra.mxu0 0.0
    %3768 = vmatprep.subr.mxu0 0.0
    %3769 = vmatpush1.msra.mxu0 0.0
    %3770 = vmatprep.mubr.f32.mxu0 0.0
    %3771 = vmatmul.mubr.f32.gmra.mrb[0].mxu0 %v3701
    %v3772 = vpop.f32.mrb[0].mxu0
    %v3773 = vadd.f32 0.0, %v3772
    %v3774 = vpop.f32.mrb[0].mxu0
    %3775 = vmatprep.mubr.f32.mxu0 0.0
    %3776 = vmatmul.mubr.f32.gmra.mrb[0].mxu0 %v3704
    %v3777 = vpop.f32.mrb[0].mxu0
    %v3778 = vadd.f32 0.0, %v3777
    %v3779 = vpop.f32.mrb[0].mxu0
    %3780 = vdwg.mxu0
    %3782 = vrot.lane.b32.xlu0 %v2155, 32
    %v3783 = vpop.permute.xlu0 %3782
    %v3786 = vsel %vm272, %v3380, 0
    %v3789 = vsel %vm272, %v3456, 0
    %3791 = vmatprep.subr.mxu0 0.0
    %3792 = vmatpush1.msra.mxu0 %v3783
    %3793 = vmatprep.subr.mxu0 0.0
    %3794 = vmatpush1.msra.mxu0 0.0
    %3795 = vmatprep.subr.mxu0 0.0
    %3796 = vmatpush1.msra.mxu0 0.0
    %3797 = vmatprep.subr.mxu0 0.0
    %3798 = vmatpush1.msra.mxu0 0.0
    %3799 = vmatprep.subr.mxu0 0.0
    %3800 = vmatpush1.msra.mxu0 0.0
    %3801 = vmatprep.subr.mxu0 0.0
    %3802 = vmatpush1.msra.mxu0 0.0
    %3803 = vmatprep.subr.mxu0 0.0
    %3804 = vmatpush1.msra.mxu0 0.0
    %3805 = vmatprep.subr.mxu0 0.0
    %3806 = vmatpush1.msra.mxu0 0.0
    %3807 = vmatprep.subr.mxu0 0.0
    %3808 = vmatpush1.msra.mxu0 0.0
    %3809 = vmatprep.subr.mxu0 0.0
    %3810 = vmatpush1.msra.mxu0 0.0
    %3811 = vmatprep.subr.mxu0 0.0
    %3812 = vmatpush1.msra.mxu0 0.0
    %3813 = vmatprep.subr.mxu0 0.0
    %3814 = vmatpush1.msra.mxu0 0.0
    %3815 = vmatprep.subr.mxu0 0.0
    %3816 = vmatpush1.msra.mxu0 0.0
    %3817 = vmatprep.subr.mxu0 0.0
    %3818 = vmatpush1.msra.mxu0 0.0
    %3819 = vmatprep.subr.mxu0 0.0
    %3820 = vmatpush1.msra.mxu0 0.0
    %3821 = vmatprep.subr.mxu0 0.0
    %3822 = vmatpush1.msra.mxu0 0.0
    %3823 = vmatprep.subr.mxu0 0.0
    %3824 = vmatpush1.msra.mxu0 0.0
    %3825 = vmatprep.subr.mxu0 0.0
    %3826 = vmatpush1.msra.mxu0 0.0
    %3827 = vmatprep.subr.mxu0 0.0
    %3828 = vmatpush1.msra.mxu0 0.0
    %3829 = vmatprep.subr.mxu0 0.0
    %3830 = vmatpush1.msra.mxu0 0.0
    %3831 = vmatprep.subr.mxu0 0.0
    %3832 = vmatpush1.msra.mxu0 0.0
    %3833 = vmatprep.subr.mxu0 0.0
    %3834 = vmatpush1.msra.mxu0 0.0
    %3835 = vmatprep.subr.mxu0 0.0
    %3836 = vmatpush1.msra.mxu0 0.0
    %3837 = vmatprep.subr.mxu0 0.0
    %3838 = vmatpush1.msra.mxu0 0.0
    %3839 = vmatprep.subr.mxu0 0.0
    %3840 = vmatpush1.msra.mxu0 0.0
    %3841 = vmatprep.subr.mxu0 0.0
    %3842 = vmatpush1.msra.mxu0 0.0
    %3843 = vmatprep.subr.mxu0 0.0
    %3844 = vmatpush1.msra.mxu0 0.0
    %3845 = vmatprep.subr.mxu0 0.0
    %3846 = vmatpush1.msra.mxu0 0.0
    %3847 = vmatprep.subr.mxu0 0.0
    %3848 = vmatpush1.msra.mxu0 0.0
    %3849 = vmatprep.subr.mxu0 0.0
    %3850 = vmatpush1.msra.mxu0 0.0
    %3851 = vmatprep.subr.mxu0 0.0
    %3852 = vmatpush1.msra.mxu0 0.0
    %3853 = vmatprep.subr.mxu0 0.0
    %3854 = vmatpush1.msra.mxu0 0.0
    %3855 = vmatprep.mubr.f32.mxu0 0.0
    %3856 = vmatmul.mubr.f32.gmra.mrb[0].mxu0 %v3786
    %v3857 = vpop.f32.mrb[0].mxu0
    %v3858 = vadd.f32 0.0, %v3857
    %v3859 = vpop.f32.mrb[0].mxu0
    %3860 = vmatprep.mubr.f32.mxu0 0.0
    %3861 = vmatmul.mubr.f32.gmra.mrb[0].mxu0 %v3789
    %v3862 = vpop.f32.mrb[0].mxu0
    %v3863 = vadd.f32 0.0, %v3862
    %v3864 = vpop.f32.mrb[0].mxu0
    %3865 = vdwg.mxu0
    %3867 = vrot.lane.b32.xlu0 %v2157, 32
    %v3868 = vpop.permute.xlu0 %3867
    %v3871 = vsel %vm272, %v3532, 0
    %v3874 = vsel %vm272, %v3608, 0
    %3876 = vmatprep.subr.mxu0 0.0
    %3877 = vmatpush1.msra.mxu0 %v3868
    %3878 = vmatprep.subr.mxu0 0.0
    %3879 = vmatpush1.msra.mxu0 0.0
    %3880 = vmatprep.subr.mxu0 0.0
    %3881 = vmatpush1.msra.mxu0 0.0
    %3882 = vmatprep.subr.mxu0 0.0
    %3883 = vmatpush1.msra.mxu0 0.0
    %3884 = vmatprep.subr.mxu0 0.0
    %3885 = vmatpush1.msra.mxu0 0.0
    %3886 = vmatprep.subr.mxu0 0.0
    %3887 = vmatpush1.msra.mxu0 0.0
    %3888 = vmatprep.subr.mxu0 0.0
    %3889 = vmatpush1.msra.mxu0 0.0
    %3890 = vmatprep.subr.mxu0 0.0
    %3891 = vmatpush1.msra.mxu0 0.0
    %3892 = vmatprep.subr.mxu0 0.0
    %3893 = vmatpush1.msra.mxu0 0.0
    %3894 = vmatprep.subr.mxu0 0.0
    %3895 = vmatpush1.msra.mxu0 0.0
    %3896 = vmatprep.subr.mxu0 0.0
    %3897 = vmatpush1.msra.mxu0 0.0
    %3898 = vmatprep.subr.mxu0 0.0
    %3899 = vmatpush1.msra.mxu0 0.0
    %3900 = vmatprep.subr.mxu0 0.0
    %3901 = vmatpush1.msra.mxu0 0.0
    %3902 = vmatprep.subr.mxu0 0.0
    %3903 = vmatpush1.msra.mxu0 0.0
    %3904 = vmatprep.subr.mxu0 0.0
    %3905 = vmatpush1.msra.mxu0 0.0
    %3906 = vmatprep.subr.mxu0 0.0
    %3907 = vmatpush1.msra.mxu0 0.0
    %3908 = vmatprep.subr.mxu0 0.0
    %3909 = vmatpush1.msra.mxu0 0.0
    %3910 = vmatprep.subr.mxu0 0.0
    %3911 = vmatpush1.msra.mxu0 0.0
    %3912 = vmatprep.subr.mxu0 0.0
    %3913 = vmatpush1.msra.mxu0 0.0
    %3914 = vmatprep.subr.mxu0 0.0
    %3915 = vmatpush1.msra.mxu0 0.0
    %3916 = vmatprep.subr.mxu0 0.0
    %3917 = vmatpush1.msra.mxu0 0.0
    %3918 = vmatprep.subr.mxu0 0.0
    %3919 = vmatpush1.msra.mxu0 0.0
    %3920 = vmatprep.subr.mxu0 0.0
    %3921 = vmatpush1.msra.mxu0 0.0
    %3922 = vmatprep.subr.mxu0 0.0
    %3923 = vmatpush1.msra.mxu0 0.0
    %3924 = vmatprep.subr.mxu0 0.0
    %3925 = vmatpush1.msra.mxu0 0.0
    %3926 = vmatprep.subr.mxu0 0.0
    %3927 = vmatpush1.msra.mxu0 0.0
    %3928 = vmatprep.subr.mxu0 0.0
    %3929 = vmatpush1.msra.mxu0 0.0
    %3930 = vmatprep.subr.mxu0 0.0
    %3931 = vmatpush1.msra.mxu0 0.0
    %3932 = vmatprep.subr.mxu0 0.0
    %3933 = vmatpush1.msra.mxu0 0.0
    %3934 = vmatprep.subr.mxu0 0.0
    %3935 = vmatpush1.msra.mxu0 0.0
    %3936 = vmatprep.subr.mxu0 0.0
    %3937 = vmatpush1.msra.mxu0 0.0
    %3938 = vmatprep.subr.mxu0 0.0
    %3939 = vmatpush1.msra.mxu0 0.0
    %3940 = vmatprep.mubr.f32.mxu0 0.0
    %3941 = vmatmul.mubr.f32.gmra.mrb[0].mxu0 %v3871
    %v3942 = vpop.f32.mrb[0].mxu0
    %v3943 = vadd.f32 0.0, %v3942
    %v3944 = vpop.f32.mrb[0].mxu0
    %3945 = vmatprep.mubr.f32.mxu0 0.0
    %3946 = vmatmul.mubr.f32.gmra.mrb[0].mxu0 %v3874
    %v3947 = vpop.f32.mrb[0].mxu0
    %v3948 = vadd.f32 0.0, %v3947
    %v3949 = vpop.f32.mrb[0].mxu0
    %3950 = vdwg.mxu0
    %v3951 = vsel %vm33, %v3688, 0.0
    %v3952 = vsel %vm33, %v3773, 0.0
    %v3953 = vadd.f32 %v3951, %v3952
    %v3954 = vsel %vm33, %v3858, 0.0
    %v3955 = vadd.f32 %v3953, %v3954
    %v3956 = vsel %vm33, %v3943, 0.0
    %v3957 = vadd.f32 %v3955, %v3956
    %v3958 = vsel %vm33, %v3693, 0.0
    %v3959 = vsel %vm33, %v3778, 0.0
    %v3960 = vadd.f32 %v3958, %v3959
    %v3961 = vsel %vm33, %v3863, 0.0
    %v3962 = vadd.f32 %v3960, %v3961
    %v3963 = vsel %vm33, %v3948, 0.0
    %v3964 = vadd.f32 %v3962, %v3963
    %v3965 = vadd.f32 %v2148, %v3957
    %v3966 = vadd.f32 %v2149, %v3964
    %3968 = vrot.lane.b32.xlu0 %v2211, 32
    %v3969 = vpop.permute.xlu0 %3968
    %v3971 = vadd.f32 %v3965, %v3969
    %v3972 = vadd.f32 %v3966, %v3969
    %v3973 = vsel %vm33, %v3971, 0.0
    %3974 = vadd.xlane.f32.xlu0 %v3973
    %v3975 = vpop.xlane.xlu0 %3974
    %v3976 = vsel %vm33, %v3972, 0.0
    %3977 = vadd.xlane.f32.xlu0 %v3976
    %v3978 = vpop.xlane.xlu0 %3977
    %v3979 = vmul.f32 %v3975, %v138
    %v3980 = vmul.f32 %v3978, %v138
    %v3981 = vsub.f32 %v3971, %v3979
    %v3982 = vsub.f32 %v3972, %v3980
    %v3983 = vmul.f32 %v3981, %v3981
    %v3984 = vmul.f32 %v3982, %v3982
    %v3985 = vsel %vm33, %v3983, 0.0
    %3986 = vadd.xlane.f32.xlu0 %v3985
    %v3987 = vpop.xlane.xlu0 %3986
    %v3988 = vsel %vm33, %v3984, 0.0
    %3989 = vadd.xlane.f32.xlu0 %v3988
    %v3990 = vpop.xlane.xlu0 %3989
    %v3991 = vmul.f32 %v3987, %v138
    %v3992 = vmul.f32 %v3990, %v138
    %v3993 = vadd.f32 %v3991, 1e-05
    %v3994 = vadd.f32 %v3992, 1e-05
    %v3995 = vrsqrt.pop %v3993
    %v3996 = vrsqrt.pop %v3994
    %v3997 = vmul.f32 %v3981, %v3995
    %v3998 = vmul.f32 %v3982, %v3996
    %3999 = vrot.lane.b32.xlu0 %v2199, 64
    %v4000 = vpop.permute.xlu0 %3999
    %v4002 = vmul.f32 %v3997, %v4000
    %v4003 = vmul.f32 %v3998, %v4000
    %4004 = vrot.lane.b32.xlu0 %v2199, 32
    %v4005 = vpop.permute.xlu0 %4004
    %v4007 = vadd.f32 %v4002, %v4005
    %v4008 = vadd.f32 %v4003, %v4005
    %v4009 = vlaneseq
    %v4010 = vshrl.u32 %v4009, 7
    %v4011 = vsub.s32 2, %v4010
    %v4012 = vrot.slane %v2160, %v4011
    %v4014 = vsel %vm33, %v4007, 0
    %v4017 = vsel %vm33, %v4008, 0
    %4019 = vmatprep.subr.mxu0 0.0
    %4020 = vmatpush1.msra.mxu0 %v2152
    %4021 = vmatprep.subr.mxu0 0.0
    %4022 = vmatpush1.msra.mxu0 %v2154
    %4023 = vmatprep.subr.mxu0 0.0
    %4024 = vmatpush1.msra.mxu0 %v2156
    %4025 = vmatprep.subr.mxu0 0.0
    %4026 = vmatpush1.msra.mxu0 %v2158
    %4027 = vmatprep.subr.mxu0 0.0
    %4028 = vmatpush1.msra.mxu0 0.0
    %4029 = vmatprep.subr.mxu0 0.0
    %4030 = vmatpush1.msra.mxu0 0.0
    %4031 = vmatprep.subr.mxu0 0.0
    %4032 = vmatpush1.msra.mxu0 0.0
    %4033 = vmatprep.subr.mxu0 0.0
    %4034 = vmatpush1.msra.mxu0 0.0
    %4035 = vmatprep.subr.mxu0 0.0
    %4036 = vmatpush1.msra.mxu0 0.0
    %4037 = vmatprep.subr.mxu0 0.0
    %4038 = vmatpush1.msra.mxu0 0.0
    %4039 = vmatprep.subr.mxu0 0.0
    %4040 = vmatpush1.msra.mxu0 0.0
    %4041 = vmatprep.subr.mxu0 0.0
    %4042 = vmatpush1.msra.mxu0 0.0
    %4043 = vmatprep.subr.mxu0 0.0
    %4044 = vmatpush1.msra.mxu0 0.0
    %4045 = vmatprep.subr.mxu0 0.0
    %4046 = vmatpush1.msra.mxu0 0.0
    %4047 = vmatprep.subr.mxu0 0.0
    %4048 = vmatpush1.msra.mxu0 0.0
    %4049 = vmatprep.subr.mxu0 0.0
    %4050 = vmatpush1.msra.mxu0 0.0
    %4051 = vmatprep.subr.mxu0 0.0
    %4052 = vmatpush1.msra.mxu0 0.0
    %4053 = vmatprep.subr.mxu0 0.0
    %4054 = vmatpush1.msra.mxu0 0.0
    %4055 = vmatprep.subr.mxu0 0.0
    %4056 = vmatpush1.msra.mxu0 0.0
    %4057 = vmatprep.subr.mxu0 0.0
    %4058 = vmatpush1.msra.mxu0 0.0
    %4059 = vmatprep.subr.mxu0 0.0
    %4060 = vmatpush1.msra.mxu0 0.0
    %4061 = vmatprep.subr.mxu0 0.0
    %4062 = vmatpush1.msra.mxu0 0.0
    %4063 = vmatprep.subr.mxu0 0.0
    %4064 = vmatpush1.msra.mxu0 0.0
    %4065 = vmatprep.subr.mxu0 0.0
    %4066 = vmatpush1.msra.mxu0 0.0
    %4067 = vmatprep.subr.mxu0 0.0
    %4068 = vmatpush1.msra.mxu0 0.0
    %4069 = vmatprep.subr.mxu0 0.0
    %4070 = vmatpush1.msra.mxu0 0.0
    %4071 = vmatprep.subr.mxu0 0.0
    %4072 = vmatpush1.msra.mxu0 0.0
    %4073 = vmatprep.subr.mxu0 0.0
    %4074 = vmatpush1.msra.mxu0 0.0
    %4075 = vmatprep.subr.mxu0 0.0
    %4076 = vmatpush1.msra.mxu0 0.0
    %4077 = vmatprep.subr.mxu0 0.0
    %4078 = vmatpush1.msra.mxu0 0.0
    %4079 = vmatprep.subr.mxu0 0.0
    %4080 = vmatpush1.msra.mxu0 0.0
    %4081 = vmatprep.subr.mxu0 0.0
    %4082 = vmatpush1.msra.mxu0 0.0
    %4083 = vmatprep.mubr.f32.mxu0 0.0
    %4084 = vmatmul.mubr.f32.gmra.mrb[0].mxu0 %v4014
    %v4085 = vpop.f32.mrb[0].mxu0
    %v4086 = vadd.f32 %v4012, %v4085
    %v4087 = vpop.f32.mrb[0].mxu0
    %4088 = vmatprep.mubr.f32.mxu0 0.0
    %4089 = vmatmul.mubr.f32.gmra.mrb[0].mxu0 %v4017
    %v4090 = vpop.f32.mrb[0].mxu0
    %v4091 = vadd.f32 %v4012, %v4090
    %v4092 = vpop.f32.mrb[0].mxu0
    %4093 = vdwg.mxu0
    %v4094 = vmax.f32 %v4086, 0.0
    %v4095 = vmax.f32 %v4091, 0.0
    %v4097 = vsel %vm2060, %v4094, 0
    %v4100 = vsel %vm2060, %v4095, 0
    %4102 = vmatprep.subr.mxu0 0.0
    %4103 = vmatpush1.msra.mxu0 %v2162
    %4104 = vmatprep.subr.mxu0 0.0
    %4105 = vmatpush1.msra.mxu0 %v2163
    %4106 = vmatprep.subr.mxu0 0.0
    %4107 = vmatpush1.msra.mxu0 %v2164
    %4108 = vmatprep.subr.mxu0 0.0
    %4109 = vmatpush1.msra.mxu0 %v2165
    %4110 = vmatprep.subr.mxu0 0.0
    %4111 = vmatpush1.msra.mxu0 %v2166
    %4112 = vmatprep.subr.mxu0 0.0
    %4113 = vmatpush1.msra.mxu0 %v2167
    %4114 = vmatprep.subr.mxu0 0.0
    %4115 = vmatpush1.msra.mxu0 %v2168
    %4116 = vmatprep.subr.mxu0 0.0
    %4117 = vmatpush1.msra.mxu0 %v2169
    %4118 = vmatprep.subr.mxu0 0.0
    %4119 = vmatpush1.msra.mxu0 0.0
    %4120 = vmatprep.subr.mxu0 0.0
    %4121 = vmatpush1.msra.mxu0 0.0
    %4122 = vmatprep.subr.mxu0 0.0
    %4123 = vmatpush1.msra.mxu0 0.0
    %4124 = vmatprep.subr.mxu0 0.0
    %4125 = vmatpush1.msra.mxu0 0.0
    %4126 = vmatprep.subr.mxu0 0.0
    %4127 = vmatpush1.msra.mxu0 0.0
    %4128 = vmatprep.subr.mxu0 0.0
    %4129 = vmatpush1.msra.mxu0 0.0
    %4130 = vmatprep.subr.mxu0 0.0
    %4131 = vmatpush1.msra.mxu0 0.0
    %4132 = vmatprep.subr.mxu0 0.0
    %4133 = vmatpush1.msra.mxu0 0.0
    %4134 = vmatprep.subr.mxu0 0.0
    %4135 = vmatpush1.msra.mxu0 0.0
    %4136 = vmatprep.subr.mxu0 0.0
    %4137 = vmatpush1.msra.mxu0 0.0
    %4138 = vmatprep.subr.mxu0 0.0
    %4139 = vmatpush1.msra.mxu0 0.0
    %4140 = vmatprep.subr.mxu0 0.0
    %4141 = vmatpush1.msra.mxu0 0.0
    %4142 = vmatprep.subr.mxu0 0.0
    %4143 = vmatpush1.msra.mxu0 0.0
    %4144 = vmatprep.subr.mxu0 0.0
    %4145 = vmatpush1.msra.mxu0 0.0
    %4146 = vmatprep.subr.mxu0 0.0
    %4147 = vmatpush1.msra.mxu0 0.0
    %4148 = vmatprep.subr.mxu0 0.0
    %4149 = vmatpush1.msra.mxu0 0.0
    %4150 = vmatprep.subr.mxu0 0.0
    %4151 = vmatpush1.msra.mxu0 0.0
    %4152 = vmatprep.subr.mxu0 0.0
    %4153 = vmatpush1.msra.mxu0 0.0
    %4154 = vmatprep.subr.mxu0 0.0
    %4155 = vmatpush1.msra.mxu0 0.0
    %4156 = vmatprep.subr.mxu0 0.0
    %4157 = vmatpush1.msra.mxu0 0.0
    %4158 = vmatprep.subr.mxu0 0.0
    %4159 = vmatpush1.msra.mxu0 0.0
    %4160 = vmatprep.subr.mxu0 0.0
    %4161 = vmatpush1.msra.mxu0 0.0
    %4162 = vmatprep.subr.mxu0 0.0
    %4163 = vmatpush1.msra.mxu0 0.0
    %4164 = vmatprep.subr.mxu0 0.0
    %4165 = vmatpush1.msra.mxu0 0.0
    %4166 = vmatprep.mubr.f32.mxu0 0.0
    %4167 = vmatmul.mubr.f32.gmra.mrb[0].mxu0 %v4097
    %v4168 = vpop.f32.mrb[0].mxu0
    %v4169 = vadd.f32 0.0, %v4168
    %v4170 = vpop.f32.mrb[0].mxu0
    %4171 = vmatprep.mubr.f32.mxu0 0.0
    %4172 = vmatmul.mubr.f32.gmra.mrb[0].mxu0 %v4100
    %v4173 = vpop.f32.mrb[0].mxu0
    %v4174 = vadd.f32 0.0, %v4173
    %v4175 = vpop.f32.mrb[0].mxu0
    %4176 = vdwg.mxu0
    %v4177 = vadd.f32 %v3971, %v4169
    %v4178 = vadd.f32 %v3972, %v4174
    %4180 = vrot.lane.b32.xlu0 %v4012, 64
    %v4181 = vpop.permute.xlu0 %4180
    %v4183 = vadd.f32 %v4177, %v4181
    %v4184 = vadd.f32 %v4178, %v4181
    %v4187 = vrot.slane %v4183, 1
    %v4188 = vrot.slane %v4184, 1
    %v4189 = vrot.slane %v4183, 2
    %v4190 = vrot.slane %v4184, 2
    %v4191 = vrot.slane %v4183, 3
    %v4192 = vrot.slane %v4184, 3
    %v4193 = vrot.slane %v4183, 4
    %v4194 = vrot.slane %v4184, 4
    %v4195 = vrot.slane %v4183, 5
    %v4196 = vrot.slane %v4184, 5
    %v4197 = vrot.slane %v4183, 6
    %v4198 = vrot.slane %v4184, 6
    %v4199 = vrot.slane %v4183, 7
    %v4200 = vrot.slane %v4184, 7
    %v4201 = vld [vmem:[%s5] sm:$0xff]
    %v4202 = vld [vmem:[%s5 + $0x8] sm:$0xff]
    %v4203 = vld [vmem:[%s5 + $0x10] sm:$0xff]
    %v4204 = vld [vmem:[%s5 + $0x18] sm:$0xff]
    %v4205 = vld [vmem:[%s5 + $0x20] sm:$0xff]
    %v4206 = vld [vmem:[%s5 + $0x28] sm:$0xff]
    %v4207 = vld [vmem:[%s5 + $0x30] sm:$0xff]
    %v4208 = vld [vmem:[%s5 + $0x38] sm:$0xff]
    %v4209 = vld [vmem:[%s5 + $0x40] sm:$0xff]
    %v4210 = vld [vmem:[%s5 + $0x48] sm:$0xff]
    %v4211 = vld [vmem:[%s5 + $0x50] sm:$0xff]
    %v4212 = vld [vmem:[%s5 + $0x58] sm:$0xff]
    %v4213 = vld [vmem:[%s5 + $0x60] sm:$0xff]
    %v4214 = vld [vmem:[%s5 + $0x68] sm:$0xff]
    %v4215 = vld [vmem:[%s5 + $0x70] sm:$0xff]
    %v4216 = vld [vmem:[%s5 + $0x78] sm:$0xff]
    %v4217 = vld [vmem:[%s5 + $0x80] sm:$0xff]
    %v4218 = vld [vmem:[%s5 + $0x88] sm:$0xff]
    %v4219 = vld [vmem:[%s5 + $0x90] sm:$0xff]
    %v4220 = vld [vmem:[%s5 + $0x98] sm:$0xff]
    %v4221 = vld [vmem:[%s5 + $0xa0] sm:$0xff]
    %v4222 = vld [vmem:[%s5 + $0xa8] sm:$0xff]
    %v4223 = vld [vmem:[%s5 + $0xb0] sm:$0xff]
    %v4224 = vld [vmem:[%s5 + $0xb8] sm:$0xff]
    %v4225 = vld [vmem:[%s5 + $0xc0] sm:$0xff]
    %v4226 = vld [vmem:[%s5 + $0xc8] sm:$0xff]
    %v4227 = vld [vmem:[%s5 + $0xd0] sm:$0xff]
    %v4228 = vld [vmem:[%s5 + $0xd8] sm:$0xff]
    %v4229 = vld [vmem:[%s5 + $0xe0] sm:$0xff]
    %v4230 = vld [vmem:[%s5 + $0xe8] sm:$0xff]
    %v4231 = vld [vmem:[%s5 + $0xf0] sm:$0xff]
    %v4232 = vld [vmem:[%s5 + $0xf8] sm:$0xff]
    %vm4233 = vcmask 1041409
    %v4234 = vsel %vm4233, %v4200, %v4183
    %v4235 = vsel %vm33, %v4234, 0
    %4237 = vmatprep.subr.mxu0 0.0
    %4238 = vmatpush1.msra.mxu0 %v4201
    %4239 = vmatprep.subr.mxu0 0.0
    %4240 = vmatpush1.msra.mxu0 %v4202
    %4241 = vmatprep.subr.mxu0 0.0
    %4242 = vmatpush1.msra.mxu0 %v4203
    %4243 = vmatprep.subr.mxu0 0.0
    %4244 = vmatpush1.msra.mxu0 %v4204
    %4245 = vmatprep.subr.mxu0 0.0
    %4246 = vmatpush1.msra.mxu0 0.0
    %4247 = vmatprep.subr.mxu0 0.0
    %4248 = vmatpush1.msra.mxu0 0.0
    %4249 = vmatprep.subr.mxu0 0.0
    %4250 = vmatpush1.msra.mxu0 0.0
    %4251 = vmatprep.subr.mxu0 0.0
    %4252 = vmatpush1.msra.mxu0 0.0
    %4253 = vmatprep.subr.mxu0 0.0
    %4254 = vmatpush1.msra.mxu0 0.0
    %4255 = vmatprep.subr.mxu0 0.0
    %4256 = vmatpush1.msra.mxu0 0.0
    %4257 = vmatprep.subr.mxu0 0.0
    %4258 = vmatpush1.msra.mxu0 0.0
    %4259 = vmatprep.subr.mxu0 0.0
    %4260 = vmatpush1.msra.mxu0 0.0
    %4261 = vmatprep.subr.mxu0 0.0
    %4262 = vmatpush1.msra.mxu0 0.0
    %4263 = vmatprep.subr.mxu0 0.0
    %4264 = vmatpush1.msra.mxu0 0.0
    %4265 = vmatprep.subr.mxu0 0.0
    %4266 = vmatpush1.msra.mxu0 0.0
    %4267 = vmatprep.subr.mxu0 0.0
    %4268 = vmatpush1.msra.mxu0 0.0
    %4269 = vmatprep.subr.mxu0 0.0
    %4270 = vmatpush1.msra.mxu0 0.0
    %4271 = vmatprep.subr.mxu0 0.0
    %4272 = vmatpush1.msra.mxu0 0.0
    %4273 = vmatprep.subr.mxu0 0.0
    %4274 = vmatpush1.msra.mxu0 0.0
    %4275 = vmatprep.subr.mxu0 0.0
    %4276 = vmatpush1.msra.mxu0 0.0
    %4277 = vmatprep.subr.mxu0 0.0
    %4278 = vmatpush1.msra.mxu0 0.0
    %4279 = vmatprep.subr.mxu0 0.0
    %4280 = vmatpush1.msra.mxu0 0.0
    %4281 = vmatprep.subr.mxu0 0.0
    %4282 = vmatpush1.msra.mxu0 0.0
    %4283 = vmatprep.subr.mxu0 0.0
    %4284 = vmatpush1.msra.mxu0 0.0
    %4285 = vmatprep.subr.mxu0 0.0
    %4286 = vmatpush1.msra.mxu0 0.0
    %4287 = vmatprep.subr.mxu0 0.0
    %4288 = vmatpush1.msra.mxu0 0.0
    %4289 = vmatprep.subr.mxu0 0.0
    %4290 = vmatpush1.msra.mxu0 0.0
    %4291 = vmatprep.subr.mxu0 0.0
    %4292 = vmatpush1.msra.mxu0 0.0
    %4293 = vmatprep.subr.mxu0 0.0
    %4294 = vmatpush1.msra.mxu0 0.0
    %4295 = vmatprep.subr.mxu0 0.0
    %4296 = vmatpush1.msra.mxu0 0.0
    %4297 = vmatprep.subr.mxu0 0.0
    %4298 = vmatpush1.msra.mxu0 0.0
    %4299 = vmatprep.subr.mxu0 0.0
    %4300 = vmatpush1.msra.mxu0 0.0
    %4301 = vmatprep.mubr.f32.mxu0 0.0
    %4302 = vmatmul.mubr.f32.gmra.mrb[0].mxu0 %v4235
    %v4303 = vpop.f32.mrb[0].mxu0
    %v4304 = vadd.f32 0.0, %v4303
    %v4305 = vpop.f32.mrb[0].mxu0
    %4306 = vdwg.mxu0
    %v4307 = vrot.slane %v4188, 7
    %v4308 = vsel %vm4233, %v4307, %v4187
    %v4309 = vsel %vm33, %v4308, 0
    %4311 = vmatprep.subr.mxu0 0.0
    %4312 = vmatpush1.msra.mxu0 %v4205
    %4313 = vmatprep.subr.mxu0 0.0
    %4314 = vmatpush1.msra.mxu0 %v4206
    %4315 = vmatprep.subr.mxu0 0.0
    %4316 = vmatpush1.msra.mxu0 %v4207
    %4317 = vmatprep.subr.mxu0 0.0
    %4318 = vmatpush1.msra.mxu0 %v4208
    %4319 = vmatprep.subr.mxu0 0.0
    %4320 = vmatpush1.msra.mxu0 0.0
    %4321 = vmatprep.subr.mxu0 0.0
    %4322 = vmatpush1.msra.mxu0 0.0
    %4323 = vmatprep.subr.mxu0 0.0
    %4324 = vmatpush1.msra.mxu0 0.0
    %4325 = vmatprep.subr.mxu0 0.0
    %4326 = vmatpush1.msra.mxu0 0.0
    %4327 = vmatprep.subr.mxu0 0.0
    %4328 = vmatpush1.msra.mxu0 0.0
    %4329 = vmatprep.subr.mxu0 0.0
    %4330 = vmatpush1.msra.mxu0 0.0
    %4331 = vmatprep.subr.mxu0 0.0
    %4332 = vmatpush1.msra.mxu0 0.0
    %4333 = vmatprep.subr.mxu0 0.0
    %4334 = vmatpush1.msra.mxu0 0.0
    %4335 = vmatprep.subr.mxu0 0.0
    %4336 = vmatpush1.msra.mxu0 0.0
    %4337 = vmatprep.subr.mxu0 0.0
    %4338 = vmatpush1.msra.mxu0 0.0
    %4339 = vmatprep.subr.mxu0 0.0
    %4340 = vmatpush1.msra.mxu0 0.0
    %4341 = vmatprep.subr.mxu0 0.0
    %4342 = vmatpush1.msra.mxu0 0.0
    %4343 = vmatprep.subr.mxu0 0.0
    %4344 = vmatpush1.msra.mxu0 0.0
    %4345 = vmatprep.subr.mxu0 0.0
    %4346 = vmatpush1.msra.mxu0 0.0
    %4347 = vmatprep.subr.mxu0 0.0
    %4348 = vmatpush1.msra.mxu0 0.0
    %4349 = vmatprep.subr.mxu0 0.0
    %4350 = vmatpush1.msra.mxu0 0.0
    %4351 = vmatprep.subr.mxu0 0.0
    %4352 = vmatpush1.msra.mxu0 0.0
    %4353 = vmatprep.subr.mxu0 0.0
    %4354 = vmatpush1.msra.mxu0 0.0
    %4355 = vmatprep.subr.mxu0 0.0
    %4356 = vmatpush1.msra.mxu0 0.0
    %4357 = vmatprep.subr.mxu0 0.0
    %4358 = vmatpush1.msra.mxu0 0.0
    %4359 = vmatprep.subr.mxu0 0.0
    %4360 = vmatpush1.msra.mxu0 0.0
    %4361 = vmatprep.subr.mxu0 0.0
    %4362 = vmatpush1.msra.mxu0 0.0
    %4363 = vmatprep.subr.mxu0 0.0
    %4364 = vmatpush1.msra.mxu0 0.0
    %4365 = vmatprep.subr.mxu0 0.0
    %4366 = vmatpush1.msra.mxu0 0.0
    %4367 = vmatprep.subr.mxu0 0.0
    %4368 = vmatpush1.msra.mxu0 0.0
    %4369 = vmatprep.subr.mxu0 0.0
    %4370 = vmatpush1.msra.mxu0 0.0
    %4371 = vmatprep.subr.mxu0 0.0
    %4372 = vmatpush1.msra.mxu0 0.0
    %4373 = vmatprep.subr.mxu0 0.0
    %4374 = vmatpush1.msra.mxu0 0.0
    %4375 = vmatprep.mubr.f32.mxu0 0.0
    %4376 = vmatmul.mubr.f32.gmra.mrb[0].mxu0 %v4309
    %v4377 = vpop.f32.mrb[0].mxu0
    %v4378 = vadd.f32 0.0, %v4377
    %v4379 = vpop.f32.mrb[0].mxu0
    %4380 = vdwg.mxu0
    %v4381 = vrot.slane %v4190, 7
    %v4382 = vsel %vm4233, %v4381, %v4189
    %v4383 = vsel %vm33, %v4382, 0
    %4385 = vmatprep.subr.mxu0 0.0
    %4386 = vmatpush1.msra.mxu0 %v4209
    %4387 = vmatprep.subr.mxu0 0.0
    %4388 = vmatpush1.msra.mxu0 %v4210
    %4389 = vmatprep.subr.mxu0 0.0
    %4390 = vmatpush1.msra.mxu0 %v4211
    %4391 = vmatprep.subr.mxu0 0.0
    %4392 = vmatpush1.msra.mxu0 %v4212
    %4393 = vmatprep.subr.mxu0 0.0
    %4394 = vmatpush1.msra.mxu0 0.0
    %4395 = vmatprep.subr.mxu0 0.0
    %4396 = vmatpush1.msra.mxu0 0.0
    %4397 = vmatprep.subr.mxu0 0.0
    %4398 = vmatpush1.msra.mxu0 0.0
    %4399 = vmatprep.subr.mxu0 0.0
    %4400 = vmatpush1.msra.mxu0 0.0
    %4401 = vmatprep.subr.mxu0 0.0
    %4402 = vmatpush1.msra.mxu0 0.0
    %4403 = vmatprep.subr.mxu0 0.0
    %4404 = vmatpush1.msra.mxu0 0.0
    %4405 = vmatprep.subr.mxu0 0.0
    %4406 = vmatpush1.msra.mxu0 0.0
    %4407 = vmatprep.subr.mxu0 0.0
    %4408 = vmatpush1.msra.mxu0 0.0
    %4409 = vmatprep.subr.mxu0 0.0
    %4410 = vmatpush1.msra.mxu0 0.0
    %4411 = vmatprep.subr.mxu0 0.0
    %4412 = vmatpush1.msra.mxu0 0.0
    %4413 = vmatprep.subr.mxu0 0.0
    %4414 = vmatpush1.msra.mxu0 0.0
    %4415 = vmatprep.subr.mxu0 0.0
    %4416 = vmatpush1.msra.mxu0 0.0
    %4417 = vmatprep.subr.mxu0 0.0
    %4418 = vmatpush1.msra.mxu0 0.0
    %4419 = vmatprep.subr.mxu0 0.0
    %4420 = vmatpush1.msra.mxu0 0.0
    %4421 = vmatprep.subr.mxu0 0.0
    %4422 = vmatpush1.msra.mxu0 0.0
    %4423 = vmatprep.subr.mxu0 0.0
    %4424 = vmatpush1.msra.mxu0 0.0
    %4425 = vmatprep.subr.mxu0 0.0
    %4426 = vmatpush1.msra.mxu0 0.0
    %4427 = vmatprep.subr.mxu0 0.0
    %4428 = vmatpush1.msra.mxu0 0.0
    %4429 = vmatprep.subr.mxu0 0.0
    %4430 = vmatpush1.msra.mxu0 0.0
    %4431 = vmatprep.subr.mxu0 0.0
    %4432 = vmatpush1.msra.mxu0 0.0
    %4433 = vmatprep.subr.mxu0 0.0
    %4434 = vmatpush1.msra.mxu0 0.0
    %4435 = vmatprep.subr.mxu0 0.0
    %4436 = vmatpush1.msra.mxu0 0.0
    %4437 = vmatprep.subr.mxu0 0.0
    %4438 = vmatpush1.msra.mxu0 0.0
    %4439 = vmatprep.subr.mxu0 0.0
    %4440 = vmatpush1.msra.mxu0 0.0
    %4441 = vmatprep.subr.mxu0 0.0
    %4442 = vmatpush1.msra.mxu0 0.0
    %4443 = vmatprep.subr.mxu0 0.0
    %4444 = vmatpush1.msra.mxu0 0.0
    %4445 = vmatprep.subr.mxu0 0.0
    %4446 = vmatpush1.msra.mxu0 0.0
    %4447 = vmatprep.subr.mxu0 0.0
    %4448 = vmatpush1.msra.mxu0 0.0
    %4449 = vmatprep.mubr.f32.mxu0 0.0
    %4450 = vmatmul.mubr.f32.gmra.mrb[0].mxu0 %v4383
    %v4451 = vpop.f32.mrb[0].mxu0
    %v4452 = vadd.f32 0.0, %v4451
    %v4453 = vpop.f32.mrb[0].mxu0
    %4454 = vdwg.mxu0
    %v4455 = vrot.slane %v4192, 7
    %v4456 = vsel %vm4233, %v4455, %v4191
    %v4457 = vsel %vm33, %v4456, 0
    %4459 = vmatprep.subr.mxu0 0.0
    %4460 = vmatpush1.msra.mxu0 %v4213
    %4461 = vmatprep.subr.mxu0 0.0
    %4462 = vmatpush1.msra.mxu0 %v4214
    %4463 = vmatprep.subr.mxu0 0.0
    %4464 = vmatpush1.msra.mxu0 %v4215
    %4465 = vmatprep.subr.mxu0 0.0
    %4466 = vmatpush1.msra.mxu0 %v4216
    %4467 = vmatprep.subr.mxu0 0.0
    %4468 = vmatpush1.msra.mxu0 0.0
    %4469 = vmatprep.subr.mxu0 0.0
    %4470 = vmatpush1.msra.mxu0 0.0
    %4471 = vmatprep.subr.mxu0 0.0
    %4472 = vmatpush1.msra.mxu0 0.0
    %4473 = vmatprep.subr.mxu0 0.0
    %4474 = vmatpush1.msra.mxu0 0.0
    %4475 = vmatprep.subr.mxu0 0.0
    %4476 = vmatpush1.msra.mxu0 0.0
    %4477 = vmatprep.subr.mxu0 0.0
    %4478 = vmatpush1.msra.mxu0 0.0
    %4479 = vmatprep.subr.mxu0 0.0
    %4480 = vmatpush1.msra.mxu0 0.0
    %4481 = vmatprep.subr.mxu0 0.0
    %4482 = vmatpush1.msra.mxu0 0.0
    %4483 = vmatprep.subr.mxu0 0.0
    %4484 = vmatpush1.msra.mxu0 0.0
    %4485 = vmatprep.subr.mxu0 0.0
    %4486 = vmatpush1.msra.mxu0 0.0
    %4487 = vmatprep.subr.mxu0 0.0
    %4488 = vmatpush1.msra.mxu0 0.0
    %4489 = vmatprep.subr.mxu0 0.0
    %4490 = vmatpush1.msra.mxu0 0.0
    %4491 = vmatprep.subr.mxu0 0.0
    %4492 = vmatpush1.msra.mxu0 0.0
    %4493 = vmatprep.subr.mxu0 0.0
    %4494 = vmatpush1.msra.mxu0 0.0
    %4495 = vmatprep.subr.mxu0 0.0
    %4496 = vmatpush1.msra.mxu0 0.0
    %4497 = vmatprep.subr.mxu0 0.0
    %4498 = vmatpush1.msra.mxu0 0.0
    %4499 = vmatprep.subr.mxu0 0.0
    %4500 = vmatpush1.msra.mxu0 0.0
    %4501 = vmatprep.subr.mxu0 0.0
    %4502 = vmatpush1.msra.mxu0 0.0
    %4503 = vmatprep.subr.mxu0 0.0
    %4504 = vmatpush1.msra.mxu0 0.0
    %4505 = vmatprep.subr.mxu0 0.0
    %4506 = vmatpush1.msra.mxu0 0.0
    %4507 = vmatprep.subr.mxu0 0.0
    %4508 = vmatpush1.msra.mxu0 0.0
    %4509 = vmatprep.subr.mxu0 0.0
    %4510 = vmatpush1.msra.mxu0 0.0
    %4511 = vmatprep.subr.mxu0 0.0
    %4512 = vmatpush1.msra.mxu0 0.0
    %4513 = vmatprep.subr.mxu0 0.0
    %4514 = vmatpush1.msra.mxu0 0.0
    %4515 = vmatprep.subr.mxu0 0.0
    %4516 = vmatpush1.msra.mxu0 0.0
    %4517 = vmatprep.subr.mxu0 0.0
    %4518 = vmatpush1.msra.mxu0 0.0
    %4519 = vmatprep.subr.mxu0 0.0
    %4520 = vmatpush1.msra.mxu0 0.0
    %4521 = vmatprep.subr.mxu0 0.0
    %4522 = vmatpush1.msra.mxu0 0.0
    %4523 = vmatprep.mubr.f32.mxu0 0.0
    %4524 = vmatmul.mubr.f32.gmra.mrb[0].mxu0 %v4457
    %v4525 = vpop.f32.mrb[0].mxu0
    %v4526 = vadd.f32 0.0, %v4525
    %v4527 = vpop.f32.mrb[0].mxu0
    %4528 = vdwg.mxu0
    %v4529 = vrot.slane %v4194, 7
    %v4530 = vsel %vm4233, %v4529, %v4193
    %v4531 = vsel %vm33, %v4530, 0
    %4533 = vmatprep.subr.mxu0 0.0
    %4534 = vmatpush1.msra.mxu0 %v4217
    %4535 = vmatprep.subr.mxu0 0.0
    %4536 = vmatpush1.msra.mxu0 %v4218
    %4537 = vmatprep.subr.mxu0 0.0
    %4538 = vmatpush1.msra.mxu0 %v4219
    %4539 = vmatprep.subr.mxu0 0.0
    %4540 = vmatpush1.msra.mxu0 %v4220
    %4541 = vmatprep.subr.mxu0 0.0
    %4542 = vmatpush1.msra.mxu0 0.0
    %4543 = vmatprep.subr.mxu0 0.0
    %4544 = vmatpush1.msra.mxu0 0.0
    %4545 = vmatprep.subr.mxu0 0.0
    %4546 = vmatpush1.msra.mxu0 0.0
    %4547 = vmatprep.subr.mxu0 0.0
    %4548 = vmatpush1.msra.mxu0 0.0
    %4549 = vmatprep.subr.mxu0 0.0
    %4550 = vmatpush1.msra.mxu0 0.0
    %4551 = vmatprep.subr.mxu0 0.0
    %4552 = vmatpush1.msra.mxu0 0.0
    %4553 = vmatprep.subr.mxu0 0.0
    %4554 = vmatpush1.msra.mxu0 0.0
    %4555 = vmatprep.subr.mxu0 0.0
    %4556 = vmatpush1.msra.mxu0 0.0
    %4557 = vmatprep.subr.mxu0 0.0
    %4558 = vmatpush1.msra.mxu0 0.0
    %4559 = vmatprep.subr.mxu0 0.0
    %4560 = vmatpush1.msra.mxu0 0.0
    %4561 = vmatprep.subr.mxu0 0.0
    %4562 = vmatpush1.msra.mxu0 0.0
    %4563 = vmatprep.subr.mxu0 0.0
    %4564 = vmatpush1.msra.mxu0 0.0
    %4565 = vmatprep.subr.mxu0 0.0
    %4566 = vmatpush1.msra.mxu0 0.0
    %4567 = vmatprep.subr.mxu0 0.0
    %4568 = vmatpush1.msra.mxu0 0.0
    %4569 = vmatprep.subr.mxu0 0.0
    %4570 = vmatpush1.msra.mxu0 0.0
    %4571 = vmatprep.subr.mxu0 0.0
    %4572 = vmatpush1.msra.mxu0 0.0
    %4573 = vmatprep.subr.mxu0 0.0
    %4574 = vmatpush1.msra.mxu0 0.0
    %4575 = vmatprep.subr.mxu0 0.0
    %4576 = vmatpush1.msra.mxu0 0.0
    %4577 = vmatprep.subr.mxu0 0.0
    %4578 = vmatpush1.msra.mxu0 0.0
    %4579 = vmatprep.subr.mxu0 0.0
    %4580 = vmatpush1.msra.mxu0 0.0
    %4581 = vmatprep.subr.mxu0 0.0
    %4582 = vmatpush1.msra.mxu0 0.0
    %4583 = vmatprep.subr.mxu0 0.0
    %4584 = vmatpush1.msra.mxu0 0.0
    %4585 = vmatprep.subr.mxu0 0.0
    %4586 = vmatpush1.msra.mxu0 0.0
    %4587 = vmatprep.subr.mxu0 0.0
    %4588 = vmatpush1.msra.mxu0 0.0
    %4589 = vmatprep.subr.mxu0 0.0
    %4590 = vmatpush1.msra.mxu0 0.0
    %4591 = vmatprep.subr.mxu0 0.0
    %4592 = vmatpush1.msra.mxu0 0.0
    %4593 = vmatprep.subr.mxu0 0.0
    %4594 = vmatpush1.msra.mxu0 0.0
    %4595 = vmatprep.subr.mxu0 0.0
    %4596 = vmatpush1.msra.mxu0 0.0
    %4597 = vmatprep.mubr.f32.mxu0 0.0
    %4598 = vmatmul.mubr.f32.gmra.mrb[0].mxu0 %v4531
    %v4599 = vpop.f32.mrb[0].mxu0
    %v4600 = vadd.f32 0.0, %v4599
    %v4601 = vpop.f32.mrb[0].mxu0
    %4602 = vdwg.mxu0
    %v4603 = vrot.slane %v4196, 7
    %v4604 = vsel %vm4233, %v4603, %v4195
    %v4605 = vsel %vm33, %v4604, 0
    %4607 = vmatprep.subr.mxu0 0.0
    %4608 = vmatpush1.msra.mxu0 %v4221
    %4609 = vmatprep.subr.mxu0 0.0
    %4610 = vmatpush1.msra.mxu0 %v4222
    %4611 = vmatprep.subr.mxu0 0.0
    %4612 = vmatpush1.msra.mxu0 %v4223
    %4613 = vmatprep.subr.mxu0 0.0
    %4614 = vmatpush1.msra.mxu0 %v4224
    %4615 = vmatprep.subr.mxu0 0.0
    %4616 = vmatpush1.msra.mxu0 0.0
    %4617 = vmatprep.subr.mxu0 0.0
    %4618 = vmatpush1.msra.mxu0 0.0
    %4619 = vmatprep.subr.mxu0 0.0
    %4620 = vmatpush1.msra.mxu0 0.0
    %4621 = vmatprep.subr.mxu0 0.0
    %4622 = vmatpush1.msra.mxu0 0.0
    %4623 = vmatprep.subr.mxu0 0.0
    %4624 = vmatpush1.msra.mxu0 0.0
    %4625 = vmatprep.subr.mxu0 0.0
    %4626 = vmatpush1.msra.mxu0 0.0
    %4627 = vmatprep.subr.mxu0 0.0
    %4628 = vmatpush1.msra.mxu0 0.0
    %4629 = vmatprep.subr.mxu0 0.0
    %4630 = vmatpush1.msra.mxu0 0.0
    %4631 = vmatprep.subr.mxu0 0.0
    %4632 = vmatpush1.msra.mxu0 0.0
    %4633 = vmatprep.subr.mxu0 0.0
    %4634 = vmatpush1.msra.mxu0 0.0
    %4635 = vmatprep.subr.mxu0 0.0
    %4636 = vmatpush1.msra.mxu0 0.0
    %4637 = vmatprep.subr.mxu0 0.0
    %4638 = vmatpush1.msra.mxu0 0.0
    %4639 = vmatprep.subr.mxu0 0.0
    %4640 = vmatpush1.msra.mxu0 0.0
    %4641 = vmatprep.subr.mxu0 0.0
    %4642 = vmatpush1.msra.mxu0 0.0
    %4643 = vmatprep.subr.mxu0 0.0
    %4644 = vmatpush1.msra.mxu0 0.0
    %4645 = vmatprep.subr.mxu0 0.0
    %4646 = vmatpush1.msra.mxu0 0.0
    %4647 = vmatprep.subr.mxu0 0.0
    %4648 = vmatpush1.msra.mxu0 0.0
    %4649 = vmatprep.subr.mxu0 0.0
    %4650 = vmatpush1.msra.mxu0 0.0
    %4651 = vmatprep.subr.mxu0 0.0
    %4652 = vmatpush1.msra.mxu0 0.0
    %4653 = vmatprep.subr.mxu0 0.0
    %4654 = vmatpush1.msra.mxu0 0.0
    %4655 = vmatprep.subr.mxu0 0.0
    %4656 = vmatpush1.msra.mxu0 0.0
    %4657 = vmatprep.subr.mxu0 0.0
    %4658 = vmatpush1.msra.mxu0 0.0
    %4659 = vmatprep.subr.mxu0 0.0
    %4660 = vmatpush1.msra.mxu0 0.0
    %4661 = vmatprep.subr.mxu0 0.0
    %4662 = vmatpush1.msra.mxu0 0.0
    %4663 = vmatprep.subr.mxu0 0.0
    %4664 = vmatpush1.msra.mxu0 0.0
    %4665 = vmatprep.subr.mxu0 0.0
    %4666 = vmatpush1.msra.mxu0 0.0
    %4667 = vmatprep.subr.mxu0 0.0
    %4668 = vmatpush1.msra.mxu0 0.0
    %4669 = vmatprep.subr.mxu0 0.0
    %4670 = vmatpush1.msra.mxu0 0.0
    %4671 = vmatprep.mubr.f32.mxu0 0.0
    %4672 = vmatmul.mubr.f32.gmra.mrb[0].mxu0 %v4605
    %v4673 = vpop.f32.mrb[0].mxu0
    %v4674 = vadd.f32 0.0, %v4673
    %v4675 = vpop.f32.mrb[0].mxu0
    %4676 = vdwg.mxu0
    %v4677 = vrot.slane %v4198, 7
    %v4678 = vsel %vm4233, %v4677, %v4197
    %v4679 = vsel %vm33, %v4678, 0
    %4681 = vmatprep.subr.mxu0 0.0
    %4682 = vmatpush1.msra.mxu0 %v4225
    %4683 = vmatprep.subr.mxu0 0.0
    %4684 = vmatpush1.msra.mxu0 %v4226
    %4685 = vmatprep.subr.mxu0 0.0
    %4686 = vmatpush1.msra.mxu0 %v4227
    %4687 = vmatprep.subr.mxu0 0.0
    %4688 = vmatpush1.msra.mxu0 %v4228
    %4689 = vmatprep.subr.mxu0 0.0
    %4690 = vmatpush1.msra.mxu0 0.0
    %4691 = vmatprep.subr.mxu0 0.0
    %4692 = vmatpush1.msra.mxu0 0.0
    %4693 = vmatprep.subr.mxu0 0.0
    %4694 = vmatpush1.msra.mxu0 0.0
    %4695 = vmatprep.subr.mxu0 0.0
    %4696 = vmatpush1.msra.mxu0 0.0
    %4697 = vmatprep.subr.mxu0 0.0
    %4698 = vmatpush1.msra.mxu0 0.0
    %4699 = vmatprep.subr.mxu0 0.0
    %4700 = vmatpush1.msra.mxu0 0.0
    %4701 = vmatprep.subr.mxu0 0.0
    %4702 = vmatpush1.msra.mxu0 0.0
    %4703 = vmatprep.subr.mxu0 0.0
    %4704 = vmatpush1.msra.mxu0 0.0
    %4705 = vmatprep.subr.mxu0 0.0
    %4706 = vmatpush1.msra.mxu0 0.0
    %4707 = vmatprep.subr.mxu0 0.0
    %4708 = vmatpush1.msra.mxu0 0.0
    %4709 = vmatprep.subr.mxu0 0.0
    %4710 = vmatpush1.msra.mxu0 0.0
    %4711 = vmatprep.subr.mxu0 0.0
    %4712 = vmatpush1.msra.mxu0 0.0
    %4713 = vmatprep.subr.mxu0 0.0
    %4714 = vmatpush1.msra.mxu0 0.0
    %4715 = vmatprep.subr.mxu0 0.0
    %4716 = vmatpush1.msra.mxu0 0.0
    %4717 = vmatprep.subr.mxu0 0.0
    %4718 = vmatpush1.msra.mxu0 0.0
    %4719 = vmatprep.subr.mxu0 0.0
    %4720 = vmatpush1.msra.mxu0 0.0
    %4721 = vmatprep.subr.mxu0 0.0
    %4722 = vmatpush1.msra.mxu0 0.0
    %4723 = vmatprep.subr.mxu0 0.0
    %4724 = vmatpush1.msra.mxu0 0.0
    %4725 = vmatprep.subr.mxu0 0.0
    %4726 = vmatpush1.msra.mxu0 0.0
    %4727 = vmatprep.subr.mxu0 0.0
    %4728 = vmatpush1.msra.mxu0 0.0
    %4729 = vmatprep.subr.mxu0 0.0
    %4730 = vmatpush1.msra.mxu0 0.0
    %4731 = vmatprep.subr.mxu0 0.0
    %4732 = vmatpush1.msra.mxu0 0.0
    %4733 = vmatprep.subr.mxu0 0.0
    %4734 = vmatpush1.msra.mxu0 0.0
    %4735 = vmatprep.subr.mxu0 0.0
    %4736 = vmatpush1.msra.mxu0 0.0
    %4737 = vmatprep.subr.mxu0 0.0
    %4738 = vmatpush1.msra.mxu0 0.0
    %4739 = vmatprep.subr.mxu0 0.0
    %4740 = vmatpush1.msra.mxu0 0.0
    %4741 = vmatprep.subr.mxu0 0.0
    %4742 = vmatpush1.msra.mxu0 0.0
    %4743 = vmatprep.subr.mxu0 0.0
    %4744 = vmatpush1.msra.mxu0 0.0
    %4745 = vmatprep.mubr.f32.mxu0 0.0
    %4746 = vmatmul.mubr.f32.gmra.mrb[0].mxu0 %v4679
    %v4747 = vpop.f32.mrb[0].mxu0
    %v4748 = vadd.f32 0.0, %v4747
    %v4749 = vpop.f32.mrb[0].mxu0
    %4750 = vdwg.mxu0
    %v4751 = vrot.slane %v4200, 7
    %v4752 = vsel %vm4233, %v4751, %v4199
    %v4753 = vsel %vm33, %v4752, 0
    %4755 = vmatprep.subr.mxu0 0.0
    %4756 = vmatpush1.msra.mxu0 %v4229
    %4757 = vmatprep.subr.mxu0 0.0
    %4758 = vmatpush1.msra.mxu0 %v4230
    %4759 = vmatprep.subr.mxu0 0.0
    %4760 = vmatpush1.msra.mxu0 %v4231
    %4761 = vmatprep.subr.mxu0 0.0
    %4762 = vmatpush1.msra.mxu0 %v4232
    %4763 = vmatprep.subr.mxu0 0.0
    %4764 = vmatpush1.msra.mxu0 0.0
    %4765 = vmatprep.subr.mxu0 0.0
    %4766 = vmatpush1.msra.mxu0 0.0
    %4767 = vmatprep.subr.mxu0 0.0
    %4768 = vmatpush1.msra.mxu0 0.0
    %4769 = vmatprep.subr.mxu0 0.0
    %4770 = vmatpush1.msra.mxu0 0.0
    %4771 = vmatprep.subr.mxu0 0.0
    %4772 = vmatpush1.msra.mxu0 0.0
    %4773 = vmatprep.subr.mxu0 0.0
    %4774 = vmatpush1.msra.mxu0 0.0
    %4775 = vmatprep.subr.mxu0 0.0
    %4776 = vmatpush1.msra.mxu0 0.0
    %4777 = vmatprep.subr.mxu0 0.0
    %4778 = vmatpush1.msra.mxu0 0.0
    %4779 = vmatprep.subr.mxu0 0.0
    %4780 = vmatpush1.msra.mxu0 0.0
    %4781 = vmatprep.subr.mxu0 0.0
    %4782 = vmatpush1.msra.mxu0 0.0
    %4783 = vmatprep.subr.mxu0 0.0
    %4784 = vmatpush1.msra.mxu0 0.0
    %4785 = vmatprep.subr.mxu0 0.0
    %4786 = vmatpush1.msra.mxu0 0.0
    %4787 = vmatprep.subr.mxu0 0.0
    %4788 = vmatpush1.msra.mxu0 0.0
    %4789 = vmatprep.subr.mxu0 0.0
    %4790 = vmatpush1.msra.mxu0 0.0
    %4791 = vmatprep.subr.mxu0 0.0
    %4792 = vmatpush1.msra.mxu0 0.0
    %4793 = vmatprep.subr.mxu0 0.0
    %4794 = vmatpush1.msra.mxu0 0.0
    %4795 = vmatprep.subr.mxu0 0.0
    %4796 = vmatpush1.msra.mxu0 0.0
    %4797 = vmatprep.subr.mxu0 0.0
    %4798 = vmatpush1.msra.mxu0 0.0
    %4799 = vmatprep.subr.mxu0 0.0
    %4800 = vmatpush1.msra.mxu0 0.0
    %4801 = vmatprep.subr.mxu0 0.0
    %4802 = vmatpush1.msra.mxu0 0.0
    %4803 = vmatprep.subr.mxu0 0.0
    %4804 = vmatpush1.msra.mxu0 0.0
    %4805 = vmatprep.subr.mxu0 0.0
    %4806 = vmatpush1.msra.mxu0 0.0
    %4807 = vmatprep.subr.mxu0 0.0
    %4808 = vmatpush1.msra.mxu0 0.0
    %4809 = vmatprep.subr.mxu0 0.0
    %4810 = vmatpush1.msra.mxu0 0.0
    %4811 = vmatprep.subr.mxu0 0.0
    %4812 = vmatpush1.msra.mxu0 0.0
    %4813 = vmatprep.subr.mxu0 0.0
    %4814 = vmatpush1.msra.mxu0 0.0
    %4815 = vmatprep.subr.mxu0 0.0
    %4816 = vmatpush1.msra.mxu0 0.0
    %4817 = vmatprep.subr.mxu0 0.0
    %4818 = vmatpush1.msra.mxu0 0.0
    %4819 = vmatprep.mubr.f32.mxu0 0.0
    %4820 = vmatmul.mubr.f32.gmra.mrb[0].mxu0 %v4753
    %v4821 = vpop.f32.mrb[0].mxu0
    %v4822 = vadd.f32 0.0, %v4821
    %v4823 = vpop.f32.mrb[0].mxu0
    %4824 = vdwg.mxu0
    %vm4825 = vcmask 17408
    %v4826 = vsel %vm4825, %v4304, 0.0
    %v4827 = vsel %vm4825, %v4378, 0.0
    %v4828 = vadd.f32 %v4826, %v4827
    %v4829 = vsel %vm4825, %v4452, 0.0
    %v4830 = vadd.f32 %v4828, %v4829
    %v4831 = vsel %vm4825, %v4526, 0.0
    %v4832 = vadd.f32 %v4830, %v4831
    %v4833 = vsel %vm4825, %v4600, 0.0
    %v4834 = vadd.f32 %v4832, %v4833
    %v4835 = vsel %vm4825, %v4674, 0.0
    %v4836 = vadd.f32 %v4834, %v4835
    %v4837 = vsel %vm4825, %v4748, 0.0
    %v4838 = vadd.f32 %v4836, %v4837
    %v4839 = vsel %vm4825, %v4822, 0.0
    %v4840 = vadd.f32 %v4838, %v4839
    %v4841 = vld [vmem:[%s6] sm:$0x1]
    %v4843 = vlaneseq
    %v4844 = vshrl.u32 %v4843, 7
    %v4845 = vsub.s32 0, %v4844
    %v4846 = vrot.slane %v4841, %v4845
    %v4848 = vadd.f32 %v4840, %v4846
    %4849 = vst.msk [vmem:[#allocation2] sm:$0x3] %vm4825, %v4848
    // Predicated region
    $region30: #{tabular_transformer_forward.1} parent=1 // pred_check
      _
    $region31: #{tabular_transformer_forward.1} parent=1 // pred_check_branch
      %4851 = sbr.rel (0) target = $region33
    $region32: #{tabular_transformer_forward.1} parent=1 // pred_region
      %s4853 = ssub.s32 32, 32
      %4854 = vsyncadd [#allocation3], %s4853
      %s4856 = sshll.u32 [#allocation2], 4
      %s4857 = int_to_ptr.vmem [resolvable:$true] %s4856
      %4859 = dma.vmem_to_hbm [thread:$0]  %s4857, 32, %s7, [#allocation3]
    $region33: #{tabular_transformer_forward.1} parent=1 // pred_fallthru
      _
    // Predicated region
    $region34: #{tabular_transformer_forward.1} parent=1 // pred_check
      _
    $region35: #{tabular_transformer_forward.1} parent=1 // pred_check_branch
      %4861 = sbr.rel (0) target = $region37
    $region36: #{tabular_transformer_forward.1} parent=1 // pred_region
      %4862 = dma.done [#allocation3], 32
    $region37: #{tabular_transformer_forward.1} parent=1 // pred_fallthru
      _
    %4863 = vsyncpa [#allocation3], 1

</llo_original>
